<compile_context>
chip_gen: v7x
topology: tpu7x:2x2x1
jax: 0.10.0
libtpu: 0.0.40
codegen_flags: <defaults>
</compile_context>

<pallas_src>
import jax
import jax.numpy as jnp
import numpy as np
from jax import lax
from jax.experimental import pallas as pl
from jax.experimental.pallas import tpu as pltpu

_SCALES = (2, 3, 5, 6)


def _bilinear_matrix(out_size: int, in_size: int) -> np.ndarray:
    """U[out, in]: PyTorch bilinear weights, align_corners=False (F.upsample default)."""
    u = np.zeros((out_size, in_size), np.float32)
    scale = in_size / out_size
    for i in range(out_size):
        src = max((i + 0.5) * scale - 0.5, 0.0)
        i0 = min(int(np.floor(src)), in_size - 1)
        i1 = min(i0 + 1, in_size - 1)
        lam1 = src - i0
        u[i, i0] += 1.0 - lam1
        u[i, i1] += lam1
    return u


def _spp_kernel(x_ref, w_ref, b_ref,
                uh2_ref, uwt2_ref, uh3_ref, uwt3_ref,
                uh5_ref, uwt5_ref, uh6_ref, uwt6_ref,
                o_ref):
    _, C, H, W = x_ref.shape
    x = x_ref[0]                       # [C, H, W]   (read once from VMEM block)
    w1c = w_ref[...]                   # [1, C]      lane-dense 1x1-conv weight
    bias = b_ref[0, 0]                 # scalar from SMEM

    scale_refs = ((2, uh2_ref, uwt2_ref), (3, uh3_ref, uwt3_ref),
                  (5, uh5_ref, uwt5_ref), (6, uh6_ref, uwt6_ref))

    for idx, (s, uh_ref, uwt_ref) in enumerate(scale_refs):
        ph, pw = H // s, W // s

        # ---- max-pool along W: contiguous window slice + lane max-reduce ----
        cols = []
        for j in range(pw):
            win = x[:, :, j * s:(j + 1) * s]                       # [C, H, s]
            cols.append(jnp.max(win, axis=-1, keepdims=True))      # [C, H, 1]
        pool_w = jnp.concatenate(cols, axis=-1)                    # [C, H, pw]

        # ---- max-pool along H (sublane reduce) + shared 1x1 conv on MXU -----
        rows = []
        for i in range(ph):
            blk = pool_w[:, i * s:(i + 1) * s, :]                  # [C, s, pw]
            pi = jnp.max(blk, axis=1)                              # [C, pw]
            rows.append(jnp.dot(w1c, pi,
                                preferred_element_type=jnp.float32))  # [1, pw]
        y = jnp.concatenate(rows, axis=0) + bias                   # [ph, pw]

        # ---- bilinear upsample to [H, W] as two MXU matmuls -----------------
        tmp = jnp.dot(uh_ref[...], y, preferred_element_type=jnp.float32)   # [H, pw]
        up = jnp.dot(tmp, uwt_ref[...], preferred_element_type=jnp.float32)  # [H, W]

        o_ref[0, idx] = up

    # ---- channel concat: copy x into output channels [4, 4 + C) -------------
    o_ref[0, 4:4 + C] = x


def spp_block_forward(x_nchw, params):
    x = x_nchw.astype(jnp.float32)
    N, C, H, W = x.shape
    assert H // max(_SCALES) >= 1 and W // max(_SCALES) >= 1, "input too small for pool4"

    w = params["conv_w"].reshape(1, C).astype(jnp.float32)          # lane-dense
    b = params["conv_b"].reshape(1, 1).astype(jnp.float32)          # scalar -> SMEM

    u_inputs, u_specs = [], []
    for s in _SCALES:
        ph, pw = H // s, W // s
        u_inputs.append(jnp.asarray(_bilinear_matrix(H, ph)))       # [H, ph]
        u_inputs.append(jnp.asarray(_bilinear_matrix(W, pw).T))     # [pw, W]
        u_specs.append(pl.BlockSpec((H, ph), lambda n: (0, 0)))
        u_specs.append(pl.BlockSpec((pw, W), lambda n: (0, 0)))

    return pl.pallas_call(
        _spp_kernel,
        out_shape=jax.ShapeDtypeStruct((N, C + 4, H, W), jnp.float32),
        grid=(N,),
        in_specs=[
            pl.BlockSpec((1, C, H, W), lambda n: (n, 0, 0, 0)),     # x (one image)
            pl.BlockSpec((1, C), lambda n: (0, 0)),                 # conv weight
            pl.BlockSpec(memory_space=pltpu.MemorySpace.SMEM),      # conv bias
        ] + u_specs,
        out_specs=pl.BlockSpec((1, C + 4, H, W), lambda n: (n, 0, 0, 0)),
        compiler_params=pltpu.CompilerParams(
            dimension_semantics=("parallel",),
            vmem_limit_bytes=64 * 1024 * 1024),
    )(x, w, b, *u_inputs)


def init_params(key, in_channels):
    kw, kb = jax.random.split(key)
    bound = 1.0 / np.sqrt(in_channels)
    return {
        "conv_w": jax.random.uniform(kw, (1, in_channels, 1, 1),
                                     jnp.float32, -bound, bound),
        "conv_b": jax.random.uniform(kb, (1,), jnp.float32, -bound, bound),
    }


# ---------------------------------------------------------------------------
# Pure-JAX reference (mirrors the PyTorch module), for verification
# ---------------------------------------------------------------------------
def ref_forward(x, params):
    N, C, H, W = x.shape
    w = params["conv_w"].reshape(C)
    b = params["conv_b"][0]
    hp = lax.Precision.HIGHEST
    layers = []
    for s in _SCALES:
        ph, pw = H // s, W // s
        pooled = lax.reduce_window(x, -jnp.inf, lax.max,
                                   (1, 1, s, s), (1, 1, s, s), "VALID")
        y = jnp.einsum("nchw,c->nhw", pooled, w, precision=hp) + b
        uh = jnp.asarray(_bilinear_matrix(H, ph))
        uw = jnp.asarray(_bilinear_matrix(W, pw))
        up = jnp.einsum("hp,npq,wq->nhw", uh, y, uw, precision=hp)
        layers.append(up[:, None, :, :])
    layers.append(x)
    return jnp.concatenate(layers, axis=1)


if __name__ == "__main__":
    key = jax.random.PRNGKey(0)
    kx, kp = jax.random.split(key)

    N, C, H, W = 2, 4, 16, 16
    x = jax.random.normal(kx, (N, C, H, W), jnp.float32)
    params = init_params(kp, C)

    out = jax.block_until_ready(jax.jit(spp_block_forward)(x, params))
    assert out.shape == (N, C + 4, H, W), out.shape

    ref = jax.block_until_ready(ref_forward(x, params))
    np.testing.assert_allclose(np.asarray(out), np.asarray(ref),
                               rtol=1e-3, atol=1e-3)

    print("KERNEL_OK")
</pallas_src>

<mosaic_0001>
module attributes {stable_mosaic.version = 11 : i64} {
  func.func @_spp_kernel(%arg0: i32, %arg1: memref<1x4x16x16xf32, #tpu.memory_space<vmem>>, %arg2: memref<1x4xf32, #tpu.memory_space<vmem>>, %arg3: memref<1x1xf32, #tpu.memory_space<smem>>, %arg4: memref<16x8xf32, #tpu.memory_space<vmem>>, %arg5: memref<8x16xf32, #tpu.memory_space<vmem>>, %arg6: memref<16x5xf32, #tpu.memory_space<vmem>>, %arg7: memref<5x16xf32, #tpu.memory_space<vmem>>, %arg8: memref<16x3xf32, #tpu.memory_space<vmem>>, %arg9: memref<3x16xf32, #tpu.memory_space<vmem>>, %arg10: memref<16x2xf32, #tpu.memory_space<vmem>>, %arg11: memref<2x16xf32, #tpu.memory_space<vmem>>, %arg12: memref<1x8x16x16xf32, #tpu.memory_space<vmem>>) attributes {dimension_semantics = [#tpu.dimension_semantics<parallel>], iteration_bounds = array<i64: 2>, scalar_prefetch = 0 : i64, scratch_operands = 0 : i64, tpu.core_type = #tpu.core_type<tc>, window_params = [{transform_indices = @transform_0, window_bounds = array<i64: 1, 4, 16, 16>}, {pipeline_mode = #tpu.pipeline_mode<synchronous>, transform_indices = @transform_1, window_bounds = array<i64: 1, 4>}, {transform_indices = @transform_2, window_bounds = array<i64: 1, 1>}, {pipeline_mode = #tpu.pipeline_mode<synchronous>, transform_indices = @transform_3, window_bounds = array<i64: 16, 8>}, {pipeline_mode = #tpu.pipeline_mode<synchronous>, transform_indices = @transform_4, window_bounds = array<i64: 8, 16>}, {pipeline_mode = #tpu.pipeline_mode<synchronous>, transform_indices = @transform_5, window_bounds = array<i64: 16, 5>}, {pipeline_mode = #tpu.pipeline_mode<synchronous>, transform_indices = @transform_6, window_bounds = array<i64: 5, 16>}, {pipeline_mode = #tpu.pipeline_mode<synchronous>, transform_indices = @transform_7, window_bounds = array<i64: 16, 3>}, {pipeline_mode = #tpu.pipeline_mode<synchronous>, transform_indices = @transform_8, window_bounds = array<i64: 3, 16>}, {pipeline_mode = #tpu.pipeline_mode<synchronous>, transform_indices = @transform_9, window_bounds = array<i64: 16, 2>}, {pipeline_mode = #tpu.pipeline_mode<synchronous>, transform_indices = @transform_10, window_bounds = array<i64: 2, 16>}, {transform_indices = @transform_11, window_bounds = array<i64: 1, 8, 16, 16>}]} {
    %c0 = arith.constant 0 : index
    %c0_0 = arith.constant 0 : index
    %c0_1 = arith.constant 0 : index
    %c0_2 = arith.constant 0 : index
    %0 = vector.load %arg1[%c0, %c0_0, %c0_1, %c0_2] : memref<1x4x16x16xf32, #tpu.memory_space<vmem>>, vector<1x4x16x16xf32>
    %1 = vector.shape_cast %0 : vector<1x4x16x16xf32> to vector<4x16x16xf32>
    %c0_3 = arith.constant 0 : index
    %c0_4 = arith.constant 0 : index
    %2 = vector.load %arg2[%c0_3, %c0_4] : memref<1x4xf32, #tpu.memory_space<vmem>>, vector<1x4xf32>
    %c0_5 = arith.constant 0 : index
    %c0_6 = arith.constant 0 : index
    %3 = memref.load %arg3[%c0_5, %c0_6] : memref<1x1xf32, #tpu.memory_space<smem>>
    %4 = vector.extract_strided_slice %1 {offsets = [0, 0, 0], sizes = [4, 16, 2], strides = [1, 1, 1]} : vector<4x16x16xf32> to vector<4x16x2xf32>
    %cst = arith.constant dense<0xFF800000> : vector<4x16xf32>
    %5 = vector.multi_reduction <maximumf>, %4, %cst [2] : vector<4x16x2xf32> to vector<4x16xf32>
    %6 = vector.shape_cast %5 : vector<4x16xf32> to vector<4x16x1xf32>
    %7 = vector.extract_strided_slice %1 {offsets = [0, 0, 2], sizes = [4, 16, 2], strides = [1, 1, 1]} : vector<4x16x16xf32> to vector<4x16x2xf32>
    %cst_7 = arith.constant dense<0xFF800000> : vector<4x16xf32>
    %8 = vector.multi_reduction <maximumf>, %7, %cst_7 [2] : vector<4x16x2xf32> to vector<4x16xf32>
    %9 = vector.shape_cast %8 : vector<4x16xf32> to vector<4x16x1xf32>
    %10 = vector.extract_strided_slice %1 {offsets = [0, 0, 4], sizes = [4, 16, 2], strides = [1, 1, 1]} : vector<4x16x16xf32> to vector<4x16x2xf32>
    %cst_8 = arith.constant dense<0xFF800000> : vector<4x16xf32>
    %11 = vector.multi_reduction <maximumf>, %10, %cst_8 [2] : vector<4x16x2xf32> to vector<4x16xf32>
    %12 = vector.shape_cast %11 : vector<4x16xf32> to vector<4x16x1xf32>
    %13 = vector.extract_strided_slice %1 {offsets = [0, 0, 6], sizes = [4, 16, 2], strides = [1, 1, 1]} : vector<4x16x16xf32> to vector<4x16x2xf32>
    %cst_9 = arith.constant dense<0xFF800000> : vector<4x16xf32>
    %14 = vector.multi_reduction <maximumf>, %13, %cst_9 [2] : vector<4x16x2xf32> to vector<4x16xf32>
    %15 = vector.shape_cast %14 : vector<4x16xf32> to vector<4x16x1xf32>
    %16 = vector.extract_strided_slice %1 {offsets = [0, 0, 8], sizes = [4, 16, 2], strides = [1, 1, 1]} : vector<4x16x16xf32> to vector<4x16x2xf32>
    %cst_10 = arith.constant dense<0xFF800000> : vector<4x16xf32>
    %17 = vector.multi_reduction <maximumf>, %16, %cst_10 [2] : vector<4x16x2xf32> to vector<4x16xf32>
    %18 = vector.shape_cast %17 : vector<4x16xf32> to vector<4x16x1xf32>
    %19 = vector.extract_strided_slice %1 {offsets = [0, 0, 10], sizes = [4, 16, 2], strides = [1, 1, 1]} : vector<4x16x16xf32> to vector<4x16x2xf32>
    %cst_11 = arith.constant dense<0xFF800000> : vector<4x16xf32>
    %20 = vector.multi_reduction <maximumf>, %19, %cst_11 [2] : vector<4x16x2xf32> to vector<4x16xf32>
    %21 = vector.shape_cast %20 : vector<4x16xf32> to vector<4x16x1xf32>
    %22 = vector.extract_strided_slice %1 {offsets = [0, 0, 12], sizes = [4, 16, 2], strides = [1, 1, 1]} : vector<4x16x16xf32> to vector<4x16x2xf32>
    %cst_12 = arith.constant dense<0xFF800000> : vector<4x16xf32>
    %23 = vector.multi_reduction <maximumf>, %22, %cst_12 [2] : vector<4x16x2xf32> to vector<4x16xf32>
    %24 = vector.shape_cast %23 : vector<4x16xf32> to vector<4x16x1xf32>
    %25 = vector.extract_strided_slice %1 {offsets = [0, 0, 14], sizes = [4, 16, 2], strides = [1, 1, 1]} : vector<4x16x16xf32> to vector<4x16x2xf32>
    %cst_13 = arith.constant dense<0xFF800000> : vector<4x16xf32>
    %26 = vector.multi_reduction <maximumf>, %25, %cst_13 [2] : vector<4x16x2xf32> to vector<4x16xf32>
    %27 = vector.shape_cast %26 : vector<4x16xf32> to vector<4x16x1xf32>
    %28 = tpu.concatenate %6, %9, %12, %15, %18, %21, %24, %27 in 2 : vector<4x16x1xf32>, vector<4x16x1xf32>, vector<4x16x1xf32>, vector<4x16x1xf32>, vector<4x16x1xf32>, vector<4x16x1xf32>, vector<4x16x1xf32>, vector<4x16x1xf32> -> vector<4x16x8xf32>
    %29 = vector.extract_strided_slice %28 {offsets = [0, 0, 0], sizes = [4, 2, 8], strides = [1, 1, 1]} : vector<4x16x8xf32> to vector<4x2x8xf32>
    %cst_14 = arith.constant dense<0xFF800000> : vector<4x8xf32>
    %30 = vector.multi_reduction <maximumf>, %29, %cst_14 [1] : vector<4x2x8xf32> to vector<4x8xf32>
    %cst_15 = arith.constant dense<0.000000e+00> : vector<1x8xf32>
    %31 = tpu.matmul %2, %30, %cst_15 {dimension_numbers = #tpu.dot_dimension_numbers<[1], [0], [0], [1], [0, 0, 1, 1], [], []>} : vector<1x4xf32>, vector<4x8xf32>, vector<1x8xf32> -> vector<1x8xf32>
    %32 = vector.extract_strided_slice %28 {offsets = [0, 2, 0], sizes = [4, 2, 8], strides = [1, 1, 1]} : vector<4x16x8xf32> to vector<4x2x8xf32>
    %cst_16 = arith.constant dense<0xFF800000> : vector<4x8xf32>
    %33 = vector.multi_reduction <maximumf>, %32, %cst_16 [1] : vector<4x2x8xf32> to vector<4x8xf32>
    %cst_17 = arith.constant dense<0.000000e+00> : vector<1x8xf32>
    %34 = tpu.matmul %2, %33, %cst_17 {dimension_numbers = #tpu.dot_dimension_numbers<[1], [0], [0], [1], [0, 0, 1, 1], [], []>} : vector<1x4xf32>, vector<4x8xf32>, vector<1x8xf32> -> vector<1x8xf32>
    %35 = vector.extract_strided_slice %28 {offsets = [0, 4, 0], sizes = [4, 2, 8], strides = [1, 1, 1]} : vector<4x16x8xf32> to vector<4x2x8xf32>
    %cst_18 = arith.constant dense<0xFF800000> : vector<4x8xf32>
    %36 = vector.multi_reduction <maximumf>, %35, %cst_18 [1] : vector<4x2x8xf32> to vector<4x8xf32>
    %cst_19 = arith.constant dense<0.000000e+00> : vector<1x8xf32>
    %37 = tpu.matmul %2, %36, %cst_19 {dimension_numbers = #tpu.dot_dimension_numbers<[1], [0], [0], [1], [0, 0, 1, 1], [], []>} : vector<1x4xf32>, vector<4x8xf32>, vector<1x8xf32> -> vector<1x8xf32>
    %38 = vector.extract_strided_slice %28 {offsets = [0, 6, 0], sizes = [4, 2, 8], strides = [1, 1, 1]} : vector<4x16x8xf32> to vector<4x2x8xf32>
    %cst_20 = arith.constant dense<0xFF800000> : vector<4x8xf32>
    %39 = vector.multi_reduction <maximumf>, %38, %cst_20 [1] : vector<4x2x8xf32> to vector<4x8xf32>
    %cst_21 = arith.constant dense<0.000000e+00> : vector<1x8xf32>
    %40 = tpu.matmul %2, %39, %cst_21 {dimension_numbers = #tpu.dot_dimension_numbers<[1], [0], [0], [1], [0, 0, 1, 1], [], []>} : vector<1x4xf32>, vector<4x8xf32>, vector<1x8xf32> -> vector<1x8xf32>
    %41 = vector.extract_strided_slice %28 {offsets = [0, 8, 0], sizes = [4, 2, 8], strides = [1, 1, 1]} : vector<4x16x8xf32> to vector<4x2x8xf32>
    %cst_22 = arith.constant dense<0xFF800000> : vector<4x8xf32>
    %42 = vector.multi_reduction <maximumf>, %41, %cst_22 [1] : vector<4x2x8xf32> to vector<4x8xf32>
    %cst_23 = arith.constant dense<0.000000e+00> : vector<1x8xf32>
    %43 = tpu.matmul %2, %42, %cst_23 {dimension_numbers = #tpu.dot_dimension_numbers<[1], [0], [0], [1], [0, 0, 1, 1], [], []>} : vector<1x4xf32>, vector<4x8xf32>, vector<1x8xf32> -> vector<1x8xf32>
    %44 = vector.extract_strided_slice %28 {offsets = [0, 10, 0], sizes = [4, 2, 8], strides = [1, 1, 1]} : vector<4x16x8xf32> to vector<4x2x8xf32>
    %cst_24 = arith.constant dense<0xFF800000> : vector<4x8xf32>
    %45 = vector.multi_reduction <maximumf>, %44, %cst_24 [1] : vector<4x2x8xf32> to vector<4x8xf32>
    %cst_25 = arith.constant dense<0.000000e+00> : vector<1x8xf32>
    %46 = tpu.matmul %2, %45, %cst_25 {dimension_numbers = #tpu.dot_dimension_numbers<[1], [0], [0], [1], [0, 0, 1, 1], [], []>} : vector<1x4xf32>, vector<4x8xf32>, vector<1x8xf32> -> vector<1x8xf32>
    %47 = vector.extract_strided_slice %28 {offsets = [0, 12, 0], sizes = [4, 2, 8], strides = [1, 1, 1]} : vector<4x16x8xf32> to vector<4x2x8xf32>
    %cst_26 = arith.constant dense<0xFF800000> : vector<4x8xf32>
    %48 = vector.multi_reduction <maximumf>, %47, %cst_26 [1] : vector<4x2x8xf32> to vector<4x8xf32>
    %cst_27 = arith.constant dense<0.000000e+00> : vector<1x8xf32>
    %49 = tpu.matmul %2, %48, %cst_27 {dimension_numbers = #tpu.dot_dimension_numbers<[1], [0], [0], [1], [0, 0, 1, 1], [], []>} : vector<1x4xf32>, vector<4x8xf32>, vector<1x8xf32> -> vector<1x8xf32>
    %50 = vector.extract_strided_slice %28 {offsets = [0, 14, 0], sizes = [4, 2, 8], strides = [1, 1, 1]} : vector<4x16x8xf32> to vector<4x2x8xf32>
    %cst_28 = arith.constant dense<0xFF800000> : vector<4x8xf32>
    %51 = vector.multi_reduction <maximumf>, %50, %cst_28 [1] : vector<4x2x8xf32> to vector<4x8xf32>
    %cst_29 = arith.constant dense<0.000000e+00> : vector<1x8xf32>
    %52 = tpu.matmul %2, %51, %cst_29 {dimension_numbers = #tpu.dot_dimension_numbers<[1], [0], [0], [1], [0, 0, 1, 1], [], []>} : vector<1x4xf32>, vector<4x8xf32>, vector<1x8xf32> -> vector<1x8xf32>
    %53 = tpu.concatenate %31, %34, %37, %40, %43, %46, %49, %52 in 0 : vector<1x8xf32>, vector<1x8xf32>, vector<1x8xf32>, vector<1x8xf32>, vector<1x8xf32>, vector<1x8xf32>, vector<1x8xf32>, vector<1x8xf32> -> vector<8x8xf32>
    %54 = vector.broadcast %3 : f32 to vector<8x8xf32>
    %55 = arith.addf %53, %54 : vector<8x8xf32>
    %c0_30 = arith.constant 0 : index
    %c0_31 = arith.constant 0 : index
    %56 = vector.load %arg4[%c0_30, %c0_31] : memref<16x8xf32, #tpu.memory_space<vmem>>, vector<16x8xf32>
    %cst_32 = arith.constant dense<0.000000e+00> : vector<16x8xf32>
    %57 = tpu.matmul %56, %55, %cst_32 {dimension_numbers = #tpu.dot_dimension_numbers<[1], [0], [0], [1], [0, 0, 1, 1], [], []>} : vector<16x8xf32>, vector<8x8xf32>, vector<16x8xf32> -> vector<16x8xf32>
    %c0_33 = arith.constant 0 : index
    %c0_34 = arith.constant 0 : index
    %58 = vector.load %arg5[%c0_33, %c0_34] : memref<8x16xf32, #tpu.memory_space<vmem>>, vector<8x16xf32>
    %cst_35 = arith.constant dense<0.000000e+00> : vector<16x16xf32>
    %59 = tpu.matmul %57, %58, %cst_35 {dimension_numbers = #tpu.dot_dimension_numbers<[1], [0], [0], [1], [0, 0, 1, 1], [], []>} : vector<16x8xf32>, vector<8x16xf32>, vector<16x16xf32> -> vector<16x16xf32>
    %c0_36 = arith.constant 0 : index
    %c0_37 = arith.constant 0 : index
    %c0_38 = arith.constant 0 : index
    %c0_39 = arith.constant 0 : index
    %60 = vector.load %arg12[%c0_36, %c0_37, %c0_38, %c0_39] : memref<1x8x16x16xf32, #tpu.memory_space<vmem>>, vector<1x1x16x16xf32>
    %61 = vector.shape_cast %60 : vector<1x1x16x16xf32> to vector<16x16xf32>
    %62 = vector.shape_cast %59 : vector<16x16xf32> to vector<1x1x16x16xf32>
    tpu.vector_store %arg12[%c0_36, %c0_37, %c0_38, %c0_39], %62 {strides = array<i32>} : memref<1x8x16x16xf32, #tpu.memory_space<vmem>>, vector<1x1x16x16xf32>,
    %63 = vector.extract_strided_slice %1 {offsets = [0, 0, 0], sizes = [4, 16, 3], strides = [1, 1, 1]} : vector<4x16x16xf32> to vector<4x16x3xf32>
    %cst_40 = arith.constant dense<0xFF800000> : vector<4x16xf32>
    %64 = vector.multi_reduction <maximumf>, %63, %cst_40 [2] : vector<4x16x3xf32> to vector<4x16xf32>
    %65 = vector.shape_cast %64 : vector<4x16xf32> to vector<4x16x1xf32>
    %66 = vector.extract_strided_slice %1 {offsets = [0, 0, 3], sizes = [4, 16, 3], strides = [1, 1, 1]} : vector<4x16x16xf32> to vector<4x16x3xf32>
    %cst_41 = arith.constant dense<0xFF800000> : vector<4x16xf32>
    %67 = vector.multi_reduction <maximumf>, %66, %cst_41 [2] : vector<4x16x3xf32> to vector<4x16xf32>
    %68 = vector.shape_cast %67 : vector<4x16xf32> to vector<4x16x1xf32>
    %69 = vector.extract_strided_slice %1 {offsets = [0, 0, 6], sizes = [4, 16, 3], strides = [1, 1, 1]} : vector<4x16x16xf32> to vector<4x16x3xf32>
    %cst_42 = arith.constant dense<0xFF800000> : vector<4x16xf32>
    %70 = vector.multi_reduction <maximumf>, %69, %cst_42 [2] : vector<4x16x3xf32> to vector<4x16xf32>
    %71 = vector.shape_cast %70 : vector<4x16xf32> to vector<4x16x1xf32>
    %72 = vector.extract_strided_slice %1 {offsets = [0, 0, 9], sizes = [4, 16, 3], strides = [1, 1, 1]} : vector<4x16x16xf32> to vector<4x16x3xf32>
    %cst_43 = arith.constant dense<0xFF800000> : vector<4x16xf32>
    %73 = vector.multi_reduction <maximumf>, %72, %cst_43 [2] : vector<4x16x3xf32> to vector<4x16xf32>
    %74 = vector.shape_cast %73 : vector<4x16xf32> to vector<4x16x1xf32>
    %75 = vector.extract_strided_slice %1 {offsets = [0, 0, 12], sizes = [4, 16, 3], strides = [1, 1, 1]} : vector<4x16x16xf32> to vector<4x16x3xf32>
    %cst_44 = arith.constant dense<0xFF800000> : vector<4x16xf32>
    %76 = vector.multi_reduction <maximumf>, %75, %cst_44 [2] : vector<4x16x3xf32> to vector<4x16xf32>
    %77 = vector.shape_cast %76 : vector<4x16xf32> to vector<4x16x1xf32>
    %78 = tpu.concatenate %65, %68, %71, %74, %77 in 2 : vector<4x16x1xf32>, vector<4x16x1xf32>, vector<4x16x1xf32>, vector<4x16x1xf32>, vector<4x16x1xf32> -> vector<4x16x5xf32>
    %79 = vector.extract_strided_slice %78 {offsets = [0, 0, 0], sizes = [4, 3, 5], strides = [1, 1, 1]} : vector<4x16x5xf32> to vector<4x3x5xf32>
    %cst_45 = arith.constant dense<0xFF800000> : vector<4x5xf32>
    %80 = vector.multi_reduction <maximumf>, %79, %cst_45 [1] : vector<4x3x5xf32> to vector<4x5xf32>
    %cst_46 = arith.constant dense<0.000000e+00> : vector<1x5xf32>
    %81 = tpu.matmul %2, %80, %cst_46 {dimension_numbers = #tpu.dot_dimension_numbers<[1], [0], [0], [1], [0, 0, 1, 1], [], []>} : vector<1x4xf32>, vector<4x5xf32>, vector<1x5xf32> -> vector<1x5xf32>
    %82 = vector.extract_strided_slice %78 {offsets = [0, 3, 0], sizes = [4, 3, 5], strides = [1, 1, 1]} : vector<4x16x5xf32> to vector<4x3x5xf32>
    %cst_47 = arith.constant dense<0xFF800000> : vector<4x5xf32>
    %83 = vector.multi_reduction <maximumf>, %82, %cst_47 [1] : vector<4x3x5xf32> to vector<4x5xf32>
    %cst_48 = arith.constant dense<0.000000e+00> : vector<1x5xf32>
    %84 = tpu.matmul %2, %83, %cst_48 {dimension_numbers = #tpu.dot_dimension_numbers<[1], [0], [0], [1], [0, 0, 1, 1], [], []>} : vector<1x4xf32>, vector<4x5xf32>, vector<1x5xf32> -> vector<1x5xf32>
    %85 = vector.extract_strided_slice %78 {offsets = [0, 6, 0], sizes = [4, 3, 5], strides = [1, 1, 1]} : vector<4x16x5xf32> to vector<4x3x5xf32>
    %cst_49 = arith.constant dense<0xFF800000> : vector<4x5xf32>
    %86 = vector.multi_reduction <maximumf>, %85, %cst_49 [1] : vector<4x3x5xf32> to vector<4x5xf32>
    %cst_50 = arith.constant dense<0.000000e+00> : vector<1x5xf32>
    %87 = tpu.matmul %2, %86, %cst_50 {dimension_numbers = #tpu.dot_dimension_numbers<[1], [0], [0], [1], [0, 0, 1, 1], [], []>} : vector<1x4xf32>, vector<4x5xf32>, vector<1x5xf32> -> vector<1x5xf32>
    %88 = vector.extract_strided_slice %78 {offsets = [0, 9, 0], sizes = [4, 3, 5], strides = [1, 1, 1]} : vector<4x16x5xf32> to vector<4x3x5xf32>
    %cst_51 = arith.constant dense<0xFF800000> : vector<4x5xf32>
    %89 = vector.multi_reduction <maximumf>, %88, %cst_51 [1] : vector<4x3x5xf32> to vector<4x5xf32>
    %cst_52 = arith.constant dense<0.000000e+00> : vector<1x5xf32>
    %90 = tpu.matmul %2, %89, %cst_52 {dimension_numbers = #tpu.dot_dimension_numbers<[1], [0], [0], [1], [0, 0, 1, 1], [], []>} : vector<1x4xf32>, vector<4x5xf32>, vector<1x5xf32> -> vector<1x5xf32>
    %91 = vector.extract_strided_slice %78 {offsets = [0, 12, 0], sizes = [4, 3, 5], strides = [1, 1, 1]} : vector<4x16x5xf32> to vector<4x3x5xf32>
    %cst_53 = arith.constant dense<0xFF800000> : vector<4x5xf32>
    %92 = vector.multi_reduction <maximumf>, %91, %cst_53 [1] : vector<4x3x5xf32> to vector<4x5xf32>
    %cst_54 = arith.constant dense<0.000000e+00> : vector<1x5xf32>
    %93 = tpu.matmul %2, %92, %cst_54 {dimension_numbers = #tpu.dot_dimension_numbers<[1], [0], [0], [1], [0, 0, 1, 1], [], []>} : vector<1x4xf32>, vector<4x5xf32>, vector<1x5xf32> -> vector<1x5xf32>
    %94 = tpu.concatenate %81, %84, %87, %90, %93 in 0 : vector<1x5xf32>, vector<1x5xf32>, vector<1x5xf32>, vector<1x5xf32>, vector<1x5xf32> -> vector<5x5xf32>
    %95 = vector.broadcast %3 : f32 to vector<5x5xf32>
    %96 = arith.addf %94, %95 : vector<5x5xf32>
    %c0_55 = arith.constant 0 : index
    %c0_56 = arith.constant 0 : index
    %97 = vector.load %arg6[%c0_55, %c0_56] : memref<16x5xf32, #tpu.memory_space<vmem>>, vector<16x5xf32>
    %cst_57 = arith.constant dense<0.000000e+00> : vector<16x5xf32>
    %98 = tpu.matmul %97, %96, %cst_57 {dimension_numbers = #tpu.dot_dimension_numbers<[1], [0], [0], [1], [0, 0, 1, 1], [], []>} : vector<16x5xf32>, vector<5x5xf32>, vector<16x5xf32> -> vector<16x5xf32>
    %c0_58 = arith.constant 0 : index
    %c0_59 = arith.constant 0 : index
    %99 = vector.load %arg7[%c0_58, %c0_59] : memref<5x16xf32, #tpu.memory_space<vmem>>, vector<5x16xf32>
    %cst_60 = arith.constant dense<0.000000e+00> : vector<16x16xf32>
    %100 = tpu.matmul %98, %99, %cst_60 {dimension_numbers = #tpu.dot_dimension_numbers<[1], [0], [0], [1], [0, 0, 1, 1], [], []>} : vector<16x5xf32>, vector<5x16xf32>, vector<16x16xf32> -> vector<16x16xf32>
    %c0_61 = arith.constant 0 : index
    %c1 = arith.constant 1 : index
    %c0_62 = arith.constant 0 : index
    %c0_63 = arith.constant 0 : index
    %101 = vector.load %arg12[%c0_61, %c1, %c0_62, %c0_63] : memref<1x8x16x16xf32, #tpu.memory_space<vmem>>, vector<1x1x16x16xf32>
    %102 = vector.shape_cast %101 : vector<1x1x16x16xf32> to vector<16x16xf32>
    %103 = vector.shape_cast %100 : vector<16x16xf32> to vector<1x1x16x16xf32>
    tpu.vector_store %arg12[%c0_61, %c1, %c0_62, %c0_63], %103 {strides = array<i32>} : memref<1x8x16x16xf32, #tpu.memory_space<vmem>>, vector<1x1x16x16xf32>,
    %104 = vector.extract_strided_slice %1 {offsets = [0, 0, 0], sizes = [4, 16, 5], strides = [1, 1, 1]} : vector<4x16x16xf32> to vector<4x16x5xf32>
    %cst_64 = arith.constant dense<0xFF800000> : vector<4x16xf32>
    %105 = vector.multi_reduction <maximumf>, %104, %cst_64 [2] : vector<4x16x5xf32> to vector<4x16xf32>
    %106 = vector.shape_cast %105 : vector<4x16xf32> to vector<4x16x1xf32>
    %107 = vector.extract_strided_slice %1 {offsets = [0, 0, 5], sizes = [4, 16, 5], strides = [1, 1, 1]} : vector<4x16x16xf32> to vector<4x16x5xf32>
    %cst_65 = arith.constant dense<0xFF800000> : vector<4x16xf32>
    %108 = vector.multi_reduction <maximumf>, %107, %cst_65 [2] : vector<4x16x5xf32> to vector<4x16xf32>
    %109 = vector.shape_cast %108 : vector<4x16xf32> to vector<4x16x1xf32>
    %110 = vector.extract_strided_slice %1 {offsets = [0, 0, 10], sizes = [4, 16, 5], strides = [1, 1, 1]} : vector<4x16x16xf32> to vector<4x16x5xf32>
    %cst_66 = arith.constant dense<0xFF800000> : vector<4x16xf32>
    %111 = vector.multi_reduction <maximumf>, %110, %cst_66 [2] : vector<4x16x5xf32> to vector<4x16xf32>
    %112 = vector.shape_cast %111 : vector<4x16xf32> to vector<4x16x1xf32>
    %113 = tpu.concatenate %106, %109, %112 in 2 : vector<4x16x1xf32>, vector<4x16x1xf32>, vector<4x16x1xf32> -> vector<4x16x3xf32>
    %114 = vector.extract_strided_slice %113 {offsets = [0, 0, 0], sizes = [4, 5, 3], strides = [1, 1, 1]} : vector<4x16x3xf32> to vector<4x5x3xf32>
    %cst_67 = arith.constant dense<0xFF800000> : vector<4x3xf32>
    %115 = vector.multi_reduction <maximumf>, %114, %cst_67 [1] : vector<4x5x3xf32> to vector<4x3xf32>
    %cst_68 = arith.constant dense<0.000000e+00> : vector<1x3xf32>
    %116 = tpu.matmul %2, %115, %cst_68 {dimension_numbers = #tpu.dot_dimension_numbers<[1], [0], [0], [1], [0, 0, 1, 1], [], []>} : vector<1x4xf32>, vector<4x3xf32>, vector<1x3xf32> -> vector<1x3xf32>
    %117 = vector.extract_strided_slice %113 {offsets = [0, 5, 0], sizes = [4, 5, 3], strides = [1, 1, 1]} : vector<4x16x3xf32> to vector<4x5x3xf32>
    %cst_69 = arith.constant dense<0xFF800000> : vector<4x3xf32>
    %118 = vector.multi_reduction <maximumf>, %117, %cst_69 [1] : vector<4x5x3xf32> to vector<4x3xf32>
    %cst_70 = arith.constant dense<0.000000e+00> : vector<1x3xf32>
    %119 = tpu.matmul %2, %118, %cst_70 {dimension_numbers = #tpu.dot_dimension_numbers<[1], [0], [0], [1], [0, 0, 1, 1], [], []>} : vector<1x4xf32>, vector<4x3xf32>, vector<1x3xf32> -> vector<1x3xf32>
    %120 = vector.extract_strided_slice %113 {offsets = [0, 10, 0], sizes = [4, 5, 3], strides = [1, 1, 1]} : vector<4x16x3xf32> to vector<4x5x3xf32>
    %cst_71 = arith.constant dense<0xFF800000> : vector<4x3xf32>
    %121 = vector.multi_reduction <maximumf>, %120, %cst_71 [1] : vector<4x5x3xf32> to vector<4x3xf32>
    %cst_72 = arith.constant dense<0.000000e+00> : vector<1x3xf32>
    %122 = tpu.matmul %2, %121, %cst_72 {dimension_numbers = #tpu.dot_dimension_numbers<[1], [0], [0], [1], [0, 0, 1, 1], [], []>} : vector<1x4xf32>, vector<4x3xf32>, vector<1x3xf32> -> vector<1x3xf32>
    %123 = tpu.concatenate %116, %119, %122 in 0 : vector<1x3xf32>, vector<1x3xf32>, vector<1x3xf32> -> vector<3x3xf32>
    %124 = vector.broadcast %3 : f32 to vector<3x3xf32>
    %125 = arith.addf %123, %124 : vector<3x3xf32>
    %c0_73 = arith.constant 0 : index
    %c0_74 = arith.constant 0 : index
    %126 = vector.load %arg8[%c0_73, %c0_74] : memref<16x3xf32, #tpu.memory_space<vmem>>, vector<16x3xf32>
    %cst_75 = arith.constant dense<0.000000e+00> : vector<16x3xf32>
    %127 = tpu.matmul %126, %125, %cst_75 {dimension_numbers = #tpu.dot_dimension_numbers<[1], [0], [0], [1], [0, 0, 1, 1], [], []>} : vector<16x3xf32>, vector<3x3xf32>, vector<16x3xf32> -> vector<16x3xf32>
    %c0_76 = arith.constant 0 : index
    %c0_77 = arith.constant 0 : index
    %128 = vector.load %arg9[%c0_76, %c0_77] : memref<3x16xf32, #tpu.memory_space<vmem>>, vector<3x16xf32>
    %cst_78 = arith.constant dense<0.000000e+00> : vector<16x16xf32>
    %129 = tpu.matmul %127, %128, %cst_78 {dimension_numbers = #tpu.dot_dimension_numbers<[1], [0], [0], [1], [0, 0, 1, 1], [], []>} : vector<16x3xf32>, vector<3x16xf32>, vector<16x16xf32> -> vector<16x16xf32>
    %c0_79 = arith.constant 0 : index
    %c2 = arith.constant 2 : index
    %c0_80 = arith.constant 0 : index
    %c0_81 = arith.constant 0 : index
    %130 = vector.load %arg12[%c0_79, %c2, %c0_80, %c0_81] : memref<1x8x16x16xf32, #tpu.memory_space<vmem>>, vector<1x1x16x16xf32>
    %131 = vector.shape_cast %130 : vector<1x1x16x16xf32> to vector<16x16xf32>
    %132 = vector.shape_cast %129 : vector<16x16xf32> to vector<1x1x16x16xf32>
    tpu.vector_store %arg12[%c0_79, %c2, %c0_80, %c0_81], %132 {strides = array<i32>} : memref<1x8x16x16xf32, #tpu.memory_space<vmem>>, vector<1x1x16x16xf32>,
    %133 = vector.extract_strided_slice %1 {offsets = [0, 0, 0], sizes = [4, 16, 6], strides = [1, 1, 1]} : vector<4x16x16xf32> to vector<4x16x6xf32>
    %cst_82 = arith.constant dense<0xFF800000> : vector<4x16xf32>
    %134 = vector.multi_reduction <maximumf>, %133, %cst_82 [2] : vector<4x16x6xf32> to vector<4x16xf32>
    %135 = vector.shape_cast %134 : vector<4x16xf32> to vector<4x16x1xf32>
    %136 = vector.extract_strided_slice %1 {offsets = [0, 0, 6], sizes = [4, 16, 6], strides = [1, 1, 1]} : vector<4x16x16xf32> to vector<4x16x6xf32>
    %cst_83 = arith.constant dense<0xFF800000> : vector<4x16xf32>
    %137 = vector.multi_reduction <maximumf>, %136, %cst_83 [2] : vector<4x16x6xf32> to vector<4x16xf32>
    %138 = vector.shape_cast %137 : vector<4x16xf32> to vector<4x16x1xf32>
    %139 = tpu.concatenate %135, %138 in 2 : vector<4x16x1xf32>, vector<4x16x1xf32> -> vector<4x16x2xf32>
    %140 = vector.extract_strided_slice %139 {offsets = [0, 0, 0], sizes = [4, 6, 2], strides = [1, 1, 1]} : vector<4x16x2xf32> to vector<4x6x2xf32>
    %cst_84 = arith.constant dense<0xFF800000> : vector<4x2xf32>
    %141 = vector.multi_reduction <maximumf>, %140, %cst_84 [1] : vector<4x6x2xf32> to vector<4x2xf32>
    %cst_85 = arith.constant dense<0.000000e+00> : vector<1x2xf32>
    %142 = tpu.matmul %2, %141, %cst_85 {dimension_numbers = #tpu.dot_dimension_numbers<[1], [0], [0], [1], [0, 0, 1, 1], [], []>} : vector<1x4xf32>, vector<4x2xf32>, vector<1x2xf32> -> vector<1x2xf32>
    %143 = vector.extract_strided_slice %139 {offsets = [0, 6, 0], sizes = [4, 6, 2], strides = [1, 1, 1]} : vector<4x16x2xf32> to vector<4x6x2xf32>
    %cst_86 = arith.constant dense<0xFF800000> : vector<4x2xf32>
    %144 = vector.multi_reduction <maximumf>, %143, %cst_86 [1] : vector<4x6x2xf32> to vector<4x2xf32>
    %cst_87 = arith.constant dense<0.000000e+00> : vector<1x2xf32>
    %145 = tpu.matmul %2, %144, %cst_87 {dimension_numbers = #tpu.dot_dimension_numbers<[1], [0], [0], [1], [0, 0, 1, 1], [], []>} : vector<1x4xf32>, vector<4x2xf32>, vector<1x2xf32> -> vector<1x2xf32>
    %146 = tpu.concatenate %142, %145 in 0 : vector<1x2xf32>, vector<1x2xf32> -> vector<2x2xf32>
    %147 = vector.broadcast %3 : f32 to vector<2x2xf32>
    %148 = arith.addf %146, %147 : vector<2x2xf32>
    %c0_88 = arith.constant 0 : index
    %c0_89 = arith.constant 0 : index
    %149 = vector.load %arg10[%c0_88, %c0_89] : memref<16x2xf32, #tpu.memory_space<vmem>>, vector<16x2xf32>
    %cst_90 = arith.constant dense<0.000000e+00> : vector<16x2xf32>
    %150 = tpu.matmul %149, %148, %cst_90 {dimension_numbers = #tpu.dot_dimension_numbers<[1], [0], [0], [1], [0, 0, 1, 1], [], []>} : vector<16x2xf32>, vector<2x2xf32>, vector<16x2xf32> -> vector<16x2xf32>
    %c0_91 = arith.constant 0 : index
    %c0_92 = arith.constant 0 : index
    %151 = vector.load %arg11[%c0_91, %c0_92] : memref<2x16xf32, #tpu.memory_space<vmem>>, vector<2x16xf32>
    %cst_93 = arith.constant dense<0.000000e+00> : vector<16x16xf32>
    %152 = tpu.matmul %150, %151, %cst_93 {dimension_numbers = #tpu.dot_dimension_numbers<[1], [0], [0], [1], [0, 0, 1, 1], [], []>} : vector<16x2xf32>, vector<2x16xf32>, vector<16x16xf32> -> vector<16x16xf32>
    %c0_94 = arith.constant 0 : index
    %c3 = arith.constant 3 : index
    %c0_95 = arith.constant 0 : index
    %c0_96 = arith.constant 0 : index
    %153 = vector.load %arg12[%c0_94, %c3, %c0_95, %c0_96] : memref<1x8x16x16xf32, #tpu.memory_space<vmem>>, vector<1x1x16x16xf32>
    %154 = vector.shape_cast %153 : vector<1x1x16x16xf32> to vector<16x16xf32>
    %155 = vector.shape_cast %152 : vector<16x16xf32> to vector<1x1x16x16xf32>
    tpu.vector_store %arg12[%c0_94, %c3, %c0_95, %c0_96], %155 {strides = array<i32>} : memref<1x8x16x16xf32, #tpu.memory_space<vmem>>, vector<1x1x16x16xf32>,
    %c0_97 = arith.constant 0 : index
    %c4 = arith.constant 4 : index
    %c0_98 = arith.constant 0 : index
    %c0_99 = arith.constant 0 : index
    %156 = vector.load %arg12[%c0_97, %c4, %c0_98, %c0_99] : memref<1x8x16x16xf32, #tpu.memory_space<vmem>>, vector<1x4x16x16xf32>
    %157 = vector.shape_cast %156 : vector<1x4x16x16xf32> to vector<4x16x16xf32>
    %158 = vector.shape_cast %1 : vector<4x16x16xf32> to vector<1x4x16x16xf32>
    tpu.vector_store %arg12[%c0_97, %c4, %c0_98, %c0_99], %158 {strides = array<i32>} : memref<1x8x16x16xf32, #tpu.memory_space<vmem>>, vector<1x4x16x16xf32>,
    return
  }
  func.func @transform_0(%arg0: i32) -> (i32, i32, i32, i32) {
    %c0_i32 = arith.constant 0 : i32
    %c0_i32_0 = arith.constant 0 : i32
    %c0_i32_1 = arith.constant 0 : i32
    %c0_i32_2 = arith.constant 0 : i32
    return %arg0, %c0_i32, %c0_i32_0, %c0_i32_1 : i32, i32, i32, i32
  }
  func.func @transform_1(%arg0: i32) -> (i32, i32) {
    %c0_i32 = arith.constant 0 : i32
    %c0_i32_0 = arith.constant 0 : i32
    %c0_i32_1 = arith.constant 0 : i32
    return %c0_i32, %c0_i32_0 : i32, i32
  }
  func.func @transform_2(%arg0: i32) -> (i32, i32) {
    %c0_i32 = arith.constant 0 : i32
    %c0_i32_0 = arith.constant 0 : i32
    %c0_i32_1 = arith.constant 0 : i32
    return %c0_i32, %c0_i32_0 : i32, i32
  }
  func.func @transform_3(%arg0: i32) -> (i32, i32) {
    %c0_i32 = arith.constant 0 : i32
    %c0_i32_0 = arith.constant 0 : i32
    %c0_i32_1 = arith.constant 0 : i32
    return %c0_i32, %c0_i32_0 : i32, i32
  }
  func.func @transform_4(%arg0: i32) -> (i32, i32) {
    %c0_i32 = arith.constant 0 : i32
    %c0_i32_0 = arith.constant 0 : i32
    %c0_i32_1 = arith.constant 0 : i32
    return %c0_i32, %c0_i32_0 : i32, i32
  }
  func.func @transform_5(%arg0: i32) -> (i32, i32) {
    %c0_i32 = arith.constant 0 : i32
    %c0_i32_0 = arith.constant 0 : i32
    %c0_i32_1 = arith.constant 0 : i32
    return %c0_i32, %c0_i32_0 : i32, i32
  }
  func.func @transform_6(%arg0: i32) -> (i32, i32) {
    %c0_i32 = arith.constant 0 : i32
    %c0_i32_0 = arith.constant 0 : i32
    %c0_i32_1 = arith.constant 0 : i32
    return %c0_i32, %c0_i32_0 : i32, i32
  }
  func.func @transform_7(%arg0: i32) -> (i32, i32) {
    %c0_i32 = arith.constant 0 : i32
    %c0_i32_0 = arith.constant 0 : i32
    %c0_i32_1 = arith.constant 0 : i32
    return %c0_i32, %c0_i32_0 : i32, i32
  }
  func.func @transform_8(%arg0: i32) -> (i32, i32) {
    %c0_i32 = arith.constant 0 : i32
    %c0_i32_0 = arith.constant 0 : i32
    %c0_i32_1 = arith.constant 0 : i32
    return %c0_i32, %c0_i32_0 : i32, i32
  }
  func.func @transform_9(%arg0: i32) -> (i32, i32) {
    %c0_i32 = arith.constant 0 : i32
    %c0_i32_0 = arith.constant 0 : i32
    %c0_i32_1 = arith.constant 0 : i32
    return %c0_i32, %c0_i32_0 : i32, i32
  }
  func.func @transform_10(%arg0: i32) -> (i32, i32) {
    %c0_i32 = arith.constant 0 : i32
    %c0_i32_0 = arith.constant 0 : i32
    %c0_i32_1 = arith.constant 0 : i32
    return %c0_i32, %c0_i32_0 : i32, i32
  }
  func.func @transform_11(%arg0: i32) -> (i32, i32, i32, i32) {
    %c0_i32 = arith.constant 0 : i32
    %c0_i32_0 = arith.constant 0 : i32
    %c0_i32_1 = arith.constant 0 : i32
    %c0_i32_2 = arith.constant 0 : i32
    return %arg0, %c0_i32, %c0_i32_0, %c0_i32_1 : i32, i32, i32, i32
  }
}

</mosaic_0001>

<llo_original>
// kernel: spp_block_forward.1
$region0: #{spp_block_forward.1}
  #allocation0 [shape = 'u32[]', space=smem, size = 0x4, offset = 0x4, fixed_abs, tag = 'smem constant byte address 0x4 - core index']
  #allocation1 [shape = 'u32[144,128]{1,0:T(1,128)}', space=vmem, size = 0x12000, scoped, tag = 'internal scratch']
  #allocation2 [shape = 'f32[1,1]{1,0:T(1,128)S(6)}', space=smem, size = 0x200, scoped, tag = 'scoped memory for spp_block_forward.1']
  %s0 = inlined_call_operand.hbm [shape: f32[2,4,16,16], index: 0, kind: input, shape index: {}]
  %s1 = inlined_call_operand.hbm [shape: f32[1,4], index: 1, kind: input, shape index: {}]
  %s2 = inlined_call_operand.<no memory space> [shape: f32[1,1], index: 2, kind: input, shape index: {}]
  %s3 = inlined_call_operand.hbm [shape: f32[16,8], index: 3, kind: input, shape index: {}]
  %s4 = inlined_call_operand.hbm [shape: f32[8,16], index: 4, kind: input, shape index: {}]
  %s5 = inlined_call_operand.hbm [shape: f32[16,5], index: 5, kind: input, shape index: {}]
  %s6 = inlined_call_operand.hbm [shape: f32[5,16], index: 6, kind: input, shape index: {}]
  %s7 = inlined_call_operand.hbm [shape: f32[16,3], index: 7, kind: input, shape index: {}]
  %s8 = inlined_call_operand.hbm [shape: f32[3,16], index: 8, kind: input, shape index: {}]
  %s9 = inlined_call_operand.hbm [shape: f32[16,2], index: 9, kind: input, shape index: {}]
  %s10 = inlined_call_operand.hbm [shape: f32[2,16], index: 10, kind: input, shape index: {}]
  %s11 = inlined_call_operand.hbm [shape: f32[2,8,16,16], index: 11, kind: output, shape index: {}]
  %s12 = sld [smem:[#allocation0]]
  $region117: #{spp_block_forward.1} parent=0
    _
  %s14 = ssub.s32 1, %s12
  %s15 = scalar_select 0, %s14, %s12
  %16 = sst [smem:[#allocation2]] %s2
  $region1: #{spp_block_forward.1} parent=0
    #allocation3 [shape = 'u8[65536]{0}', space=vmem, size = 0x10000, scoped, tag = 'input window, operand 0']
    #allocation4 [shape = 's32[2]{0}', space=sflag, size = 0x8, scoped, tag = 'scoped memory for spp_block_forward.1']
    #allocation5 [shape = 's32[2]{0}', space=sflag, size = 0x8, scoped, tag = 'scoped memory for spp_block_forward.1']
    #allocation6 [shape = 'u8[512]{0}', space=vmem, size = 0x400, scoped, tag = 'input window, operand 1, single buffered']
    #allocation7 [shape = 's32[1]{0}', space=sflag, size = 0x4, scoped, tag = 'scoped memory for spp_block_forward.1']
    #allocation8 [shape = 'u8[8192]{0}', space=vmem, size = 0x2000, scoped, tag = 'input window, operand 3, single buffered']
    #allocation9 [shape = 'u8[4096]{0}', space=vmem, size = 0x1000, scoped, tag = 'input window, operand 4, single buffered']
    #allocation10 [shape = 's32[1]{0}', space=sflag, size = 0x4, scoped, tag = 'scoped memory for spp_block_forward.1']
    #allocation11 [shape = 'u8[8192]{0}', space=vmem, size = 0x2000, scoped, tag = 'input window, operand 5, single buffered']
    #allocation12 [shape = 'u8[4096]{0}', space=vmem, size = 0x1000, scoped, tag = 'input window, operand 6, single buffered']
    #allocation13 [shape = 's32[1]{0}', space=sflag, size = 0x4, scoped, tag = 'scoped memory for spp_block_forward.1']
    #allocation14 [shape = 'u8[8192]{0}', space=vmem, size = 0x2000, scoped, tag = 'input window, operand 7, single buffered']
    #allocation15 [shape = 'u8[2048]{0}', space=vmem, size = 0x800, scoped, tag = 'input window, operand 8, single buffered']
    #allocation16 [shape = 's32[1]{0}', space=sflag, size = 0x4, scoped, tag = 'scoped memory for spp_block_forward.1']
    #allocation17 [shape = 'u8[8192]{0}', space=vmem, size = 0x2000, scoped, tag = 'input window, operand 9, single buffered']
    #allocation18 [shape = 'u8[1024]{0}', space=vmem, size = 0x400, scoped, tag = 'input window, operand 10, single buffered']
    #allocation19 [shape = 's32[1]{0}', space=sflag, size = 0x4, scoped, tag = 'scoped memory for spp_block_forward.1']
    #allocation20 [shape = 'u8[131072]{0}', space=vmem, size = 0x20000, scoped, tag = 'output window, operand 0']
    %17 = vsyncpa [#allocation4], 0
    %s18 = scalar_lea.sflag [#allocation4], 1
    %19 = vsyncpa %s18, 0
    %20 = vsyncpa [#allocation7], 0
    %21 = vsyncpa [#allocation10], 0
    %22 = vsyncpa [#allocation13], 0
    %23 = vsyncpa [#allocation16], 0
    %24 = vsyncpa [#allocation19], 0
    %25 = vsyncpa [#allocation5], 0
    %s26 = scalar_lea.sflag [#allocation5], 1
    %27 = vsyncpa %s26, 0
    loop: start=0, step=1, limit=4
    $region2: #{spp_block_forward.1} parent=1 // loop_pre_header
      _
    $region3: #{spp_block_forward.1} parent=1 // loop_header
      %s29 = sphi 0, %s33
      %p30 = scmp.ge.s32.totalorder %s29, 4
      %s39 = sphi 0, %s41
      %s42 = sphi 0, %s39
      %s43 = sphi 0, %s42
      %s59 = sphi 0, %s43
      %s63 = sphi 0, %s63
      %s65 = sphi 0, %s63
      %s66 = sphi 0, %s65
      %s80 = sphi 0, %s66
      %s84 = sphi 0, %s84
      %s86 = sphi 0, %s84
      %s87 = sphi 0, %s86
      %s101 = sphi 0, %s87
      %s105 = sphi 0, %s105
      %s107 = sphi 0, %s105
      %s108 = sphi 0, %s107
      %s122 = sphi 0, %s108
      %s126 = sphi 0, %s126
      %s128 = sphi 0, %s126
      %s129 = sphi 0, %s128
      %s143 = sphi 0, %s129
      %s147 = sphi 0, %s147
      %s149 = sphi 0, %s147
      %s150 = sphi 0, %s149
      %s164 = sphi 0, %s150
      %s168 = sphi 0, %s168
      %s170 = sphi 0, %s168
      %s171 = sphi 0, %s170
      %s185 = sphi 0, %s171
      %s189 = sphi 0, %s189
      %s191 = sphi 0, %s189
      %s192 = sphi 0, %s191
      %s206 = sphi 0, %s192
      %s210 = sphi 0, %s210
      %s212 = sphi 0, %s210
      %s213 = sphi 0, %s212
      %s227 = sphi 0, %s213
      %s231 = sphi 0, %s231
      %s233 = sphi 0, %s231
      %s234 = sphi 0, %s233
      %s248 = sphi 0, %s234
      %s252 = sphi 0, %s252
      %s254 = sphi 0, %s252
      %s255 = sphi 0, %s254
      %s269 = sphi 0, %s255
      %s275 = sphi 0, %s277
      %s278 = sphi 0, %s275
      %s279 = sphi 0, %s278
      %s295 = sphi 0, %s279
    $region4: #{spp_block_forward.1} parent=1 // loop_header_branch
      %32 = sbr.rel (%p30) target = $region8
    $region5: #{spp_block_forward.1} parent=1 // loop_body
      %s34 = ssub.s32 %s29, 1
      %s35 = ssub.s32 %s29, 2
      %s36 = sadd.s32 %s29, 1
      %s37 = ssub.s32 %s29, %s36
      %p38 = scmp.eq.s32.totalorder %s37, 0
      %s40 = sadd.s32 %s39, 1
      %s41 = scalar_select %p38, %s39, %s40
      %p44 = pneg %p38
      %p45 = scmp.eq.s32.totalorder %s29, 1
      %p46 = por %p44, %p45
      %p47 = scmp.ne.s32.totalorder %s39, %s42
      %p48 = scmp.eq.s32.totalorder %s29, 0
      %p49 = por %p47, %p48
      %p50 = scmp.ne.s32.totalorder %s39, %s42
      %p51 = scmp.eq.s32.totalorder %s34, 1
      %p52 = por %p50, %p51
      %p53 = scmp.ne.s32.totalorder %s42, %s43
      %p54 = scmp.eq.s32.totalorder %s34, 0
      %p55 = por %p53, %p54
      %p56 = scmp.ne.s32.totalorder %s42, %s43
      %p57 = scmp.eq.s32.totalorder %s35, 1
      %p58 = por %p56, %p57
      %p60 = scmp.ne.s32.totalorder %s43, %s59
      %p61 = scmp.eq.s32.totalorder %s35, 0
      %p62 = por %p60, %p61
      %s64 = sadd.s32 %s63, 1
      %p67 = scmp.eq.s32.totalorder %s29, 1
      %p68 = scmp.ne.s32.totalorder %s63, %s65
      %p69 = scmp.eq.s32.totalorder %s29, 0
      %p70 = por %p68, %p69
      %p71 = scmp.ne.s32.totalorder %s63, %s65
      %p72 = scmp.eq.s32.totalorder %s34, 1
      %p73 = por %p71, %p72
      %p74 = scmp.ne.s32.totalorder %s65, %s66
      %p75 = scmp.eq.s32.totalorder %s34, 0
      %p76 = por %p74, %p75
      %p77 = scmp.ne.s32.totalorder %s65, %s66
      %p78 = scmp.eq.s32.totalorder %s35, 1
      %p79 = por %p77, %p78
      %p81 = scmp.ne.s32.totalorder %s66, %s80
      %p82 = scmp.eq.s32.totalorder %s35, 0
      %p83 = por %p81, %p82
      %s85 = sadd.s32 %s84, 1
      %p88 = scmp.eq.s32.totalorder %s29, 1
      %p89 = scmp.ne.s32.totalorder %s84, %s86
      %p90 = scmp.eq.s32.totalorder %s29, 0
      %p91 = por %p89, %p90
      %p92 = scmp.ne.s32.totalorder %s84, %s86
      %p93 = scmp.eq.s32.totalorder %s34, 1
      %p94 = por %p92, %p93
      %p95 = scmp.ne.s32.totalorder %s86, %s87
      %p96 = scmp.eq.s32.totalorder %s34, 0
      %p97 = por %p95, %p96
      %p98 = scmp.ne.s32.totalorder %s86, %s87
      %p99 = scmp.eq.s32.totalorder %s35, 1
      %p100 = por %p98, %p99
      %p102 = scmp.ne.s32.totalorder %s87, %s101
      %p103 = scmp.eq.s32.totalorder %s35, 0
      %p104 = por %p102, %p103
      %s106 = sadd.s32 %s105, 1
      %p109 = scmp.eq.s32.totalorder %s29, 1
      %p110 = scmp.ne.s32.totalorder %s105, %s107
      %p111 = scmp.eq.s32.totalorder %s29, 0
      %p112 = por %p110, %p111
      %p113 = scmp.ne.s32.totalorder %s105, %s107
      %p114 = scmp.eq.s32.totalorder %s34, 1
      %p115 = por %p113, %p114
      %p116 = scmp.ne.s32.totalorder %s107, %s108
      %p117 = scmp.eq.s32.totalorder %s34, 0
      %p118 = por %p116, %p117
      %p119 = scmp.ne.s32.totalorder %s107, %s108
      %p120 = scmp.eq.s32.totalorder %s35, 1
      %p121 = por %p119, %p120
      %p123 = scmp.ne.s32.totalorder %s108, %s122
      %p124 = scmp.eq.s32.totalorder %s35, 0
      %p125 = por %p123, %p124
      %s127 = sadd.s32 %s126, 1
      %p130 = scmp.eq.s32.totalorder %s29, 1
      %p131 = scmp.ne.s32.totalorder %s126, %s128
      %p132 = scmp.eq.s32.totalorder %s29, 0
      %p133 = por %p131, %p132
      %p134 = scmp.ne.s32.totalorder %s126, %s128
      %p135 = scmp.eq.s32.totalorder %s34, 1
      %p136 = por %p134, %p135
      %p137 = scmp.ne.s32.totalorder %s128, %s129
      %p138 = scmp.eq.s32.totalorder %s34, 0
      %p139 = por %p137, %p138
      %p140 = scmp.ne.s32.totalorder %s128, %s129
      %p141 = scmp.eq.s32.totalorder %s35, 1
      %p142 = por %p140, %p141
      %p144 = scmp.ne.s32.totalorder %s129, %s143
      %p145 = scmp.eq.s32.totalorder %s35, 0
      %p146 = por %p144, %p145
      %s148 = sadd.s32 %s147, 1
      %p151 = scmp.eq.s32.totalorder %s29, 1
      %p152 = scmp.ne.s32.totalorder %s147, %s149
      %p153 = scmp.eq.s32.totalorder %s29, 0
      %p154 = por %p152, %p153
      %p155 = scmp.ne.s32.totalorder %s147, %s149
      %p156 = scmp.eq.s32.totalorder %s34, 1
      %p157 = por %p155, %p156
      %p158 = scmp.ne.s32.totalorder %s149, %s150
      %p159 = scmp.eq.s32.totalorder %s34, 0
      %p160 = por %p158, %p159
      %p161 = scmp.ne.s32.totalorder %s149, %s150
      %p162 = scmp.eq.s32.totalorder %s35, 1
      %p163 = por %p161, %p162
      %p165 = scmp.ne.s32.totalorder %s150, %s164
      %p166 = scmp.eq.s32.totalorder %s35, 0
      %p167 = por %p165, %p166
      %s169 = sadd.s32 %s168, 1
      %p172 = scmp.eq.s32.totalorder %s29, 1
      %p173 = scmp.ne.s32.totalorder %s168, %s170
      %p174 = scmp.eq.s32.totalorder %s29, 0
      %p175 = por %p173, %p174
      %p176 = scmp.ne.s32.totalorder %s168, %s170
      %p177 = scmp.eq.s32.totalorder %s34, 1
      %p178 = por %p176, %p177
      %p179 = scmp.ne.s32.totalorder %s170, %s171
      %p180 = scmp.eq.s32.totalorder %s34, 0
      %p181 = por %p179, %p180
      %p182 = scmp.ne.s32.totalorder %s170, %s171
      %p183 = scmp.eq.s32.totalorder %s35, 1
      %p184 = por %p182, %p183
      %p186 = scmp.ne.s32.totalorder %s171, %s185
      %p187 = scmp.eq.s32.totalorder %s35, 0
      %p188 = por %p186, %p187
      %s190 = sadd.s32 %s189, 1
      %p193 = scmp.eq.s32.totalorder %s29, 1
      %p194 = scmp.ne.s32.totalorder %s189, %s191
      %p195 = scmp.eq.s32.totalorder %s29, 0
      %p196 = por %p194, %p195
      %p197 = scmp.ne.s32.totalorder %s189, %s191
      %p198 = scmp.eq.s32.totalorder %s34, 1
      %p199 = por %p197, %p198
      %p200 = scmp.ne.s32.totalorder %s191, %s192
      %p201 = scmp.eq.s32.totalorder %s34, 0
      %p202 = por %p200, %p201
      %p203 = scmp.ne.s32.totalorder %s191, %s192
      %p204 = scmp.eq.s32.totalorder %s35, 1
      %p205 = por %p203, %p204
      %p207 = scmp.ne.s32.totalorder %s192, %s206
      %p208 = scmp.eq.s32.totalorder %s35, 0
      %p209 = por %p207, %p208
      %s211 = sadd.s32 %s210, 1
      %p214 = scmp.eq.s32.totalorder %s29, 1
      %p215 = scmp.ne.s32.totalorder %s210, %s212
      %p216 = scmp.eq.s32.totalorder %s29, 0
      %p217 = por %p215, %p216
      %p218 = scmp.ne.s32.totalorder %s210, %s212
      %p219 = scmp.eq.s32.totalorder %s34, 1
      %p220 = por %p218, %p219
      %p221 = scmp.ne.s32.totalorder %s212, %s213
      %p222 = scmp.eq.s32.totalorder %s34, 0
      %p223 = por %p221, %p222
      %p224 = scmp.ne.s32.totalorder %s212, %s213
      %p225 = scmp.eq.s32.totalorder %s35, 1
      %p226 = por %p224, %p225
      %p228 = scmp.ne.s32.totalorder %s213, %s227
      %p229 = scmp.eq.s32.totalorder %s35, 0
      %p230 = por %p228, %p229
      %s232 = sadd.s32 %s231, 1
      %p235 = scmp.eq.s32.totalorder %s29, 1
      %p236 = scmp.ne.s32.totalorder %s231, %s233
      %p237 = scmp.eq.s32.totalorder %s29, 0
      %p238 = por %p236, %p237
      %p239 = scmp.ne.s32.totalorder %s231, %s233
      %p240 = scmp.eq.s32.totalorder %s34, 1
      %p241 = por %p239, %p240
      %p242 = scmp.ne.s32.totalorder %s233, %s234
      %p243 = scmp.eq.s32.totalorder %s34, 0
      %p244 = por %p242, %p243
      %p245 = scmp.ne.s32.totalorder %s233, %s234
      %p246 = scmp.eq.s32.totalorder %s35, 1
      %p247 = por %p245, %p246
      %p249 = scmp.ne.s32.totalorder %s234, %s248
      %p250 = scmp.eq.s32.totalorder %s35, 0
      %p251 = por %p249, %p250
      %s253 = sadd.s32 %s252, 1
      %p256 = scmp.eq.s32.totalorder %s29, 1
      %p257 = scmp.ne.s32.totalorder %s252, %s254
      %p258 = scmp.eq.s32.totalorder %s29, 0
      %p259 = por %p257, %p258
      %p260 = scmp.ne.s32.totalorder %s252, %s254
      %p261 = scmp.eq.s32.totalorder %s34, 1
      %p262 = por %p260, %p261
      %p263 = scmp.ne.s32.totalorder %s254, %s255
      %p264 = scmp.eq.s32.totalorder %s34, 0
      %p265 = por %p263, %p264
      %p266 = scmp.ne.s32.totalorder %s254, %s255
      %p267 = scmp.eq.s32.totalorder %s35, 1
      %p268 = por %p266, %p267
      %p270 = scmp.ne.s32.totalorder %s255, %s269
      %p271 = scmp.eq.s32.totalorder %s35, 0
      %p272 = por %p270, %p271
      %s273 = ssub.s32 %s29, %s36
      %p274 = scmp.eq.s32.totalorder %s273, 0
      %s276 = sadd.s32 %s275, 1
      %s277 = scalar_select %p274, %s275, %s276
      %p280 = pneg %p274
      %p281 = scmp.eq.s32.totalorder %s29, 1
      %p282 = por %p280, %p281
      %p283 = scmp.ne.s32.totalorder %s275, %s278
      %p284 = scmp.eq.s32.totalorder %s29, 0
      %p285 = por %p283, %p284
      %p286 = scmp.ne.s32.totalorder %s275, %s278
      %p287 = scmp.eq.s32.totalorder %s34, 1
      %p288 = por %p286, %p287
      %p289 = scmp.ne.s32.totalorder %s278, %s279
      %p290 = scmp.eq.s32.totalorder %s34, 0
      %p291 = por %p289, %p290
      %p292 = scmp.ne.s32.totalorder %s278, %s279
      %p293 = scmp.eq.s32.totalorder %s35, 1
      %p294 = por %p292, %p293
      %p296 = scmp.ne.s32.totalorder %s279, %s295
      %p297 = scmp.eq.s32.totalorder %s35, 0
      %p298 = por %p296, %p297
      %p299 = scmp.le.s32.totalorder 1, %s29
      %p300 = scmp.lt.s32.totalorder %s29, 3
      %p301 = pnand %p299, %p300
      %p302 = pneg %p301
      // Predicated region
      $region9: #{spp_block_forward.1} parent=5 // pred_check
        _
      $region10: #{spp_block_forward.1} parent=5 // pred_check_branch
        %304 = sbr.rel (%p301) target = $region12
      $region11: #{spp_block_forward.1} parent=5 // pred_region
        %s305 = ssub.s32 %s29, 1
        // Predicated region
        $region13: #{spp_block_forward.1} parent=11 // pred_check
          %p306 = pneg %p76
        $region14: #{spp_block_forward.1} parent=11 // pred_check_branch
          %308 = sbr.rel (%p306) target = $region16
        $region15: #{spp_block_forward.1} parent=11 // pred_region
          %s310 = ssub.s32 16, 16
          %311 = vsyncadd [#allocation7], %s310
          %s313 = sshll.u32 [#allocation6], 4
          %s314 = int_to_ptr.vmem [resolvable:$true] %s313
          %316 = dma.hbm_to_vmem [thread:$0]  %s1, 16, %s314, [#allocation7]
        $region16: #{spp_block_forward.1} parent=11 // pred_fallthru
          _
        // Predicated region
        $region17: #{spp_block_forward.1} parent=11 // pred_check
          %p317 = pneg %p97
        $region18: #{spp_block_forward.1} parent=11 // pred_check_branch
          %319 = sbr.rel (%p317) target = $region20
        $region19: #{spp_block_forward.1} parent=11 // pred_region
          _
        $region20: #{spp_block_forward.1} parent=11 // pred_fallthru
          _
        // Predicated region
        $region21: #{spp_block_forward.1} parent=11 // pred_check
          %p320 = pneg %p118
        $region22: #{spp_block_forward.1} parent=11 // pred_check_branch
          %322 = sbr.rel (%p320) target = $region24
        $region23: #{spp_block_forward.1} parent=11 // pred_region
          %s324 = ssub.s32 256, 256
          %325 = vsyncadd [#allocation7], %s324
          %s326 = sshll.u32 [#allocation8], 4
          %s327 = int_to_ptr.vmem [resolvable:$true] %s326
          %332 = dma.hbm_to_vmem [thread:$0]  %s3, 256, %s327, [#allocation7], 128, 128, 8
        $region24: #{spp_block_forward.1} parent=11 // pred_fallthru
          _
        // Predicated region
        $region25: #{spp_block_forward.1} parent=11 // pred_check
          %p333 = pneg %p139
        $region26: #{spp_block_forward.1} parent=11 // pred_check_branch
          %335 = sbr.rel (%p333) target = $region28
        $region27: #{spp_block_forward.1} parent=11 // pred_region
          %s337 = ssub.s32 128, 128
          %338 = vsyncadd [#allocation10], %s337
          %s340 = sshll.u32 [#allocation9], 4
          %s341 = int_to_ptr.vmem [resolvable:$true] %s340
          %343 = dma.hbm_to_vmem [thread:$0]  %s4, 128, %s341, [#allocation10]
        $region28: #{spp_block_forward.1} parent=11 // pred_fallthru
          _
        // Predicated region
        $region29: #{spp_block_forward.1} parent=11 // pred_check
          %p344 = pneg %p160
        $region30: #{spp_block_forward.1} parent=11 // pred_check_branch
          %346 = sbr.rel (%p344) target = $region32
        $region31: #{spp_block_forward.1} parent=11 // pred_region
          %s348 = ssub.s32 256, 256
          %349 = vsyncadd [#allocation10], %s348
          %s350 = sshll.u32 [#allocation11], 4
          %s351 = int_to_ptr.vmem [resolvable:$true] %s350
          %356 = dma.hbm_to_vmem [thread:$0]  %s5, 256, %s351, [#allocation10], 128, 128, 8
        $region32: #{spp_block_forward.1} parent=11 // pred_fallthru
          _
        // Predicated region
        $region33: #{spp_block_forward.1} parent=11 // pred_check
          %p357 = pneg %p181
        $region34: #{spp_block_forward.1} parent=11 // pred_check_branch
          %359 = sbr.rel (%p357) target = $region36
        $region35: #{spp_block_forward.1} parent=11 // pred_region
          %s361 = ssub.s32 128, 128
          %362 = vsyncadd [#allocation13], %s361
          %s364 = sshll.u32 [#allocation12], 4
          %s365 = int_to_ptr.vmem [resolvable:$true] %s364
          %367 = dma.hbm_to_vmem [thread:$0]  %s6, 128, %s365, [#allocation13]
        $region36: #{spp_block_forward.1} parent=11 // pred_fallthru
          _
        // Predicated region
        $region37: #{spp_block_forward.1} parent=11 // pred_check
          %p368 = pneg %p202
        $region38: #{spp_block_forward.1} parent=11 // pred_check_branch
          %370 = sbr.rel (%p368) target = $region40
        $region39: #{spp_block_forward.1} parent=11 // pred_region
          %s372 = ssub.s32 256, 256
          %373 = vsyncadd [#allocation13], %s372
          %s374 = sshll.u32 [#allocation14], 4
          %s375 = int_to_ptr.vmem [resolvable:$true] %s374
          %380 = dma.hbm_to_vmem [thread:$0]  %s7, 256, %s375, [#allocation13], 128, 128, 8
        $region40: #{spp_block_forward.1} parent=11 // pred_fallthru
          _
        // Predicated region
        $region41: #{spp_block_forward.1} parent=11 // pred_check
          %p381 = pneg %p223
        $region42: #{spp_block_forward.1} parent=11 // pred_check_branch
          %383 = sbr.rel (%p381) target = $region44
        $region43: #{spp_block_forward.1} parent=11 // pred_region
          %s385 = ssub.s32 64, 64
          %386 = vsyncadd [#allocation16], %s385
          %s388 = sshll.u32 [#allocation15], 4
          %s389 = int_to_ptr.vmem [resolvable:$true] %s388
          %391 = dma.hbm_to_vmem [thread:$0]  %s8, 64, %s389, [#allocation16]
        $region44: #{spp_block_forward.1} parent=11 // pred_fallthru
          _
        // Predicated region
        $region45: #{spp_block_forward.1} parent=11 // pred_check
          %p392 = pneg %p244
        $region46: #{spp_block_forward.1} parent=11 // pred_check_branch
          %394 = sbr.rel (%p392) target = $region48
        $region47: #{spp_block_forward.1} parent=11 // pred_region
          %s396 = ssub.s32 256, 256
          %397 = vsyncadd [#allocation16], %s396
          %s398 = sshll.u32 [#allocation17], 4
          %s399 = int_to_ptr.vmem [resolvable:$true] %s398
          %404 = dma.hbm_to_vmem [thread:$0]  %s9, 256, %s399, [#allocation16], 128, 128, 8
        $region48: #{spp_block_forward.1} parent=11 // pred_fallthru
          _
        // Predicated region
        $region49: #{spp_block_forward.1} parent=11 // pred_check
          %p405 = pneg %p265
        $region50: #{spp_block_forward.1} parent=11 // pred_check_branch
          %407 = sbr.rel (%p405) target = $region52
        $region51: #{spp_block_forward.1} parent=11 // pred_region
          %s409 = ssub.s32 32, 32
          %410 = vsyncadd [#allocation19], %s409
          %s412 = sshll.u32 [#allocation18], 4
          %s413 = int_to_ptr.vmem [resolvable:$true] %s412
          %415 = dma.hbm_to_vmem [thread:$0]  %s10, 32, %s413, [#allocation19]
        $region52: #{spp_block_forward.1} parent=11 // pred_fallthru
          _
      $region12: #{spp_block_forward.1} parent=5 // pred_fallthru
        _
      %p416 = scmp.lt.s32.totalorder %s29, 2
      // Predicated region
      $region53: #{spp_block_forward.1} parent=5 // pred_check
        %p417 = pneg %p416
      $region54: #{spp_block_forward.1} parent=5 // pred_check_branch
        %419 = sbr.rel (%p417) target = $region56
      $region55: #{spp_block_forward.1} parent=5 // pred_region
        // Predicated region
        $region57: #{spp_block_forward.1} parent=55 // pred_check
          %p420 = pneg %p49
        $region58: #{spp_block_forward.1} parent=55 // pred_check_branch
          %422 = sbr.rel (%p420) target = $region60
        $region59: #{spp_block_forward.1} parent=55 // pred_region
          %s423 = sand.u32 %s39, 1
          %s424 = scalar_lea.sflag [#allocation4], %s423
          %s425 = sand.u32 %s39, 1
          %s426 = smul.addr %s425, 64
          %s427 = scalar_lea.vmem [#allocation3], %s426
          %s429 = ssub.s32 1024, 1024
          %430 = vsyncadd %s424, %s429
          %s431 = smul.addr %s29, 8
          %s432 = smul.addr %s431, 128
          %s433 = scalar_lea.hbm %s0, %s432
          %s434 = sshll.u32 %s427, 4
          %s435 = int_to_ptr.vmem [resolvable:$true] %s434
          %440 = dma.hbm_to_vmem [thread:$0]  %s433, 1024, %s435, %s424, 128, 128, 8
        $region60: #{spp_block_forward.1} parent=55 // pred_fallthru
          _
      $region56: #{spp_block_forward.1} parent=5 // pred_fallthru
        _
      %p441 = scmp.le.s32.totalorder 1, %s29
      %p442 = scmp.lt.s32.totalorder %s29, 3
      %p443 = pnand %p441, %p442
      %p444 = pneg %p443
      // Predicated region
      $region61: #{spp_block_forward.1} parent=5 // pred_check
        _
      $region62: #{spp_block_forward.1} parent=5 // pred_check_branch
        %446 = sbr.rel (%p443) target = $region64
      $region63: #{spp_block_forward.1} parent=5 // pred_region
        %s447 = ssub.s32 %s29, 1
        %s448 = sand.u32 %s42, 1
        %s449 = scalar_lea.sflag [#allocation4], %s448
        %s450 = sand.u32 %s42, 1
        %s451 = smul.addr %s450, 64
        %s452 = scalar_lea.vmem [#allocation3], %s451
        // Predicated region
        $region65: #{spp_block_forward.1} parent=63 // pred_check
          %p453 = pneg %p55
        $region66: #{spp_block_forward.1} parent=63 // pred_check_branch
          %455 = sbr.rel (%p453) target = $region68
        $region67: #{spp_block_forward.1} parent=63 // pred_region
          %456 = dma.done %s449, 1024
        $region68: #{spp_block_forward.1} parent=63 // pred_fallthru
          _
        // Predicated region
        $region69: #{spp_block_forward.1} parent=63 // pred_check
          %p457 = pneg %p76
        $region70: #{spp_block_forward.1} parent=63 // pred_check_branch
          %459 = sbr.rel (%p457) target = $region72
        $region71: #{spp_block_forward.1} parent=63 // pred_region
          %460 = dma.done [#allocation7], 16
        $region72: #{spp_block_forward.1} parent=63 // pred_fallthru
          _
        // Predicated region
        $region73: #{spp_block_forward.1} parent=63 // pred_check
          %p461 = pneg %p118
        $region74: #{spp_block_forward.1} parent=63 // pred_check_branch
          %463 = sbr.rel (%p461) target = $region76
        $region75: #{spp_block_forward.1} parent=63 // pred_region
          %464 = dma.done [#allocation7], 256
        $region76: #{spp_block_forward.1} parent=63 // pred_fallthru
          _
        // Predicated region
        $region77: #{spp_block_forward.1} parent=63 // pred_check
          %p465 = pneg %p139
        $region78: #{spp_block_forward.1} parent=63 // pred_check_branch
          %467 = sbr.rel (%p465) target = $region80
        $region79: #{spp_block_forward.1} parent=63 // pred_region
          %468 = dma.done [#allocation10], 128
        $region80: #{spp_block_forward.1} parent=63 // pred_fallthru
          _
        // Predicated region
        $region81: #{spp_block_forward.1} parent=63 // pred_check
          %p469 = pneg %p160
        $region82: #{spp_block_forward.1} parent=63 // pred_check_branch
          %471 = sbr.rel (%p469) target = $region84
        $region83: #{spp_block_forward.1} parent=63 // pred_region
          %472 = dma.done [#allocation10], 256
        $region84: #{spp_block_forward.1} parent=63 // pred_fallthru
          _
        // Predicated region
        $region85: #{spp_block_forward.1} parent=63 // pred_check
          %p473 = pneg %p181
        $region86: #{spp_block_forward.1} parent=63 // pred_check_branch
          %475 = sbr.rel (%p473) target = $region88
        $region87: #{spp_block_forward.1} parent=63 // pred_region
          %476 = dma.done [#allocation13], 128
        $region88: #{spp_block_forward.1} parent=63 // pred_fallthru
          _
        // Predicated region
        $region89: #{spp_block_forward.1} parent=63 // pred_check
          %p477 = pneg %p202
        $region90: #{spp_block_forward.1} parent=63 // pred_check_branch
          %479 = sbr.rel (%p477) target = $region92
        $region91: #{spp_block_forward.1} parent=63 // pred_region
          %480 = dma.done [#allocation13], 256
        $region92: #{spp_block_forward.1} parent=63 // pred_fallthru
          _
        // Predicated region
        $region93: #{spp_block_forward.1} parent=63 // pred_check
          %p481 = pneg %p223
        $region94: #{spp_block_forward.1} parent=63 // pred_check_branch
          %483 = sbr.rel (%p481) target = $region96
        $region95: #{spp_block_forward.1} parent=63 // pred_region
          %484 = dma.done [#allocation16], 64
        $region96: #{spp_block_forward.1} parent=63 // pred_fallthru
          _
        // Predicated region
        $region97: #{spp_block_forward.1} parent=63 // pred_check
          %p485 = pneg %p244
        $region98: #{spp_block_forward.1} parent=63 // pred_check_branch
          %487 = sbr.rel (%p485) target = $region100
        $region99: #{spp_block_forward.1} parent=63 // pred_region
          %488 = dma.done [#allocation16], 256
        $region100: #{spp_block_forward.1} parent=63 // pred_fallthru
          _
        // Predicated region
        $region101: #{spp_block_forward.1} parent=63 // pred_check
          %p489 = pneg %p265
        $region102: #{spp_block_forward.1} parent=63 // pred_check_branch
          %491 = sbr.rel (%p489) target = $region104
        $region103: #{spp_block_forward.1} parent=63 // pred_region
          %492 = dma.done [#allocation19], 32
        $region104: #{spp_block_forward.1} parent=63 // pred_fallthru
          _
        %s493 = sand.u32 %s42, 1
        %s494 = scalar_lea.sflag [#allocation4], %s493
        %s495 = sand.u32 %s42, 1
        %s496 = smul.addr %s495, 64
        %s497 = scalar_lea.vmem [#allocation3], %s496
        %p498 = pneg %p55
        %p499 = pneg %p52
        %p500 = pneg %p76
        %p501 = pneg %p73
        %p502 = pneg %p97
        %p503 = pneg %p94
        %p504 = pneg %p118
        %p505 = pneg %p115
        %p506 = pneg %p139
        %p507 = pneg %p136
        %p508 = pneg %p160
        %p509 = pneg %p157
        %p510 = pneg %p181
        %p511 = pneg %p178
        %p512 = pneg %p202
        %p513 = pneg %p199
        %p514 = pneg %p223
        %p515 = pneg %p220
        %p516 = pneg %p244
        %p517 = pneg %p241
        %p518 = pneg %p265
        %p519 = pneg %p262
        %p520 = pneg %p291
        %p521 = pneg %p288
        %s522 = sand.u32 %s278, 1
        %s523 = scalar_lea.sflag [#allocation5], %s522
        %s524 = sand.u32 %s278, 1
        %s525 = smul.addr %s524, 128
        %s526 = scalar_lea.vmem [#allocation20], %s525
        %v527 = vld [vmem:[%s452] sm:$0xff]
        %v528 = vld [vmem:[%s452 + $0x8] sm:$0xff]
        %v529 = vld [vmem:[%s452 + $0x10] sm:$0xff]
        %v530 = vld [vmem:[%s452 + $0x18] sm:$0xff]
        %v531 = vld [vmem:[%s452 + $0x20] sm:$0xff]
        %v532 = vld [vmem:[%s452 + $0x28] sm:$0xff]
        %v533 = vld [vmem:[%s452 + $0x30] sm:$0xff]
        %v534 = vld [vmem:[%s452 + $0x38] sm:$0xff]
        %v535 = vld [vmem:[#allocation6] sm:$0x1]
        %s536 = sld [smem:[#allocation2]]
        %vm537 = vcmask 15360
        %v538 = vsel %vm537, %v527, -inf
        %539 = vmax.xlane.f32.xlu0 %v538
        %v540 = vpop.xlane.xlu0 %539
        %v541 = vsel %vm537, %v528, -inf
        %542 = vmax.xlane.f32.xlu0 %v541
        %v543 = vpop.xlane.xlu0 %542
        %v544 = vsel %vm537, %v529, -inf
        %545 = vmax.xlane.f32.xlu0 %v544
        %v546 = vpop.xlane.xlu0 %545
        %v547 = vsel %vm537, %v530, -inf
        %548 = vmax.xlane.f32.xlu0 %v547
        %v549 = vpop.xlane.xlu0 %548
        %v550 = vsel %vm537, %v531, -inf
        %551 = vmax.xlane.f32.xlu0 %v550
        %v552 = vpop.xlane.xlu0 %551
        %v553 = vsel %vm537, %v532, -inf
        %554 = vmax.xlane.f32.xlu0 %v553
        %v555 = vpop.xlane.xlu0 %554
        %v556 = vsel %vm537, %v533, -inf
        %557 = vmax.xlane.f32.xlu0 %v556
        %v558 = vpop.xlane.xlu0 %557
        %v559 = vsel %vm537, %v534, -inf
        %560 = vmax.xlane.f32.xlu0 %v559
        %v561 = vpop.xlane.xlu0 %560
        %vm562 = vcmask 31760
        %v563 = vsel %vm562, %v527, -inf
        %564 = vmax.xlane.f32.xlu0 %v563
        %v565 = vpop.xlane.xlu0 %564
        %v566 = vsel %vm562, %v528, -inf
        %567 = vmax.xlane.f32.xlu0 %v566
        %v568 = vpop.xlane.xlu0 %567
        %v569 = vsel %vm562, %v529, -inf
        %570 = vmax.xlane.f32.xlu0 %v569
        %v571 = vpop.xlane.xlu0 %570
        %v572 = vsel %vm562, %v530, -inf
        %573 = vmax.xlane.f32.xlu0 %v572
        %v574 = vpop.xlane.xlu0 %573
        %v575 = vsel %vm562, %v531, -inf
        %576 = vmax.xlane.f32.xlu0 %v575
        %v577 = vpop.xlane.xlu0 %576
        %v578 = vsel %vm562, %v532, -inf
        %579 = vmax.xlane.f32.xlu0 %v578
        %v580 = vpop.xlane.xlu0 %579
        %v581 = vsel %vm562, %v533, -inf
        %582 = vmax.xlane.f32.xlu0 %v581
        %v583 = vpop.xlane.xlu0 %582
        %v584 = vsel %vm562, %v534, -inf
        %585 = vmax.xlane.f32.xlu0 %v584
        %v586 = vpop.xlane.xlu0 %585
        %vm587 = vcmask 48160
        %v588 = vsel %vm587, %v527, -inf
        %589 = vmax.xlane.f32.xlu0 %v588
        %v590 = vpop.xlane.xlu0 %589
        %v591 = vsel %vm587, %v528, -inf
        %592 = vmax.xlane.f32.xlu0 %v591
        %v593 = vpop.xlane.xlu0 %592
        %v594 = vsel %vm587, %v529, -inf
        %595 = vmax.xlane.f32.xlu0 %v594
        %v596 = vpop.xlane.xlu0 %595
        %v597 = vsel %vm587, %v530, -inf
        %598 = vmax.xlane.f32.xlu0 %v597
        %v599 = vpop.xlane.xlu0 %598
        %v600 = vsel %vm587, %v531, -inf
        %601 = vmax.xlane.f32.xlu0 %v600
        %v602 = vpop.xlane.xlu0 %601
        %v603 = vsel %vm587, %v532, -inf
        %604 = vmax.xlane.f32.xlu0 %v603
        %v605 = vpop.xlane.xlu0 %604
        %v606 = vsel %vm587, %v533, -inf
        %607 = vmax.xlane.f32.xlu0 %v606
        %v608 = vpop.xlane.xlu0 %607
        %v609 = vsel %vm587, %v534, -inf
        %610 = vmax.xlane.f32.xlu0 %v609
        %v611 = vpop.xlane.xlu0 %610
        %vm612 = vcmask 64560
        %v613 = vsel %vm612, %v527, -inf
        %614 = vmax.xlane.f32.xlu0 %v613
        %v615 = vpop.xlane.xlu0 %614
        %v616 = vsel %vm612, %v528, -inf
        %617 = vmax.xlane.f32.xlu0 %v616
        %v618 = vpop.xlane.xlu0 %617
        %v619 = vsel %vm612, %v529, -inf
        %620 = vmax.xlane.f32.xlu0 %v619
        %v621 = vpop.xlane.xlu0 %620
        %v622 = vsel %vm612, %v530, -inf
        %623 = vmax.xlane.f32.xlu0 %v622
        %v624 = vpop.xlane.xlu0 %623
        %v625 = vsel %vm612, %v531, -inf
        %626 = vmax.xlane.f32.xlu0 %v625
        %v627 = vpop.xlane.xlu0 %626
        %v628 = vsel %vm612, %v532, -inf
        %629 = vmax.xlane.f32.xlu0 %v628
        %v630 = vpop.xlane.xlu0 %629
        %v631 = vsel %vm612, %v533, -inf
        %632 = vmax.xlane.f32.xlu0 %v631
        %v633 = vpop.xlane.xlu0 %632
        %v634 = vsel %vm612, %v534, -inf
        %635 = vmax.xlane.f32.xlu0 %v634
        %v636 = vpop.xlane.xlu0 %635
        %vm637 = vcmask 80960
        %v638 = vsel %vm637, %v527, -inf
        %639 = vmax.xlane.f32.xlu0 %v638
        %v640 = vpop.xlane.xlu0 %639
        %v641 = vsel %vm637, %v528, -inf
        %642 = vmax.xlane.f32.xlu0 %v641
        %v643 = vpop.xlane.xlu0 %642
        %v644 = vsel %vm637, %v529, -inf
        %645 = vmax.xlane.f32.xlu0 %v644
        %v646 = vpop.xlane.xlu0 %645
        %v647 = vsel %vm637, %v530, -inf
        %648 = vmax.xlane.f32.xlu0 %v647
        %v649 = vpop.xlane.xlu0 %648
        %v650 = vsel %vm637, %v531, -inf
        %651 = vmax.xlane.f32.xlu0 %v650
        %v652 = vpop.xlane.xlu0 %651
        %v653 = vsel %vm637, %v532, -inf
        %654 = vmax.xlane.f32.xlu0 %v653
        %v655 = vpop.xlane.xlu0 %654
        %v656 = vsel %vm637, %v533, -inf
        %657 = vmax.xlane.f32.xlu0 %v656
        %v658 = vpop.xlane.xlu0 %657
        %v659 = vsel %vm637, %v534, -inf
        %660 = vmax.xlane.f32.xlu0 %v659
        %v661 = vpop.xlane.xlu0 %660
        %vm662 = vcmask 97360
        %v663 = vsel %vm662, %v527, -inf
        %664 = vmax.xlane.f32.xlu0 %v663
        %v665 = vpop.xlane.xlu0 %664
        %v666 = vsel %vm662, %v528, -inf
        %667 = vmax.xlane.f32.xlu0 %v666
        %v668 = vpop.xlane.xlu0 %667
        %v669 = vsel %vm662, %v529, -inf
        %670 = vmax.xlane.f32.xlu0 %v669
        %v671 = vpop.xlane.xlu0 %670
        %v672 = vsel %vm662, %v530, -inf
        %673 = vmax.xlane.f32.xlu0 %v672
        %v674 = vpop.xlane.xlu0 %673
        %v675 = vsel %vm662, %v531, -inf
        %676 = vmax.xlane.f32.xlu0 %v675
        %v677 = vpop.xlane.xlu0 %676
        %v678 = vsel %vm662, %v532, -inf
        %679 = vmax.xlane.f32.xlu0 %v678
        %v680 = vpop.xlane.xlu0 %679
        %v681 = vsel %vm662, %v533, -inf
        %682 = vmax.xlane.f32.xlu0 %v681
        %v683 = vpop.xlane.xlu0 %682
        %v684 = vsel %vm662, %v534, -inf
        %685 = vmax.xlane.f32.xlu0 %v684
        %v686 = vpop.xlane.xlu0 %685
        %vm687 = vcmask 113760
        %v688 = vsel %vm687, %v527, -inf
        %689 = vmax.xlane.f32.xlu0 %v688
        %v690 = vpop.xlane.xlu0 %689
        %v691 = vsel %vm687, %v528, -inf
        %692 = vmax.xlane.f32.xlu0 %v691
        %v693 = vpop.xlane.xlu0 %692
        %v694 = vsel %vm687, %v529, -inf
        %695 = vmax.xlane.f32.xlu0 %v694
        %v696 = vpop.xlane.xlu0 %695
        %v697 = vsel %vm687, %v530, -inf
        %698 = vmax.xlane.f32.xlu0 %v697
        %v699 = vpop.xlane.xlu0 %698
        %v700 = vsel %vm687, %v531, -inf
        %701 = vmax.xlane.f32.xlu0 %v700
        %v702 = vpop.xlane.xlu0 %701
        %v703 = vsel %vm687, %v532, -inf
        %704 = vmax.xlane.f32.xlu0 %v703
        %v705 = vpop.xlane.xlu0 %704
        %v706 = vsel %vm687, %v533, -inf
        %707 = vmax.xlane.f32.xlu0 %v706
        %v708 = vpop.xlane.xlu0 %707
        %v709 = vsel %vm687, %v534, -inf
        %710 = vmax.xlane.f32.xlu0 %v709
        %v711 = vpop.xlane.xlu0 %710
        %vm712 = vcmask 130160
        %v713 = vsel %vm712, %v527, -inf
        %714 = vmax.xlane.f32.xlu0 %v713
        %v715 = vpop.xlane.xlu0 %714
        %v716 = vsel %vm712, %v528, -inf
        %717 = vmax.xlane.f32.xlu0 %v716
        %v718 = vpop.xlane.xlu0 %717
        %v719 = vsel %vm712, %v529, -inf
        %720 = vmax.xlane.f32.xlu0 %v719
        %v721 = vpop.xlane.xlu0 %720
        %v722 = vsel %vm712, %v530, -inf
        %723 = vmax.xlane.f32.xlu0 %v722
        %v724 = vpop.xlane.xlu0 %723
        %v725 = vsel %vm712, %v531, -inf
        %726 = vmax.xlane.f32.xlu0 %v725
        %v727 = vpop.xlane.xlu0 %726
        %v728 = vsel %vm712, %v532, -inf
        %729 = vmax.xlane.f32.xlu0 %v728
        %v730 = vpop.xlane.xlu0 %729
        %v731 = vsel %vm712, %v533, -inf
        %732 = vmax.xlane.f32.xlu0 %v731
        %v733 = vpop.xlane.xlu0 %732
        %v734 = vsel %vm712, %v534, -inf
        %735 = vmax.xlane.f32.xlu0 %v734
        %v736 = vpop.xlane.xlu0 %735
        %vm737 = vcmask 7168
        %v738 = vsel %vm737, %v540, %v565
        %v739 = vsel %vm737, %v543, %v568
        %v740 = vsel %vm737, %v546, %v571
        %v741 = vsel %vm737, %v549, %v574
        %v742 = vsel %vm737, %v552, %v577
        %v743 = vsel %vm737, %v555, %v580
        %v744 = vsel %vm737, %v558, %v583
        %v745 = vsel %vm737, %v561, %v586
        %v746 = vsel %vm537, %v738, %v590
        %v747 = vsel %vm537, %v739, %v593
        %v748 = vsel %vm537, %v740, %v596
        %v749 = vsel %vm537, %v741, %v599
        %v750 = vsel %vm537, %v742, %v602
        %v751 = vsel %vm537, %v743, %v605
        %v752 = vsel %vm537, %v744, %v608
        %v753 = vsel %vm537, %v745, %v611
        %vm754 = vcmask 23552
        %v755 = vsel %vm754, %v746, %v615
        %v756 = vsel %vm754, %v747, %v618
        %v757 = vsel %vm754, %v748, %v621
        %v758 = vsel %vm754, %v749, %v624
        %v759 = vsel %vm754, %v750, %v627
        %v760 = vsel %vm754, %v751, %v630
        %v761 = vsel %vm754, %v752, %v633
        %v762 = vsel %vm754, %v753, %v636
        %vm763 = vcmask 31744
        %v764 = vsel %vm763, %v755, %v640
        %v765 = vsel %vm763, %v756, %v643
        %v766 = vsel %vm763, %v757, %v646
        %v767 = vsel %vm763, %v758, %v649
        %v768 = vsel %vm763, %v759, %v652
        %v769 = vsel %vm763, %v760, %v655
        %v770 = vsel %vm763, %v761, %v658
        %v771 = vsel %vm763, %v762, %v661
        %vm772 = vcmask 39936
        %v773 = vsel %vm772, %v764, %v665
        %v774 = vsel %vm772, %v765, %v668
        %v775 = vsel %vm772, %v766, %v671
        %v776 = vsel %vm772, %v767, %v674
        %v777 = vsel %vm772, %v768, %v677
        %v778 = vsel %vm772, %v769, %v680
        %v779 = vsel %vm772, %v770, %v683
        %v780 = vsel %vm772, %v771, %v686
        %vm781 = vcmask 48128
        %v782 = vsel %vm781, %v773, %v690
        %v783 = vsel %vm781, %v774, %v693
        %v784 = vsel %vm781, %v775, %v696
        %v785 = vsel %vm781, %v776, %v699
        %v786 = vsel %vm781, %v777, %v702
        %v787 = vsel %vm781, %v778, %v705
        %v788 = vsel %vm781, %v779, %v708
        %v789 = vsel %vm781, %v780, %v711
        %vm790 = vcmask 56320
        %v791 = vsel %vm790, %v782, %v715
        %v792 = vsel %vm790, %v783, %v718
        %v793 = vsel %vm790, %v784, %v721
        %v794 = vsel %vm790, %v785, %v724
        %v795 = vsel %vm790, %v786, %v727
        %v796 = vsel %vm790, %v787, %v730
        %v797 = vsel %vm790, %v788, %v733
        %v798 = vsel %vm790, %v789, %v736
        %vm799 = vcmask 58368
        %v800 = vsel %vm799, %v791, -inf
        %v801 = vrot.slane %v800, 4
        %v802 = vmax.f32 %v800, %v801
        %v803 = vrot.slane %v802, 2
        %v804 = vmax.f32 %v802, %v803
        %v805 = vrot.slane %v804, 1
        %v806 = vmax.f32 %v804, %v805
        %v807 = vsel %vm799, %v793, -inf
        %v808 = vrot.slane %v807, 4
        %v809 = vmax.f32 %v807, %v808
        %v810 = vrot.slane %v809, 2
        %v811 = vmax.f32 %v809, %v810
        %v812 = vrot.slane %v811, 1
        %v813 = vmax.f32 %v811, %v812
        %v814 = vsel %vm799, %v795, -inf
        %v815 = vrot.slane %v814, 4
        %v816 = vmax.f32 %v814, %v815
        %v817 = vrot.slane %v816, 2
        %v818 = vmax.f32 %v816, %v817
        %v819 = vrot.slane %v818, 1
        %v820 = vmax.f32 %v818, %v819
        %v821 = vsel %vm799, %v797, -inf
        %v822 = vrot.slane %v821, 4
        %v823 = vmax.f32 %v821, %v822
        %v824 = vrot.slane %v823, 2
        %v825 = vmax.f32 %v823, %v824
        %v826 = vrot.slane %v825, 1
        %v827 = vmax.f32 %v825, %v826
        %vm832 = vcmask 1041409
        %v833 = vsel %vm832, %v813, %v806
        %vm834 = vcmask 1042434
        %v835 = vsel %vm834, %v820, %v833
        %vm836 = vcmask 1043459
        %v837 = vsel %vm836, %v827, %v835
        %v839 = vsel %vm763, %v535, 0
        %vm841 = vcmask 1043456
        %v842 = vsel %vm841, %v837, 0
        %844 = vmatprep.subr.mxu0 0.0
        %845 = vmatpush1.msra.mxu0 %v842
        %846 = vmatprep.subr.mxu0 0.0
        %847 = vmatpush1.msra.mxu0 0.0
        %848 = vmatprep.subr.mxu0 0.0
        %849 = vmatpush1.msra.mxu0 0.0
        %850 = vmatprep.subr.mxu0 0.0
        %851 = vmatpush1.msra.mxu0 0.0
        %852 = vmatprep.subr.mxu0 0.0
        %853 = vmatpush1.msra.mxu0 0.0
        %854 = vmatprep.subr.mxu0 0.0
        %855 = vmatpush1.msra.mxu0 0.0
        %856 = vmatprep.subr.mxu0 0.0
        %857 = vmatpush1.msra.mxu0 0.0
        %858 = vmatprep.subr.mxu0 0.0
        %859 = vmatpush1.msra.mxu0 0.0
        %860 = vmatprep.subr.mxu0 0.0
        %861 = vmatpush1.msra.mxu0 0.0
        %862 = vmatprep.subr.mxu0 0.0
        %863 = vmatpush1.msra.mxu0 0.0
        %864 = vmatprep.subr.mxu0 0.0
        %865 = vmatpush1.msra.mxu0 0.0
        %866 = vmatprep.subr.mxu0 0.0
        %867 = vmatpush1.msra.mxu0 0.0
        %868 = vmatprep.subr.mxu0 0.0
        %869 = vmatpush1.msra.mxu0 0.0
        %870 = vmatprep.subr.mxu0 0.0
        %871 = vmatpush1.msra.mxu0 0.0
        %872 = vmatprep.subr.mxu0 0.0
        %873 = vmatpush1.msra.mxu0 0.0
        %874 = vmatprep.subr.mxu0 0.0
        %875 = vmatpush1.msra.mxu0 0.0
        %876 = vmatprep.subr.mxu0 0.0
        %877 = vmatpush1.msra.mxu0 0.0
        %878 = vmatprep.subr.mxu0 0.0
        %879 = vmatpush1.msra.mxu0 0.0
        %880 = vmatprep.subr.mxu0 0.0
        %881 = vmatpush1.msra.mxu0 0.0
        %882 = vmatprep.subr.mxu0 0.0
        %883 = vmatpush1.msra.mxu0 0.0
        %884 = vmatprep.subr.mxu0 0.0
        %885 = vmatpush1.msra.mxu0 0.0
        %886 = vmatprep.subr.mxu0 0.0
        %887 = vmatpush1.msra.mxu0 0.0
        %888 = vmatprep.subr.mxu0 0.0
        %889 = vmatpush1.msra.mxu0 0.0
        %890 = vmatprep.subr.mxu0 0.0
        %891 = vmatpush1.msra.mxu0 0.0
        %892 = vmatprep.subr.mxu0 0.0
        %893 = vmatpush1.msra.mxu0 0.0
        %894 = vmatprep.subr.mxu0 0.0
        %895 = vmatpush1.msra.mxu0 0.0
        %896 = vmatprep.subr.mxu0 0.0
        %897 = vmatpush1.msra.mxu0 0.0
        %898 = vmatprep.subr.mxu0 0.0
        %899 = vmatpush1.msra.mxu0 0.0
        %900 = vmatprep.subr.mxu0 0.0
        %901 = vmatpush1.msra.mxu0 0.0
        %902 = vmatprep.subr.mxu0 0.0
        %903 = vmatpush1.msra.mxu0 0.0
        %904 = vmatprep.subr.mxu0 0.0
        %905 = vmatpush1.msra.mxu0 0.0
        %906 = vmatprep.subr.mxu0 0.0
        %907 = vmatpush1.msra.mxu0 0.0
        %908 = vmatprep.mubr.f32.mxu0 0.0
        %909 = vmatmul.mubr.f32.gmra.mrb[0].mxu0 %v839
        %v910 = vpop.f32.mrb[0].mxu0
        %v911 = vadd.f32 0.0, %v910
        %v912 = vpop.f32.mrb[0].mxu0
        %913 = vdwg.mxu0
        %vm914 = vcmask 60418
        %v915 = vsel %vm914, %v791, -inf
        %v916 = vrot.slane %v915, 4
        %v917 = vmax.f32 %v915, %v916
        %v918 = vrot.slane %v917, 2
        %v919 = vmax.f32 %v917, %v918
        %v920 = vrot.slane %v919, 1
        %v921 = vmax.f32 %v919, %v920
        %v922 = vsel %vm914, %v793, -inf
        %v923 = vrot.slane %v922, 4
        %v924 = vmax.f32 %v922, %v923
        %v925 = vrot.slane %v924, 2
        %v926 = vmax.f32 %v924, %v925
        %v927 = vrot.slane %v926, 1
        %v928 = vmax.f32 %v926, %v927
        %v929 = vsel %vm914, %v795, -inf
        %v930 = vrot.slane %v929, 4
        %v931 = vmax.f32 %v929, %v930
        %v932 = vrot.slane %v931, 2
        %v933 = vmax.f32 %v931, %v932
        %v934 = vrot.slane %v933, 1
        %v935 = vmax.f32 %v933, %v934
        %v936 = vsel %vm914, %v797, -inf
        %v937 = vrot.slane %v936, 4
        %v938 = vmax.f32 %v936, %v937
        %v939 = vrot.slane %v938, 2
        %v940 = vmax.f32 %v938, %v939
        %v941 = vrot.slane %v940, 1
        %v942 = vmax.f32 %v940, %v941
        %v947 = vsel %vm832, %v928, %v921
        %v948 = vsel %vm834, %v935, %v947
        %v949 = vsel %vm836, %v942, %v948
        %v950 = vsel %vm841, %v949, 0
        %952 = vmatprep.subr.mxu0 0.0
        %953 = vmatpush1.msra.mxu0 %v950
        %954 = vmatprep.subr.mxu0 0.0
        %955 = vmatpush1.msra.mxu0 0.0
        %956 = vmatprep.subr.mxu0 0.0
        %957 = vmatpush1.msra.mxu0 0.0
        %958 = vmatprep.subr.mxu0 0.0
        %959 = vmatpush1.msra.mxu0 0.0
        %960 = vmatprep.subr.mxu0 0.0
        %961 = vmatpush1.msra.mxu0 0.0
        %962 = vmatprep.subr.mxu0 0.0
        %963 = vmatpush1.msra.mxu0 0.0
        %964 = vmatprep.subr.mxu0 0.0
        %965 = vmatpush1.msra.mxu0 0.0
        %966 = vmatprep.subr.mxu0 0.0
        %967 = vmatpush1.msra.mxu0 0.0
        %968 = vmatprep.subr.mxu0 0.0
        %969 = vmatpush1.msra.mxu0 0.0
        %970 = vmatprep.subr.mxu0 0.0
        %971 = vmatpush1.msra.mxu0 0.0
        %972 = vmatprep.subr.mxu0 0.0
        %973 = vmatpush1.msra.mxu0 0.0
        %974 = vmatprep.subr.mxu0 0.0
        %975 = vmatpush1.msra.mxu0 0.0
        %976 = vmatprep.subr.mxu0 0.0
        %977 = vmatpush1.msra.mxu0 0.0
        %978 = vmatprep.subr.mxu0 0.0
        %979 = vmatpush1.msra.mxu0 0.0
        %980 = vmatprep.subr.mxu0 0.0
        %981 = vmatpush1.msra.mxu0 0.0
        %982 = vmatprep.subr.mxu0 0.0
        %983 = vmatpush1.msra.mxu0 0.0
        %984 = vmatprep.subr.mxu0 0.0
        %985 = vmatpush1.msra.mxu0 0.0
        %986 = vmatprep.subr.mxu0 0.0
        %987 = vmatpush1.msra.mxu0 0.0
        %988 = vmatprep.subr.mxu0 0.0
        %989 = vmatpush1.msra.mxu0 0.0
        %990 = vmatprep.subr.mxu0 0.0
        %991 = vmatpush1.msra.mxu0 0.0
        %992 = vmatprep.subr.mxu0 0.0
        %993 = vmatpush1.msra.mxu0 0.0
        %994 = vmatprep.subr.mxu0 0.0
        %995 = vmatpush1.msra.mxu0 0.0
        %996 = vmatprep.subr.mxu0 0.0
        %997 = vmatpush1.msra.mxu0 0.0
        %998 = vmatprep.subr.mxu0 0.0
        %999 = vmatpush1.msra.mxu0 0.0
        %1000 = vmatprep.subr.mxu0 0.0
        %1001 = vmatpush1.msra.mxu0 0.0
        %1002 = vmatprep.subr.mxu0 0.0
        %1003 = vmatpush1.msra.mxu0 0.0
        %1004 = vmatprep.subr.mxu0 0.0
        %1005 = vmatpush1.msra.mxu0 0.0
        %1006 = vmatprep.subr.mxu0 0.0
        %1007 = vmatpush1.msra.mxu0 0.0
        %1008 = vmatprep.subr.mxu0 0.0
        %1009 = vmatpush1.msra.mxu0 0.0
        %1010 = vmatprep.subr.mxu0 0.0
        %1011 = vmatpush1.msra.mxu0 0.0
        %1012 = vmatprep.subr.mxu0 0.0
        %1013 = vmatpush1.msra.mxu0 0.0
        %1014 = vmatprep.subr.mxu0 0.0
        %1015 = vmatpush1.msra.mxu0 0.0
        %1016 = vmatprep.mubr.f32.mxu0 0.0
        %1017 = vmatmul.mubr.f32.gmra.mrb[0].mxu0 %v839
        %v1018 = vpop.f32.mrb[0].mxu0
        %v1019 = vadd.f32 0.0, %v1018
        %v1020 = vpop.f32.mrb[0].mxu0
        %1021 = vdwg.mxu0
        %vm1022 = vcmask 62468
        %v1023 = vsel %vm1022, %v791, -inf
        %v1024 = vrot.slane %v1023, 4
        %v1025 = vmax.f32 %v1023, %v1024
        %v1026 = vrot.slane %v1025, 2
        %v1027 = vmax.f32 %v1025, %v1026
        %v1028 = vrot.slane %v1027, 1
        %v1029 = vmax.f32 %v1027, %v1028
        %v1030 = vsel %vm1022, %v793, -inf
        %v1031 = vrot.slane %v1030, 4
        %v1032 = vmax.f32 %v1030, %v1031
        %v1033 = vrot.slane %v1032, 2
        %v1034 = vmax.f32 %v1032, %v1033
        %v1035 = vrot.slane %v1034, 1
        %v1036 = vmax.f32 %v1034, %v1035
        %v1037 = vsel %vm1022, %v795, -inf
        %v1038 = vrot.slane %v1037, 4
        %v1039 = vmax.f32 %v1037, %v1038
        %v1040 = vrot.slane %v1039, 2
        %v1041 = vmax.f32 %v1039, %v1040
        %v1042 = vrot.slane %v1041, 1
        %v1043 = vmax.f32 %v1041, %v1042
        %v1044 = vsel %vm1022, %v797, -inf
        %v1045 = vrot.slane %v1044, 4
        %v1046 = vmax.f32 %v1044, %v1045
        %v1047 = vrot.slane %v1046, 2
        %v1048 = vmax.f32 %v1046, %v1047
        %v1049 = vrot.slane %v1048, 1
        %v1050 = vmax.f32 %v1048, %v1049
        %v1055 = vsel %vm832, %v1036, %v1029
        %v1056 = vsel %vm834, %v1043, %v1055
        %v1057 = vsel %vm836, %v1050, %v1056
        %v1058 = vsel %vm841, %v1057, 0
        %1060 = vmatprep.subr.mxu0 0.0
        %1061 = vmatpush1.msra.mxu0 %v1058
        %1062 = vmatprep.subr.mxu0 0.0
        %1063 = vmatpush1.msra.mxu0 0.0
        %1064 = vmatprep.subr.mxu0 0.0
        %1065 = vmatpush1.msra.mxu0 0.0
        %1066 = vmatprep.subr.mxu0 0.0
        %1067 = vmatpush1.msra.mxu0 0.0
        %1068 = vmatprep.subr.mxu0 0.0
        %1069 = vmatpush1.msra.mxu0 0.0
        %1070 = vmatprep.subr.mxu0 0.0
        %1071 = vmatpush1.msra.mxu0 0.0
        %1072 = vmatprep.subr.mxu0 0.0
        %1073 = vmatpush1.msra.mxu0 0.0
        %1074 = vmatprep.subr.mxu0 0.0
        %1075 = vmatpush1.msra.mxu0 0.0
        %1076 = vmatprep.subr.mxu0 0.0
        %1077 = vmatpush1.msra.mxu0 0.0
        %1078 = vmatprep.subr.mxu0 0.0
        %1079 = vmatpush1.msra.mxu0 0.0
        %1080 = vmatprep.subr.mxu0 0.0
        %1081 = vmatpush1.msra.mxu0 0.0
        %1082 = vmatprep.subr.mxu0 0.0
        %1083 = vmatpush1.msra.mxu0 0.0
        %1084 = vmatprep.subr.mxu0 0.0
        %1085 = vmatpush1.msra.mxu0 0.0
        %1086 = vmatprep.subr.mxu0 0.0
        %1087 = vmatpush1.msra.mxu0 0.0
        %1088 = vmatprep.subr.mxu0 0.0
        %1089 = vmatpush1.msra.mxu0 0.0
        %1090 = vmatprep.subr.mxu0 0.0
        %1091 = vmatpush1.msra.mxu0 0.0
        %1092 = vmatprep.subr.mxu0 0.0
        %1093 = vmatpush1.msra.mxu0 0.0
        %1094 = vmatprep.subr.mxu0 0.0
        %1095 = vmatpush1.msra.mxu0 0.0
        %1096 = vmatprep.subr.mxu0 0.0
        %1097 = vmatpush1.msra.mxu0 0.0
        %1098 = vmatprep.subr.mxu0 0.0
        %1099 = vmatpush1.msra.mxu0 0.0
        %1100 = vmatprep.subr.mxu0 0.0
        %1101 = vmatpush1.msra.mxu0 0.0
        %1102 = vmatprep.subr.mxu0 0.0
        %1103 = vmatpush1.msra.mxu0 0.0
        %1104 = vmatprep.subr.mxu0 0.0
        %1105 = vmatpush1.msra.mxu0 0.0
        %1106 = vmatprep.subr.mxu0 0.0
        %1107 = vmatpush1.msra.mxu0 0.0
        %1108 = vmatprep.subr.mxu0 0.0
        %1109 = vmatpush1.msra.mxu0 0.0
        %1110 = vmatprep.subr.mxu0 0.0
        %1111 = vmatpush1.msra.mxu0 0.0
        %1112 = vmatprep.subr.mxu0 0.0
        %1113 = vmatpush1.msra.mxu0 0.0
        %1114 = vmatprep.subr.mxu0 0.0
        %1115 = vmatpush1.msra.mxu0 0.0
        %1116 = vmatprep.subr.mxu0 0.0
        %1117 = vmatpush1.msra.mxu0 0.0
        %1118 = vmatprep.subr.mxu0 0.0
        %1119 = vmatpush1.msra.mxu0 0.0
        %1120 = vmatprep.subr.mxu0 0.0
        %1121 = vmatpush1.msra.mxu0 0.0
        %1122 = vmatprep.subr.mxu0 0.0
        %1123 = vmatpush1.msra.mxu0 0.0
        %1124 = vmatprep.mubr.f32.mxu0 0.0
        %1125 = vmatmul.mubr.f32.gmra.mrb[0].mxu0 %v839
        %v1126 = vpop.f32.mrb[0].mxu0
        %v1127 = vadd.f32 0.0, %v1126
        %v1128 = vpop.f32.mrb[0].mxu0
        %1129 = vdwg.mxu0
        %vm1130 = vcmask 64518
        %v1131 = vsel %vm1130, %v791, -inf
        %v1132 = vrot.slane %v1131, 4
        %v1133 = vmax.f32 %v1131, %v1132
        %v1134 = vrot.slane %v1133, 2
        %v1135 = vmax.f32 %v1133, %v1134
        %v1136 = vrot.slane %v1135, 1
        %v1137 = vmax.f32 %v1135, %v1136
        %v1138 = vsel %vm1130, %v793, -inf
        %v1139 = vrot.slane %v1138, 4
        %v1140 = vmax.f32 %v1138, %v1139
        %v1141 = vrot.slane %v1140, 2
        %v1142 = vmax.f32 %v1140, %v1141
        %v1143 = vrot.slane %v1142, 1
        %v1144 = vmax.f32 %v1142, %v1143
        %v1145 = vsel %vm1130, %v795, -inf
        %v1146 = vrot.slane %v1145, 4
        %v1147 = vmax.f32 %v1145, %v1146
        %v1148 = vrot.slane %v1147, 2
        %v1149 = vmax.f32 %v1147, %v1148
        %v1150 = vrot.slane %v1149, 1
        %v1151 = vmax.f32 %v1149, %v1150
        %v1152 = vsel %vm1130, %v797, -inf
        %v1153 = vrot.slane %v1152, 4
        %v1154 = vmax.f32 %v1152, %v1153
        %v1155 = vrot.slane %v1154, 2
        %v1156 = vmax.f32 %v1154, %v1155
        %v1157 = vrot.slane %v1156, 1
        %v1158 = vmax.f32 %v1156, %v1157
        %v1163 = vsel %vm832, %v1144, %v1137
        %v1164 = vsel %vm834, %v1151, %v1163
        %v1165 = vsel %vm836, %v1158, %v1164
        %v1166 = vsel %vm841, %v1165, 0
        %1168 = vmatprep.subr.mxu0 0.0
        %1169 = vmatpush1.msra.mxu0 %v1166
        %1170 = vmatprep.subr.mxu0 0.0
        %1171 = vmatpush1.msra.mxu0 0.0
        %1172 = vmatprep.subr.mxu0 0.0
        %1173 = vmatpush1.msra.mxu0 0.0
        %1174 = vmatprep.subr.mxu0 0.0
        %1175 = vmatpush1.msra.mxu0 0.0
        %1176 = vmatprep.subr.mxu0 0.0
        %1177 = vmatpush1.msra.mxu0 0.0
        %1178 = vmatprep.subr.mxu0 0.0
        %1179 = vmatpush1.msra.mxu0 0.0
        %1180 = vmatprep.subr.mxu0 0.0
        %1181 = vmatpush1.msra.mxu0 0.0
        %1182 = vmatprep.subr.mxu0 0.0
        %1183 = vmatpush1.msra.mxu0 0.0
        %1184 = vmatprep.subr.mxu0 0.0
        %1185 = vmatpush1.msra.mxu0 0.0
        %1186 = vmatprep.subr.mxu0 0.0
        %1187 = vmatpush1.msra.mxu0 0.0
        %1188 = vmatprep.subr.mxu0 0.0
        %1189 = vmatpush1.msra.mxu0 0.0
        %1190 = vmatprep.subr.mxu0 0.0
        %1191 = vmatpush1.msra.mxu0 0.0
        %1192 = vmatprep.subr.mxu0 0.0
        %1193 = vmatpush1.msra.mxu0 0.0
        %1194 = vmatprep.subr.mxu0 0.0
        %1195 = vmatpush1.msra.mxu0 0.0
        %1196 = vmatprep.subr.mxu0 0.0
        %1197 = vmatpush1.msra.mxu0 0.0
        %1198 = vmatprep.subr.mxu0 0.0
        %1199 = vmatpush1.msra.mxu0 0.0
        %1200 = vmatprep.subr.mxu0 0.0
        %1201 = vmatpush1.msra.mxu0 0.0
        %1202 = vmatprep.subr.mxu0 0.0
        %1203 = vmatpush1.msra.mxu0 0.0
        %1204 = vmatprep.subr.mxu0 0.0
        %1205 = vmatpush1.msra.mxu0 0.0
        %1206 = vmatprep.subr.mxu0 0.0
        %1207 = vmatpush1.msra.mxu0 0.0
        %1208 = vmatprep.subr.mxu0 0.0
        %1209 = vmatpush1.msra.mxu0 0.0
        %1210 = vmatprep.subr.mxu0 0.0
        %1211 = vmatpush1.msra.mxu0 0.0
        %1212 = vmatprep.subr.mxu0 0.0
        %1213 = vmatpush1.msra.mxu0 0.0
        %1214 = vmatprep.subr.mxu0 0.0
        %1215 = vmatpush1.msra.mxu0 0.0
        %1216 = vmatprep.subr.mxu0 0.0
        %1217 = vmatpush1.msra.mxu0 0.0
        %1218 = vmatprep.subr.mxu0 0.0
        %1219 = vmatpush1.msra.mxu0 0.0
        %1220 = vmatprep.subr.mxu0 0.0
        %1221 = vmatpush1.msra.mxu0 0.0
        %1222 = vmatprep.subr.mxu0 0.0
        %1223 = vmatpush1.msra.mxu0 0.0
        %1224 = vmatprep.subr.mxu0 0.0
        %1225 = vmatpush1.msra.mxu0 0.0
        %1226 = vmatprep.subr.mxu0 0.0
        %1227 = vmatpush1.msra.mxu0 0.0
        %1228 = vmatprep.subr.mxu0 0.0
        %1229 = vmatpush1.msra.mxu0 0.0
        %1230 = vmatprep.subr.mxu0 0.0
        %1231 = vmatpush1.msra.mxu0 0.0
        %1232 = vmatprep.mubr.f32.mxu0 0.0
        %1233 = vmatmul.mubr.f32.gmra.mrb[0].mxu0 %v839
        %v1234 = vpop.f32.mrb[0].mxu0
        %v1235 = vadd.f32 0.0, %v1234
        %v1236 = vpop.f32.mrb[0].mxu0
        %1237 = vdwg.mxu0
        %v1238 = vsel %vm799, %v792, -inf
        %v1239 = vrot.slane %v1238, 4
        %v1240 = vmax.f32 %v1238, %v1239
        %v1241 = vrot.slane %v1240, 2
        %v1242 = vmax.f32 %v1240, %v1241
        %v1243 = vrot.slane %v1242, 1
        %v1244 = vmax.f32 %v1242, %v1243
        %v1245 = vsel %vm799, %v794, -inf
        %v1246 = vrot.slane %v1245, 4
        %v1247 = vmax.f32 %v1245, %v1246
        %v1248 = vrot.slane %v1247, 2
        %v1249 = vmax.f32 %v1247, %v1248
        %v1250 = vrot.slane %v1249, 1
        %v1251 = vmax.f32 %v1249, %v1250
        %v1252 = vsel %vm799, %v796, -inf
        %v1253 = vrot.slane %v1252, 4
        %v1254 = vmax.f32 %v1252, %v1253
        %v1255 = vrot.slane %v1254, 2
        %v1256 = vmax.f32 %v1254, %v1255
        %v1257 = vrot.slane %v1256, 1
        %v1258 = vmax.f32 %v1256, %v1257
        %v1259 = vsel %vm799, %v798, -inf
        %v1260 = vrot.slane %v1259, 4
        %v1261 = vmax.f32 %v1259, %v1260
        %v1262 = vrot.slane %v1261, 2
        %v1263 = vmax.f32 %v1261, %v1262
        %v1264 = vrot.slane %v1263, 1
        %v1265 = vmax.f32 %v1263, %v1264
        %v1270 = vsel %vm832, %v1251, %v1244
        %v1271 = vsel %vm834, %v1258, %v1270
        %v1272 = vsel %vm836, %v1265, %v1271
        %v1273 = vsel %vm841, %v1272, 0
        %1275 = vmatprep.subr.mxu0 0.0
        %1276 = vmatpush1.msra.mxu0 %v1273
        %1277 = vmatprep.subr.mxu0 0.0
        %1278 = vmatpush1.msra.mxu0 0.0
        %1279 = vmatprep.subr.mxu0 0.0
        %1280 = vmatpush1.msra.mxu0 0.0
        %1281 = vmatprep.subr.mxu0 0.0
        %1282 = vmatpush1.msra.mxu0 0.0
        %1283 = vmatprep.subr.mxu0 0.0
        %1284 = vmatpush1.msra.mxu0 0.0
        %1285 = vmatprep.subr.mxu0 0.0
        %1286 = vmatpush1.msra.mxu0 0.0
        %1287 = vmatprep.subr.mxu0 0.0
        %1288 = vmatpush1.msra.mxu0 0.0
        %1289 = vmatprep.subr.mxu0 0.0
        %1290 = vmatpush1.msra.mxu0 0.0
        %1291 = vmatprep.subr.mxu0 0.0
        %1292 = vmatpush1.msra.mxu0 0.0
        %1293 = vmatprep.subr.mxu0 0.0
        %1294 = vmatpush1.msra.mxu0 0.0
        %1295 = vmatprep.subr.mxu0 0.0
        %1296 = vmatpush1.msra.mxu0 0.0
        %1297 = vmatprep.subr.mxu0 0.0
        %1298 = vmatpush1.msra.mxu0 0.0
        %1299 = vmatprep.subr.mxu0 0.0
        %1300 = vmatpush1.msra.mxu0 0.0
        %1301 = vmatprep.subr.mxu0 0.0
        %1302 = vmatpush1.msra.mxu0 0.0
        %1303 = vmatprep.subr.mxu0 0.0
        %1304 = vmatpush1.msra.mxu0 0.0
        %1305 = vmatprep.subr.mxu0 0.0
        %1306 = vmatpush1.msra.mxu0 0.0
        %1307 = vmatprep.subr.mxu0 0.0
        %1308 = vmatpush1.msra.mxu0 0.0
        %1309 = vmatprep.subr.mxu0 0.0
        %1310 = vmatpush1.msra.mxu0 0.0
        %1311 = vmatprep.subr.mxu0 0.0
        %1312 = vmatpush1.msra.mxu0 0.0
        %1313 = vmatprep.subr.mxu0 0.0
        %1314 = vmatpush1.msra.mxu0 0.0
        %1315 = vmatprep.subr.mxu0 0.0
        %1316 = vmatpush1.msra.mxu0 0.0
        %1317 = vmatprep.subr.mxu0 0.0
        %1318 = vmatpush1.msra.mxu0 0.0
        %1319 = vmatprep.subr.mxu0 0.0
        %1320 = vmatpush1.msra.mxu0 0.0
        %1321 = vmatprep.subr.mxu0 0.0
        %1322 = vmatpush1.msra.mxu0 0.0
        %1323 = vmatprep.subr.mxu0 0.0
        %1324 = vmatpush1.msra.mxu0 0.0
        %1325 = vmatprep.subr.mxu0 0.0
        %1326 = vmatpush1.msra.mxu0 0.0
        %1327 = vmatprep.subr.mxu0 0.0
        %1328 = vmatpush1.msra.mxu0 0.0
        %1329 = vmatprep.subr.mxu0 0.0
        %1330 = vmatpush1.msra.mxu0 0.0
        %1331 = vmatprep.subr.mxu0 0.0
        %1332 = vmatpush1.msra.mxu0 0.0
        %1333 = vmatprep.subr.mxu0 0.0
        %1334 = vmatpush1.msra.mxu0 0.0
        %1335 = vmatprep.subr.mxu0 0.0
        %1336 = vmatpush1.msra.mxu0 0.0
        %1337 = vmatprep.subr.mxu0 0.0
        %1338 = vmatpush1.msra.mxu0 0.0
        %1339 = vmatprep.mubr.f32.mxu0 0.0
        %1340 = vmatmul.mubr.f32.gmra.mrb[0].mxu0 %v839
        %v1341 = vpop.f32.mrb[0].mxu0
        %v1342 = vadd.f32 0.0, %v1341
        %v1343 = vpop.f32.mrb[0].mxu0
        %1344 = vdwg.mxu0
        %v1345 = vsel %vm914, %v792, -inf
        %v1346 = vrot.slane %v1345, 4
        %v1347 = vmax.f32 %v1345, %v1346
        %v1348 = vrot.slane %v1347, 2
        %v1349 = vmax.f32 %v1347, %v1348
        %v1350 = vrot.slane %v1349, 1
        %v1351 = vmax.f32 %v1349, %v1350
        %v1352 = vsel %vm914, %v794, -inf
        %v1353 = vrot.slane %v1352, 4
        %v1354 = vmax.f32 %v1352, %v1353
        %v1355 = vrot.slane %v1354, 2
        %v1356 = vmax.f32 %v1354, %v1355
        %v1357 = vrot.slane %v1356, 1
        %v1358 = vmax.f32 %v1356, %v1357
        %v1359 = vsel %vm914, %v796, -inf
        %v1360 = vrot.slane %v1359, 4
        %v1361 = vmax.f32 %v1359, %v1360
        %v1362 = vrot.slane %v1361, 2
        %v1363 = vmax.f32 %v1361, %v1362
        %v1364 = vrot.slane %v1363, 1
        %v1365 = vmax.f32 %v1363, %v1364
        %v1366 = vsel %vm914, %v798, -inf
        %v1367 = vrot.slane %v1366, 4
        %v1368 = vmax.f32 %v1366, %v1367
        %v1369 = vrot.slane %v1368, 2
        %v1370 = vmax.f32 %v1368, %v1369
        %v1371 = vrot.slane %v1370, 1
        %v1372 = vmax.f32 %v1370, %v1371
        %v1377 = vsel %vm832, %v1358, %v1351
        %v1378 = vsel %vm834, %v1365, %v1377
        %v1379 = vsel %vm836, %v1372, %v1378
        %v1380 = vsel %vm841, %v1379, 0
        %1382 = vmatprep.subr.mxu0 0.0
        %1383 = vmatpush1.msra.mxu0 %v1380
        %1384 = vmatprep.subr.mxu0 0.0
        %1385 = vmatpush1.msra.mxu0 0.0
        %1386 = vmatprep.subr.mxu0 0.0
        %1387 = vmatpush1.msra.mxu0 0.0
        %1388 = vmatprep.subr.mxu0 0.0
        %1389 = vmatpush1.msra.mxu0 0.0
        %1390 = vmatprep.subr.mxu0 0.0
        %1391 = vmatpush1.msra.mxu0 0.0
        %1392 = vmatprep.subr.mxu0 0.0
        %1393 = vmatpush1.msra.mxu0 0.0
        %1394 = vmatprep.subr.mxu0 0.0
        %1395 = vmatpush1.msra.mxu0 0.0
        %1396 = vmatprep.subr.mxu0 0.0
        %1397 = vmatpush1.msra.mxu0 0.0
        %1398 = vmatprep.subr.mxu0 0.0
        %1399 = vmatpush1.msra.mxu0 0.0
        %1400 = vmatprep.subr.mxu0 0.0
        %1401 = vmatpush1.msra.mxu0 0.0
        %1402 = vmatprep.subr.mxu0 0.0
        %1403 = vmatpush1.msra.mxu0 0.0
        %1404 = vmatprep.subr.mxu0 0.0
        %1405 = vmatpush1.msra.mxu0 0.0
        %1406 = vmatprep.subr.mxu0 0.0
        %1407 = vmatpush1.msra.mxu0 0.0
        %1408 = vmatprep.subr.mxu0 0.0
        %1409 = vmatpush1.msra.mxu0 0.0
        %1410 = vmatprep.subr.mxu0 0.0
        %1411 = vmatpush1.msra.mxu0 0.0
        %1412 = vmatprep.subr.mxu0 0.0
        %1413 = vmatpush1.msra.mxu0 0.0
        %1414 = vmatprep.subr.mxu0 0.0
        %1415 = vmatpush1.msra.mxu0 0.0
        %1416 = vmatprep.subr.mxu0 0.0
        %1417 = vmatpush1.msra.mxu0 0.0
        %1418 = vmatprep.subr.mxu0 0.0
        %1419 = vmatpush1.msra.mxu0 0.0
        %1420 = vmatprep.subr.mxu0 0.0
        %1421 = vmatpush1.msra.mxu0 0.0
        %1422 = vmatprep.subr.mxu0 0.0
        %1423 = vmatpush1.msra.mxu0 0.0
        %1424 = vmatprep.subr.mxu0 0.0
        %1425 = vmatpush1.msra.mxu0 0.0
        %1426 = vmatprep.subr.mxu0 0.0
        %1427 = vmatpush1.msra.mxu0 0.0
        %1428 = vmatprep.subr.mxu0 0.0
        %1429 = vmatpush1.msra.mxu0 0.0
        %1430 = vmatprep.subr.mxu0 0.0
        %1431 = vmatpush1.msra.mxu0 0.0
        %1432 = vmatprep.subr.mxu0 0.0
        %1433 = vmatpush1.msra.mxu0 0.0
        %1434 = vmatprep.subr.mxu0 0.0
        %1435 = vmatpush1.msra.mxu0 0.0
        %1436 = vmatprep.subr.mxu0 0.0
        %1437 = vmatpush1.msra.mxu0 0.0
        %1438 = vmatprep.subr.mxu0 0.0
        %1439 = vmatpush1.msra.mxu0 0.0
        %1440 = vmatprep.subr.mxu0 0.0
        %1441 = vmatpush1.msra.mxu0 0.0
        %1442 = vmatprep.subr.mxu0 0.0
        %1443 = vmatpush1.msra.mxu0 0.0
        %1444 = vmatprep.subr.mxu0 0.0
        %1445 = vmatpush1.msra.mxu0 0.0
        %1446 = vmatprep.mubr.f32.mxu0 0.0
        %1447 = vmatmul.mubr.f32.gmra.mrb[0].mxu0 %v839
        %v1448 = vpop.f32.mrb[0].mxu0
        %v1449 = vadd.f32 0.0, %v1448
        %v1450 = vpop.f32.mrb[0].mxu0
        %1451 = vdwg.mxu0
        %v1452 = vsel %vm1022, %v792, -inf
        %v1453 = vrot.slane %v1452, 4
        %v1454 = vmax.f32 %v1452, %v1453
        %v1455 = vrot.slane %v1454, 2
        %v1456 = vmax.f32 %v1454, %v1455
        %v1457 = vrot.slane %v1456, 1
        %v1458 = vmax.f32 %v1456, %v1457
        %v1459 = vsel %vm1022, %v794, -inf
        %v1460 = vrot.slane %v1459, 4
        %v1461 = vmax.f32 %v1459, %v1460
        %v1462 = vrot.slane %v1461, 2
        %v1463 = vmax.f32 %v1461, %v1462
        %v1464 = vrot.slane %v1463, 1
        %v1465 = vmax.f32 %v1463, %v1464
        %v1466 = vsel %vm1022, %v796, -inf
        %v1467 = vrot.slane %v1466, 4
        %v1468 = vmax.f32 %v1466, %v1467
        %v1469 = vrot.slane %v1468, 2
        %v1470 = vmax.f32 %v1468, %v1469
        %v1471 = vrot.slane %v1470, 1
        %v1472 = vmax.f32 %v1470, %v1471
        %v1473 = vsel %vm1022, %v798, -inf
        %v1474 = vrot.slane %v1473, 4
        %v1475 = vmax.f32 %v1473, %v1474
        %v1476 = vrot.slane %v1475, 2
        %v1477 = vmax.f32 %v1475, %v1476
        %v1478 = vrot.slane %v1477, 1
        %v1479 = vmax.f32 %v1477, %v1478
        %v1484 = vsel %vm832, %v1465, %v1458
        %v1485 = vsel %vm834, %v1472, %v1484
        %v1486 = vsel %vm836, %v1479, %v1485
        %v1487 = vsel %vm841, %v1486, 0
        %1489 = vmatprep.subr.mxu0 0.0
        %1490 = vmatpush1.msra.mxu0 %v1487
        %1491 = vmatprep.subr.mxu0 0.0
        %1492 = vmatpush1.msra.mxu0 0.0
        %1493 = vmatprep.subr.mxu0 0.0
        %1494 = vmatpush1.msra.mxu0 0.0
        %1495 = vmatprep.subr.mxu0 0.0
        %1496 = vmatpush1.msra.mxu0 0.0
        %1497 = vmatprep.subr.mxu0 0.0
        %1498 = vmatpush1.msra.mxu0 0.0
        %1499 = vmatprep.subr.mxu0 0.0
        %1500 = vmatpush1.msra.mxu0 0.0
        %1501 = vmatprep.subr.mxu0 0.0
        %1502 = vmatpush1.msra.mxu0 0.0
        %1503 = vmatprep.subr.mxu0 0.0
        %1504 = vmatpush1.msra.mxu0 0.0
        %1505 = vmatprep.subr.mxu0 0.0
        %1506 = vmatpush1.msra.mxu0 0.0
        %1507 = vmatprep.subr.mxu0 0.0
        %1508 = vmatpush1.msra.mxu0 0.0
        %1509 = vmatprep.subr.mxu0 0.0
        %1510 = vmatpush1.msra.mxu0 0.0
        %1511 = vmatprep.subr.mxu0 0.0
        %1512 = vmatpush1.msra.mxu0 0.0
        %1513 = vmatprep.subr.mxu0 0.0
        %1514 = vmatpush1.msra.mxu0 0.0
        %1515 = vmatprep.subr.mxu0 0.0
        %1516 = vmatpush1.msra.mxu0 0.0
        %1517 = vmatprep.subr.mxu0 0.0
        %1518 = vmatpush1.msra.mxu0 0.0
        %1519 = vmatprep.subr.mxu0 0.0
        %1520 = vmatpush1.msra.mxu0 0.0
        %1521 = vmatprep.subr.mxu0 0.0
        %1522 = vmatpush1.msra.mxu0 0.0
        %1523 = vmatprep.subr.mxu0 0.0
        %1524 = vmatpush1.msra.mxu0 0.0
        %1525 = vmatprep.subr.mxu0 0.0
        %1526 = vmatpush1.msra.mxu0 0.0
        %1527 = vmatprep.subr.mxu0 0.0
        %1528 = vmatpush1.msra.mxu0 0.0
        %1529 = vmatprep.subr.mxu0 0.0
        %1530 = vmatpush1.msra.mxu0 0.0
        %1531 = vmatprep.subr.mxu0 0.0
        %1532 = vmatpush1.msra.mxu0 0.0
        %1533 = vmatprep.subr.mxu0 0.0
        %1534 = vmatpush1.msra.mxu0 0.0
        %1535 = vmatprep.subr.mxu0 0.0
        %1536 = vmatpush1.msra.mxu0 0.0
        %1537 = vmatprep.subr.mxu0 0.0
        %1538 = vmatpush1.msra.mxu0 0.0
        %1539 = vmatprep.subr.mxu0 0.0
        %1540 = vmatpush1.msra.mxu0 0.0
        %1541 = vmatprep.subr.mxu0 0.0
        %1542 = vmatpush1.msra.mxu0 0.0
        %1543 = vmatprep.subr.mxu0 0.0
        %1544 = vmatpush1.msra.mxu0 0.0
        %1545 = vmatprep.subr.mxu0 0.0
        %1546 = vmatpush1.msra.mxu0 0.0
        %1547 = vmatprep.subr.mxu0 0.0
        %1548 = vmatpush1.msra.mxu0 0.0
        %1549 = vmatprep.subr.mxu0 0.0
        %1550 = vmatpush1.msra.mxu0 0.0
        %1551 = vmatprep.subr.mxu0 0.0
        %1552 = vmatpush1.msra.mxu0 0.0
        %1553 = vmatprep.mubr.f32.mxu0 0.0
        %1554 = vmatmul.mubr.f32.gmra.mrb[0].mxu0 %v839
        %v1555 = vpop.f32.mrb[0].mxu0
        %v1556 = vadd.f32 0.0, %v1555
        %v1557 = vpop.f32.mrb[0].mxu0
        %1558 = vdwg.mxu0
        %v1559 = vsel %vm1130, %v792, -inf
        %v1560 = vrot.slane %v1559, 4
        %v1561 = vmax.f32 %v1559, %v1560
        %v1562 = vrot.slane %v1561, 2
        %v1563 = vmax.f32 %v1561, %v1562
        %v1564 = vrot.slane %v1563, 1
        %v1565 = vmax.f32 %v1563, %v1564
        %v1566 = vsel %vm1130, %v794, -inf
        %v1567 = vrot.slane %v1566, 4
        %v1568 = vmax.f32 %v1566, %v1567
        %v1569 = vrot.slane %v1568, 2
        %v1570 = vmax.f32 %v1568, %v1569
        %v1571 = vrot.slane %v1570, 1
        %v1572 = vmax.f32 %v1570, %v1571
        %v1573 = vsel %vm1130, %v796, -inf
        %v1574 = vrot.slane %v1573, 4
        %v1575 = vmax.f32 %v1573, %v1574
        %v1576 = vrot.slane %v1575, 2
        %v1577 = vmax.f32 %v1575, %v1576
        %v1578 = vrot.slane %v1577, 1
        %v1579 = vmax.f32 %v1577, %v1578
        %v1580 = vsel %vm1130, %v798, -inf
        %v1581 = vrot.slane %v1580, 4
        %v1582 = vmax.f32 %v1580, %v1581
        %v1583 = vrot.slane %v1582, 2
        %v1584 = vmax.f32 %v1582, %v1583
        %v1585 = vrot.slane %v1584, 1
        %v1586 = vmax.f32 %v1584, %v1585
        %v1591 = vsel %vm832, %v1572, %v1565
        %v1592 = vsel %vm834, %v1579, %v1591
        %v1593 = vsel %vm836, %v1586, %v1592
        %v1594 = vsel %vm841, %v1593, 0
        %1596 = vmatprep.subr.mxu0 0.0
        %1597 = vmatpush1.msra.mxu0 %v1594
        %1598 = vmatprep.subr.mxu0 0.0
        %1599 = vmatpush1.msra.mxu0 0.0
        %1600 = vmatprep.subr.mxu0 0.0
        %1601 = vmatpush1.msra.mxu0 0.0
        %1602 = vmatprep.subr.mxu0 0.0
        %1603 = vmatpush1.msra.mxu0 0.0
        %1604 = vmatprep.subr.mxu0 0.0
        %1605 = vmatpush1.msra.mxu0 0.0
        %1606 = vmatprep.subr.mxu0 0.0
        %1607 = vmatpush1.msra.mxu0 0.0
        %1608 = vmatprep.subr.mxu0 0.0
        %1609 = vmatpush1.msra.mxu0 0.0
        %1610 = vmatprep.subr.mxu0 0.0
        %1611 = vmatpush1.msra.mxu0 0.0
        %1612 = vmatprep.subr.mxu0 0.0
        %1613 = vmatpush1.msra.mxu0 0.0
        %1614 = vmatprep.subr.mxu0 0.0
        %1615 = vmatpush1.msra.mxu0 0.0
        %1616 = vmatprep.subr.mxu0 0.0
        %1617 = vmatpush1.msra.mxu0 0.0
        %1618 = vmatprep.subr.mxu0 0.0
        %1619 = vmatpush1.msra.mxu0 0.0
        %1620 = vmatprep.subr.mxu0 0.0
        %1621 = vmatpush1.msra.mxu0 0.0
        %1622 = vmatprep.subr.mxu0 0.0
        %1623 = vmatpush1.msra.mxu0 0.0
        %1624 = vmatprep.subr.mxu0 0.0
        %1625 = vmatpush1.msra.mxu0 0.0
        %1626 = vmatprep.subr.mxu0 0.0
        %1627 = vmatpush1.msra.mxu0 0.0
        %1628 = vmatprep.subr.mxu0 0.0
        %1629 = vmatpush1.msra.mxu0 0.0
        %1630 = vmatprep.subr.mxu0 0.0
        %1631 = vmatpush1.msra.mxu0 0.0
        %1632 = vmatprep.subr.mxu0 0.0
        %1633 = vmatpush1.msra.mxu0 0.0
        %1634 = vmatprep.subr.mxu0 0.0
        %1635 = vmatpush1.msra.mxu0 0.0
        %1636 = vmatprep.subr.mxu0 0.0
        %1637 = vmatpush1.msra.mxu0 0.0
        %1638 = vmatprep.subr.mxu0 0.0
        %1639 = vmatpush1.msra.mxu0 0.0
        %1640 = vmatprep.subr.mxu0 0.0
        %1641 = vmatpush1.msra.mxu0 0.0
        %1642 = vmatprep.subr.mxu0 0.0
        %1643 = vmatpush1.msra.mxu0 0.0
        %1644 = vmatprep.subr.mxu0 0.0
        %1645 = vmatpush1.msra.mxu0 0.0
        %1646 = vmatprep.subr.mxu0 0.0
        %1647 = vmatpush1.msra.mxu0 0.0
        %1648 = vmatprep.subr.mxu0 0.0
        %1649 = vmatpush1.msra.mxu0 0.0
        %1650 = vmatprep.subr.mxu0 0.0
        %1651 = vmatpush1.msra.mxu0 0.0
        %1652 = vmatprep.subr.mxu0 0.0
        %1653 = vmatpush1.msra.mxu0 0.0
        %1654 = vmatprep.subr.mxu0 0.0
        %1655 = vmatpush1.msra.mxu0 0.0
        %1656 = vmatprep.subr.mxu0 0.0
        %1657 = vmatpush1.msra.mxu0 0.0
        %1658 = vmatprep.subr.mxu0 0.0
        %1659 = vmatpush1.msra.mxu0 0.0
        %1660 = vmatprep.mubr.f32.mxu0 0.0
        %1661 = vmatmul.mubr.f32.gmra.mrb[0].mxu0 %v839
        %v1662 = vpop.f32.mrb[0].mxu0
        %v1663 = vadd.f32 0.0, %v1662
        %v1664 = vpop.f32.mrb[0].mxu0
        %1665 = vdwg.mxu0
        %v1667 = vrot.slane %v1019, 7
        %v1670 = vrot.slane %v1127, 6
        %v1673 = vrot.slane %v1235, 5
        %v1676 = vrot.slane %v1342, 4
        %v1679 = vrot.slane %v1449, 3
        %v1682 = vrot.slane %v1556, 2
        %v1685 = vrot.slane %v1663, 1
        %vm1687 = vcmask 1040384
        %v1688 = vsel %vm1687, %v911, %v1667
        %vm1689 = vcmask 1041408
        %v1690 = vsel %vm1689, %v1688, %v1670
        %vm1691 = vcmask 1042432
        %v1692 = vsel %vm1691, %v1690, %v1673
        %v1693 = vsel %vm841, %v1692, %v1676
        %vm1694 = vcmask 1044480
        %v1695 = vsel %vm1694, %v1693, %v1679
        %vm1696 = vcmask 1045504
        %v1697 = vsel %vm1696, %v1695, %v1682
        %vm1698 = vcmask 1046528
        %v1699 = vsel %vm1698, %v1697, %v1685
        %v1700 = vstv %s536
        %v1701 = vadd.f32 %v1699, %v1700
        %v1702 = vld [vmem:[#allocation8] sm:$0xff]
        %v1703 = vld [vmem:[#allocation8 + $0x8] sm:$0xff]
        %vm1704 = vcmask 64512
        %v1706 = vsel %vm1704, %v1702, 0
        %v1709 = vsel %vm1704, %v1703, 0
        %1711 = vmatprep.subr.mxu0 0.0
        %1712 = vmatpush1.msra.mxu0 %v1701
        %1713 = vmatprep.subr.mxu0 0.0
        %1714 = vmatpush1.msra.mxu0 0.0
        %1715 = vmatprep.subr.mxu0 0.0
        %1716 = vmatpush1.msra.mxu0 0.0
        %1717 = vmatprep.subr.mxu0 0.0
        %1718 = vmatpush1.msra.mxu0 0.0
        %1719 = vmatprep.subr.mxu0 0.0
        %1720 = vmatpush1.msra.mxu0 0.0
        %1721 = vmatprep.subr.mxu0 0.0
        %1722 = vmatpush1.msra.mxu0 0.0
        %1723 = vmatprep.subr.mxu0 0.0
        %1724 = vmatpush1.msra.mxu0 0.0
        %1725 = vmatprep.subr.mxu0 0.0
        %1726 = vmatpush1.msra.mxu0 0.0
        %1727 = vmatprep.subr.mxu0 0.0
        %1728 = vmatpush1.msra.mxu0 0.0
        %1729 = vmatprep.subr.mxu0 0.0
        %1730 = vmatpush1.msra.mxu0 0.0
        %1731 = vmatprep.subr.mxu0 0.0
        %1732 = vmatpush1.msra.mxu0 0.0
        %1733 = vmatprep.subr.mxu0 0.0
        %1734 = vmatpush1.msra.mxu0 0.0
        %1735 = vmatprep.subr.mxu0 0.0
        %1736 = vmatpush1.msra.mxu0 0.0
        %1737 = vmatprep.subr.mxu0 0.0
        %1738 = vmatpush1.msra.mxu0 0.0
        %1739 = vmatprep.subr.mxu0 0.0
        %1740 = vmatpush1.msra.mxu0 0.0
        %1741 = vmatprep.subr.mxu0 0.0
        %1742 = vmatpush1.msra.mxu0 0.0
        %1743 = vmatprep.subr.mxu0 0.0
        %1744 = vmatpush1.msra.mxu0 0.0
        %1745 = vmatprep.subr.mxu0 0.0
        %1746 = vmatpush1.msra.mxu0 0.0
        %1747 = vmatprep.subr.mxu0 0.0
        %1748 = vmatpush1.msra.mxu0 0.0
        %1749 = vmatprep.subr.mxu0 0.0
        %1750 = vmatpush1.msra.mxu0 0.0
        %1751 = vmatprep.subr.mxu0 0.0
        %1752 = vmatpush1.msra.mxu0 0.0
        %1753 = vmatprep.subr.mxu0 0.0
        %1754 = vmatpush1.msra.mxu0 0.0
        %1755 = vmatprep.subr.mxu0 0.0
        %1756 = vmatpush1.msra.mxu0 0.0
        %1757 = vmatprep.subr.mxu0 0.0
        %1758 = vmatpush1.msra.mxu0 0.0
        %1759 = vmatprep.subr.mxu0 0.0
        %1760 = vmatpush1.msra.mxu0 0.0
        %1761 = vmatprep.subr.mxu0 0.0
        %1762 = vmatpush1.msra.mxu0 0.0
        %1763 = vmatprep.subr.mxu0 0.0
        %1764 = vmatpush1.msra.mxu0 0.0
        %1765 = vmatprep.subr.mxu0 0.0
        %1766 = vmatpush1.msra.mxu0 0.0
        %1767 = vmatprep.subr.mxu0 0.0
        %1768 = vmatpush1.msra.mxu0 0.0
        %1769 = vmatprep.subr.mxu0 0.0
        %1770 = vmatpush1.msra.mxu0 0.0
        %1771 = vmatprep.subr.mxu0 0.0
        %1772 = vmatpush1.msra.mxu0 0.0
        %1773 = vmatprep.subr.mxu0 0.0
        %1774 = vmatpush1.msra.mxu0 0.0
        %1775 = vmatprep.mubr.f32.mxu0 0.0
        %1776 = vmatmul.mubr.f32.gmra.mrb[0].mxu0 %v1706
        %v1777 = vpop.f32.mrb[0].mxu0
        %v1778 = vadd.f32 0.0, %v1777
        %v1779 = vpop.f32.mrb[0].mxu0
        %1780 = vmatprep.mubr.f32.mxu0 0.0
        %1781 = vmatmul.mubr.f32.gmra.mrb[0].mxu0 %v1709
        %v1782 = vpop.f32.mrb[0].mxu0
        %v1783 = vadd.f32 0.0, %v1782
        %v1784 = vpop.f32.mrb[0].mxu0
        %1785 = vdwg.mxu0
        %v1786 = vld [vmem:[#allocation9] sm:$0xff]
        %v1788 = vsel %vm1704, %v1778, 0
        %v1791 = vsel %vm1704, %v1783, 0
        %1793 = vmatprep.subr.mxu0 0.0
        %1794 = vmatpush1.msra.mxu0 %v1786
        %1795 = vmatprep.subr.mxu0 0.0
        %1796 = vmatpush1.msra.mxu0 0.0
        %1797 = vmatprep.subr.mxu0 0.0
        %1798 = vmatpush1.msra.mxu0 0.0
        %1799 = vmatprep.subr.mxu0 0.0
        %1800 = vmatpush1.msra.mxu0 0.0
        %1801 = vmatprep.subr.mxu0 0.0
        %1802 = vmatpush1.msra.mxu0 0.0
        %1803 = vmatprep.subr.mxu0 0.0
        %1804 = vmatpush1.msra.mxu0 0.0
        %1805 = vmatprep.subr.mxu0 0.0
        %1806 = vmatpush1.msra.mxu0 0.0
        %1807 = vmatprep.subr.mxu0 0.0
        %1808 = vmatpush1.msra.mxu0 0.0
        %1809 = vmatprep.subr.mxu0 0.0
        %1810 = vmatpush1.msra.mxu0 0.0
        %1811 = vmatprep.subr.mxu0 0.0
        %1812 = vmatpush1.msra.mxu0 0.0
        %1813 = vmatprep.subr.mxu0 0.0
        %1814 = vmatpush1.msra.mxu0 0.0
        %1815 = vmatprep.subr.mxu0 0.0
        %1816 = vmatpush1.msra.mxu0 0.0
        %1817 = vmatprep.subr.mxu0 0.0
        %1818 = vmatpush1.msra.mxu0 0.0
        %1819 = vmatprep.subr.mxu0 0.0
        %1820 = vmatpush1.msra.mxu0 0.0
        %1821 = vmatprep.subr.mxu0 0.0
        %1822 = vmatpush1.msra.mxu0 0.0
        %1823 = vmatprep.subr.mxu0 0.0
        %1824 = vmatpush1.msra.mxu0 0.0
        %1825 = vmatprep.subr.mxu0 0.0
        %1826 = vmatpush1.msra.mxu0 0.0
        %1827 = vmatprep.subr.mxu0 0.0
        %1828 = vmatpush1.msra.mxu0 0.0
        %1829 = vmatprep.subr.mxu0 0.0
        %1830 = vmatpush1.msra.mxu0 0.0
        %1831 = vmatprep.subr.mxu0 0.0
        %1832 = vmatpush1.msra.mxu0 0.0
        %1833 = vmatprep.subr.mxu0 0.0
        %1834 = vmatpush1.msra.mxu0 0.0
        %1835 = vmatprep.subr.mxu0 0.0
        %1836 = vmatpush1.msra.mxu0 0.0
        %1837 = vmatprep.subr.mxu0 0.0
        %1838 = vmatpush1.msra.mxu0 0.0
        %1839 = vmatprep.subr.mxu0 0.0
        %1840 = vmatpush1.msra.mxu0 0.0
        %1841 = vmatprep.subr.mxu0 0.0
        %1842 = vmatpush1.msra.mxu0 0.0
        %1843 = vmatprep.subr.mxu0 0.0
        %1844 = vmatpush1.msra.mxu0 0.0
        %1845 = vmatprep.subr.mxu0 0.0
        %1846 = vmatpush1.msra.mxu0 0.0
        %1847 = vmatprep.subr.mxu0 0.0
        %1848 = vmatpush1.msra.mxu0 0.0
        %1849 = vmatprep.subr.mxu0 0.0
        %1850 = vmatpush1.msra.mxu0 0.0
        %1851 = vmatprep.subr.mxu0 0.0
        %1852 = vmatpush1.msra.mxu0 0.0
        %1853 = vmatprep.subr.mxu0 0.0
        %1854 = vmatpush1.msra.mxu0 0.0
        %1855 = vmatprep.subr.mxu0 0.0
        %1856 = vmatpush1.msra.mxu0 0.0
        %1857 = vmatprep.mubr.f32.mxu0 0.0
        %1858 = vmatmul.mubr.f32.gmra.mrb[0].mxu0 %v1788
        %v1859 = vpop.f32.mrb[0].mxu0
        %v1860 = vadd.f32 0.0, %v1859
        %v1861 = vpop.f32.mrb[0].mxu0
        %1862 = vmatprep.mubr.f32.mxu0 0.0
        %1863 = vmatmul.mubr.f32.gmra.mrb[0].mxu0 %v1791
        %v1864 = vpop.f32.mrb[0].mxu0
        %v1865 = vadd.f32 0.0, %v1864
        %v1866 = vpop.f32.mrb[0].mxu0
        %1867 = vdwg.mxu0
        %vm1868 = vcmask 130048
        %1869 = vst.msk [vmem:[%s526] sm:$0xff] %vm1868, %v1860
        %1870 = vst.msk [vmem:[%s526 + $0x8] sm:$0xff] %vm1868, %v1865
        %v1871 = vsel %vm754, %v527, -inf
        %1872 = vmax.xlane.f32.xlu0 %v1871
        %v1873 = vpop.xlane.xlu0 %1872
        %v1874 = vsel %vm754, %v528, -inf
        %1875 = vmax.xlane.f32.xlu0 %v1874
        %v1876 = vpop.xlane.xlu0 %1875
        %v1877 = vsel %vm754, %v529, -inf
        %1878 = vmax.xlane.f32.xlu0 %v1877
        %v1879 = vpop.xlane.xlu0 %1878
        %v1880 = vsel %vm754, %v530, -inf
        %1881 = vmax.xlane.f32.xlu0 %v1880
        %v1882 = vpop.xlane.xlu0 %1881
        %v1883 = vsel %vm754, %v531, -inf
        %1884 = vmax.xlane.f32.xlu0 %v1883
        %v1885 = vpop.xlane.xlu0 %1884
        %v1886 = vsel %vm754, %v532, -inf
        %1887 = vmax.xlane.f32.xlu0 %v1886
        %v1888 = vpop.xlane.xlu0 %1887
        %v1889 = vsel %vm754, %v533, -inf
        %1890 = vmax.xlane.f32.xlu0 %v1889
        %v1891 = vpop.xlane.xlu0 %1890
        %v1892 = vsel %vm754, %v534, -inf
        %1893 = vmax.xlane.f32.xlu0 %v1892
        %v1894 = vpop.xlane.xlu0 %1893
        %vm1895 = vcmask 48152
        %v1896 = vsel %vm1895, %v527, -inf
        %1897 = vmax.xlane.f32.xlu0 %v1896
        %v1898 = vpop.xlane.xlu0 %1897
        %v1899 = vsel %vm1895, %v528, -inf
        %1900 = vmax.xlane.f32.xlu0 %v1899
        %v1901 = vpop.xlane.xlu0 %1900
        %v1902 = vsel %vm1895, %v529, -inf
        %1903 = vmax.xlane.f32.xlu0 %v1902
        %v1904 = vpop.xlane.xlu0 %1903
        %v1905 = vsel %vm1895, %v530, -inf
        %1906 = vmax.xlane.f32.xlu0 %v1905
        %v1907 = vpop.xlane.xlu0 %1906
        %v1908 = vsel %vm1895, %v531, -inf
        %1909 = vmax.xlane.f32.xlu0 %v1908
        %v1910 = vpop.xlane.xlu0 %1909
        %v1911 = vsel %vm1895, %v532, -inf
        %1912 = vmax.xlane.f32.xlu0 %v1911
        %v1913 = vpop.xlane.xlu0 %1912
        %v1914 = vsel %vm1895, %v533, -inf
        %1915 = vmax.xlane.f32.xlu0 %v1914
        %v1916 = vpop.xlane.xlu0 %1915
        %v1917 = vsel %vm1895, %v534, -inf
        %1918 = vmax.xlane.f32.xlu0 %v1917
        %v1919 = vpop.xlane.xlu0 %1918
        %vm1920 = vcmask 72752
        %v1921 = vsel %vm1920, %v527, -inf
        %1922 = vmax.xlane.f32.xlu0 %v1921
        %v1923 = vpop.xlane.xlu0 %1922
        %v1924 = vsel %vm1920, %v528, -inf
        %1925 = vmax.xlane.f32.xlu0 %v1924
        %v1926 = vpop.xlane.xlu0 %1925
        %v1927 = vsel %vm1920, %v529, -inf
        %1928 = vmax.xlane.f32.xlu0 %v1927
        %v1929 = vpop.xlane.xlu0 %1928
        %v1930 = vsel %vm1920, %v530, -inf
        %1931 = vmax.xlane.f32.xlu0 %v1930
        %v1932 = vpop.xlane.xlu0 %1931
        %v1933 = vsel %vm1920, %v531, -inf
        %1934 = vmax.xlane.f32.xlu0 %v1933
        %v1935 = vpop.xlane.xlu0 %1934
        %v1936 = vsel %vm1920, %v532, -inf
        %1937 = vmax.xlane.f32.xlu0 %v1936
        %v1938 = vpop.xlane.xlu0 %1937
        %v1939 = vsel %vm1920, %v533, -inf
        %1940 = vmax.xlane.f32.xlu0 %v1939
        %v1941 = vpop.xlane.xlu0 %1940
        %v1942 = vsel %vm1920, %v534, -inf
        %1943 = vmax.xlane.f32.xlu0 %v1942
        %v1944 = vpop.xlane.xlu0 %1943
        %vm1945 = vcmask 97352
        %v1946 = vsel %vm1945, %v527, -inf
        %1947 = vmax.xlane.f32.xlu0 %v1946
        %v1948 = vpop.xlane.xlu0 %1947
        %v1949 = vsel %vm1945, %v528, -inf
        %1950 = vmax.xlane.f32.xlu0 %v1949
        %v1951 = vpop.xlane.xlu0 %1950
        %v1952 = vsel %vm1945, %v529, -inf
        %1953 = vmax.xlane.f32.xlu0 %v1952
        %v1954 = vpop.xlane.xlu0 %1953
        %v1955 = vsel %vm1945, %v530, -inf
        %1956 = vmax.xlane.f32.xlu0 %v1955
        %v1957 = vpop.xlane.xlu0 %1956
        %v1958 = vsel %vm1945, %v531, -inf
        %1959 = vmax.xlane.f32.xlu0 %v1958
        %v1960 = vpop.xlane.xlu0 %1959
        %v1961 = vsel %vm1945, %v532, -inf
        %1962 = vmax.xlane.f32.xlu0 %v1961
        %v1963 = vpop.xlane.xlu0 %1962
        %v1964 = vsel %vm1945, %v533, -inf
        %1965 = vmax.xlane.f32.xlu0 %v1964
        %v1966 = vpop.xlane.xlu0 %1965
        %v1967 = vsel %vm1945, %v534, -inf
        %1968 = vmax.xlane.f32.xlu0 %v1967
        %v1969 = vpop.xlane.xlu0 %1968
        %vm1970 = vcmask 121952
        %v1971 = vsel %vm1970, %v527, -inf
        %1972 = vmax.xlane.f32.xlu0 %v1971
        %v1973 = vpop.xlane.xlu0 %1972
        %v1974 = vsel %vm1970, %v528, -inf
        %1975 = vmax.xlane.f32.xlu0 %v1974
        %v1976 = vpop.xlane.xlu0 %1975
        %v1977 = vsel %vm1970, %v529, -inf
        %1978 = vmax.xlane.f32.xlu0 %v1977
        %v1979 = vpop.xlane.xlu0 %1978
        %v1980 = vsel %vm1970, %v530, -inf
        %1981 = vmax.xlane.f32.xlu0 %v1980
        %v1982 = vpop.xlane.xlu0 %1981
        %v1983 = vsel %vm1970, %v531, -inf
        %1984 = vmax.xlane.f32.xlu0 %v1983
        %v1985 = vpop.xlane.xlu0 %1984
        %v1986 = vsel %vm1970, %v532, -inf
        %1987 = vmax.xlane.f32.xlu0 %v1986
        %v1988 = vpop.xlane.xlu0 %1987
        %v1989 = vsel %vm1970, %v533, -inf
        %1990 = vmax.xlane.f32.xlu0 %v1989
        %v1991 = vpop.xlane.xlu0 %1990
        %v1992 = vsel %vm1970, %v534, -inf
        %1993 = vmax.xlane.f32.xlu0 %v1992
        %v1994 = vpop.xlane.xlu0 %1993
        %v1995 = vsel %vm737, %v1873, %v1898
        %v1996 = vsel %vm737, %v1876, %v1901
        %v1997 = vsel %vm737, %v1879, %v1904
        %v1998 = vsel %vm737, %v1882, %v1907
        %v1999 = vsel %vm737, %v1885, %v1910
        %v2000 = vsel %vm737, %v1888, %v1913
        %v2001 = vsel %vm737, %v1891, %v1916
        %v2002 = vsel %vm737, %v1894, %v1919
        %v2003 = vsel %vm537, %v1995, %v1923
        %v2004 = vsel %vm537, %v1996, %v1926
        %v2005 = vsel %vm537, %v1997, %v1929
        %v2006 = vsel %vm537, %v1998, %v1932
        %v2007 = vsel %vm537, %v1999, %v1935
        %v2008 = vsel %vm537, %v2000, %v1938
        %v2009 = vsel %vm537, %v2001, %v1941
        %v2010 = vsel %vm537, %v2002, %v1944
        %v2011 = vsel %vm754, %v2003, %v1948
        %v2012 = vsel %vm754, %v2004, %v1951
        %v2013 = vsel %vm754, %v2005, %v1954
        %v2014 = vsel %vm754, %v2006, %v1957
        %v2015 = vsel %vm754, %v2007, %v1960
        %v2016 = vsel %vm754, %v2008, %v1963
        %v2017 = vsel %vm754, %v2009, %v1966
        %v2018 = vsel %vm754, %v2010, %v1969
        %v2019 = vsel %vm763, %v2011, %v1973
        %v2020 = vsel %vm763, %v2012, %v1976
        %v2021 = vsel %vm763, %v2013, %v1979
        %v2022 = vsel %vm763, %v2014, %v1982
        %v2023 = vsel %vm763, %v2015, %v1985
        %v2024 = vsel %vm763, %v2016, %v1988
        %v2025 = vsel %vm763, %v2017, %v1991
        %v2026 = vsel %vm763, %v2018, %v1994
        %vm2027 = vcmask 34816
        %v2028 = vsel %vm2027, %v2019, -inf
        %v2029 = vrot.slane %v2028, 4
        %v2030 = vmax.f32 %v2028, %v2029
        %v2031 = vrot.slane %v2030, 2
        %v2032 = vmax.f32 %v2030, %v2031
        %v2033 = vrot.slane %v2032, 1
        %v2034 = vmax.f32 %v2032, %v2033
        %v2035 = vsel %vm2027, %v2021, -inf
        %v2036 = vrot.slane %v2035, 4
        %v2037 = vmax.f32 %v2035, %v2036
        %v2038 = vrot.slane %v2037, 2
        %v2039 = vmax.f32 %v2037, %v2038
        %v2040 = vrot.slane %v2039, 1
        %v2041 = vmax.f32 %v2039, %v2040
        %v2042 = vsel %vm2027, %v2023, -inf
        %v2043 = vrot.slane %v2042, 4
        %v2044 = vmax.f32 %v2042, %v2043
        %v2045 = vrot.slane %v2044, 2
        %v2046 = vmax.f32 %v2044, %v2045
        %v2047 = vrot.slane %v2046, 1
        %v2048 = vmax.f32 %v2046, %v2047
        %v2049 = vsel %vm2027, %v2025, -inf
        %v2050 = vrot.slane %v2049, 4
        %v2051 = vmax.f32 %v2049, %v2050
        %v2052 = vrot.slane %v2051, 2
        %v2053 = vmax.f32 %v2051, %v2052
        %v2054 = vrot.slane %v2053, 1
        %v2055 = vmax.f32 %v2053, %v2054
        %v2060 = vsel %vm832, %v2041, %v2034
        %v2061 = vsel %vm834, %v2048, %v2060
        %v2062 = vsel %vm836, %v2055, %v2061
        %v2063 = vsel %vm841, %v2062, 0
        %2065 = vmatprep.subr.mxu0 0.0
        %2066 = vmatpush1.msra.mxu0 %v2063
        %2067 = vmatprep.subr.mxu0 0.0
        %2068 = vmatpush1.msra.mxu0 0.0
        %2069 = vmatprep.subr.mxu0 0.0
        %2070 = vmatpush1.msra.mxu0 0.0
        %2071 = vmatprep.subr.mxu0 0.0
        %2072 = vmatpush1.msra.mxu0 0.0
        %2073 = vmatprep.subr.mxu0 0.0
        %2074 = vmatpush1.msra.mxu0 0.0
        %2075 = vmatprep.subr.mxu0 0.0
        %2076 = vmatpush1.msra.mxu0 0.0
        %2077 = vmatprep.subr.mxu0 0.0
        %2078 = vmatpush1.msra.mxu0 0.0
        %2079 = vmatprep.subr.mxu0 0.0
        %2080 = vmatpush1.msra.mxu0 0.0
        %2081 = vmatprep.subr.mxu0 0.0
        %2082 = vmatpush1.msra.mxu0 0.0
        %2083 = vmatprep.subr.mxu0 0.0
        %2084 = vmatpush1.msra.mxu0 0.0
        %2085 = vmatprep.subr.mxu0 0.0
        %2086 = vmatpush1.msra.mxu0 0.0
        %2087 = vmatprep.subr.mxu0 0.0
        %2088 = vmatpush1.msra.mxu0 0.0
        %2089 = vmatprep.subr.mxu0 0.0
        %2090 = vmatpush1.msra.mxu0 0.0
        %2091 = vmatprep.subr.mxu0 0.0
        %2092 = vmatpush1.msra.mxu0 0.0
        %2093 = vmatprep.subr.mxu0 0.0
        %2094 = vmatpush1.msra.mxu0 0.0
        %2095 = vmatprep.subr.mxu0 0.0
        %2096 = vmatpush1.msra.mxu0 0.0
        %2097 = vmatprep.subr.mxu0 0.0
        %2098 = vmatpush1.msra.mxu0 0.0
        %2099 = vmatprep.subr.mxu0 0.0
        %2100 = vmatpush1.msra.mxu0 0.0
        %2101 = vmatprep.subr.mxu0 0.0
        %2102 = vmatpush1.msra.mxu0 0.0
        %2103 = vmatprep.subr.mxu0 0.0
        %2104 = vmatpush1.msra.mxu0 0.0
        %2105 = vmatprep.subr.mxu0 0.0
        %2106 = vmatpush1.msra.mxu0 0.0
        %2107 = vmatprep.subr.mxu0 0.0
        %2108 = vmatpush1.msra.mxu0 0.0
        %2109 = vmatprep.subr.mxu0 0.0
        %2110 = vmatpush1.msra.mxu0 0.0
        %2111 = vmatprep.subr.mxu0 0.0
        %2112 = vmatpush1.msra.mxu0 0.0
        %2113 = vmatprep.subr.mxu0 0.0
        %2114 = vmatpush1.msra.mxu0 0.0
        %2115 = vmatprep.subr.mxu0 0.0
        %2116 = vmatpush1.msra.mxu0 0.0
        %2117 = vmatprep.subr.mxu0 0.0
        %2118 = vmatpush1.msra.mxu0 0.0
        %2119 = vmatprep.subr.mxu0 0.0
        %2120 = vmatpush1.msra.mxu0 0.0
        %2121 = vmatprep.subr.mxu0 0.0
        %2122 = vmatpush1.msra.mxu0 0.0
        %2123 = vmatprep.subr.mxu0 0.0
        %2124 = vmatpush1.msra.mxu0 0.0
        %2125 = vmatprep.subr.mxu0 0.0
        %2126 = vmatpush1.msra.mxu0 0.0
        %2127 = vmatprep.subr.mxu0 0.0
        %2128 = vmatpush1.msra.mxu0 0.0
        %2129 = vmatprep.mubr.f32.mxu0 0.0
        %2130 = vmatmul.mubr.f32.gmra.mrb[0].mxu0 %v839
        %v2131 = vpop.f32.mrb[0].mxu0
        %v2132 = vadd.f32 0.0, %v2131
        %v2133 = vpop.f32.mrb[0].mxu0
        %2134 = vdwg.mxu0
        %vm2135 = vcmask 37891
        %v2136 = vsel %vm2135, %v2019, -inf
        %v2137 = vrot.slane %v2136, 4
        %v2138 = vmax.f32 %v2136, %v2137
        %v2139 = vrot.slane %v2138, 2
        %v2140 = vmax.f32 %v2138, %v2139
        %v2141 = vrot.slane %v2140, 1
        %v2142 = vmax.f32 %v2140, %v2141
        %v2143 = vsel %vm2135, %v2021, -inf
        %v2144 = vrot.slane %v2143, 4
        %v2145 = vmax.f32 %v2143, %v2144
        %v2146 = vrot.slane %v2145, 2
        %v2147 = vmax.f32 %v2145, %v2146
        %v2148 = vrot.slane %v2147, 1
        %v2149 = vmax.f32 %v2147, %v2148
        %v2150 = vsel %vm2135, %v2023, -inf
        %v2151 = vrot.slane %v2150, 4
        %v2152 = vmax.f32 %v2150, %v2151
        %v2153 = vrot.slane %v2152, 2
        %v2154 = vmax.f32 %v2152, %v2153
        %v2155 = vrot.slane %v2154, 1
        %v2156 = vmax.f32 %v2154, %v2155
        %v2157 = vsel %vm2135, %v2025, -inf
        %v2158 = vrot.slane %v2157, 4
        %v2159 = vmax.f32 %v2157, %v2158
        %v2160 = vrot.slane %v2159, 2
        %v2161 = vmax.f32 %v2159, %v2160
        %v2162 = vrot.slane %v2161, 1
        %v2163 = vmax.f32 %v2161, %v2162
        %v2168 = vsel %vm832, %v2149, %v2142
        %v2169 = vsel %vm834, %v2156, %v2168
        %v2170 = vsel %vm836, %v2163, %v2169
        %v2171 = vsel %vm841, %v2170, 0
        %2173 = vmatprep.subr.mxu0 0.0
        %2174 = vmatpush1.msra.mxu0 %v2171
        %2175 = vmatprep.subr.mxu0 0.0
        %2176 = vmatpush1.msra.mxu0 0.0
        %2177 = vmatprep.subr.mxu0 0.0
        %2178 = vmatpush1.msra.mxu0 0.0
        %2179 = vmatprep.subr.mxu0 0.0
        %2180 = vmatpush1.msra.mxu0 0.0
        %2181 = vmatprep.subr.mxu0 0.0
        %2182 = vmatpush1.msra.mxu0 0.0
        %2183 = vmatprep.subr.mxu0 0.0
        %2184 = vmatpush1.msra.mxu0 0.0
        %2185 = vmatprep.subr.mxu0 0.0
        %2186 = vmatpush1.msra.mxu0 0.0
        %2187 = vmatprep.subr.mxu0 0.0
        %2188 = vmatpush1.msra.mxu0 0.0
        %2189 = vmatprep.subr.mxu0 0.0
        %2190 = vmatpush1.msra.mxu0 0.0
        %2191 = vmatprep.subr.mxu0 0.0
        %2192 = vmatpush1.msra.mxu0 0.0
        %2193 = vmatprep.subr.mxu0 0.0
        %2194 = vmatpush1.msra.mxu0 0.0
        %2195 = vmatprep.subr.mxu0 0.0
        %2196 = vmatpush1.msra.mxu0 0.0
        %2197 = vmatprep.subr.mxu0 0.0
        %2198 = vmatpush1.msra.mxu0 0.0
        %2199 = vmatprep.subr.mxu0 0.0
        %2200 = vmatpush1.msra.mxu0 0.0
        %2201 = vmatprep.subr.mxu0 0.0
        %2202 = vmatpush1.msra.mxu0 0.0
        %2203 = vmatprep.subr.mxu0 0.0
        %2204 = vmatpush1.msra.mxu0 0.0
        %2205 = vmatprep.subr.mxu0 0.0
        %2206 = vmatpush1.msra.mxu0 0.0
        %2207 = vmatprep.subr.mxu0 0.0
        %2208 = vmatpush1.msra.mxu0 0.0
        %2209 = vmatprep.subr.mxu0 0.0
        %2210 = vmatpush1.msra.mxu0 0.0
        %2211 = vmatprep.subr.mxu0 0.0
        %2212 = vmatpush1.msra.mxu0 0.0
        %2213 = vmatprep.subr.mxu0 0.0
        %2214 = vmatpush1.msra.mxu0 0.0
        %2215 = vmatprep.subr.mxu0 0.0
        %2216 = vmatpush1.msra.mxu0 0.0
        %2217 = vmatprep.subr.mxu0 0.0
        %2218 = vmatpush1.msra.mxu0 0.0
        %2219 = vmatprep.subr.mxu0 0.0
        %2220 = vmatpush1.msra.mxu0 0.0
        %2221 = vmatprep.subr.mxu0 0.0
        %2222 = vmatpush1.msra.mxu0 0.0
        %2223 = vmatprep.subr.mxu0 0.0
        %2224 = vmatpush1.msra.mxu0 0.0
        %2225 = vmatprep.subr.mxu0 0.0
        %2226 = vmatpush1.msra.mxu0 0.0
        %2227 = vmatprep.subr.mxu0 0.0
        %2228 = vmatpush1.msra.mxu0 0.0
        %2229 = vmatprep.subr.mxu0 0.0
        %2230 = vmatpush1.msra.mxu0 0.0
        %2231 = vmatprep.subr.mxu0 0.0
        %2232 = vmatpush1.msra.mxu0 0.0
        %2233 = vmatprep.subr.mxu0 0.0
        %2234 = vmatpush1.msra.mxu0 0.0
        %2235 = vmatprep.subr.mxu0 0.0
        %2236 = vmatpush1.msra.mxu0 0.0
        %2237 = vmatprep.mubr.f32.mxu0 0.0
        %2238 = vmatmul.mubr.f32.gmra.mrb[0].mxu0 %v839
        %v2239 = vpop.f32.mrb[0].mxu0
        %v2240 = vadd.f32 0.0, %v2239
        %v2241 = vpop.f32.mrb[0].mxu0
        %2242 = vdwg.mxu0
        %vm2243 = vcmask 39942
        %v2244 = vsel %vm2243, %v2019, -inf
        %vm2245 = vcmask 32768
        %v2246 = vsel %vm2245, %v2020, -inf
        %v2247 = vmax.f32 %v2244, %v2246
        %v2248 = vrot.slane %v2247, 4
        %v2249 = vmax.f32 %v2247, %v2248
        %v2250 = vrot.slane %v2249, 2
        %v2251 = vmax.f32 %v2249, %v2250
        %v2252 = vrot.slane %v2251, 1
        %v2253 = vmax.f32 %v2251, %v2252
        %v2254 = vsel %vm2243, %v2021, -inf
        %v2255 = vsel %vm2245, %v2022, -inf
        %v2256 = vmax.f32 %v2254, %v2255
        %v2257 = vrot.slane %v2256, 4
        %v2258 = vmax.f32 %v2256, %v2257
        %v2259 = vrot.slane %v2258, 2
        %v2260 = vmax.f32 %v2258, %v2259
        %v2261 = vrot.slane %v2260, 1
        %v2262 = vmax.f32 %v2260, %v2261
        %v2263 = vsel %vm2243, %v2023, -inf
        %v2264 = vsel %vm2245, %v2024, -inf
        %v2265 = vmax.f32 %v2263, %v2264
        %v2266 = vrot.slane %v2265, 4
        %v2267 = vmax.f32 %v2265, %v2266
        %v2268 = vrot.slane %v2267, 2
        %v2269 = vmax.f32 %v2267, %v2268
        %v2270 = vrot.slane %v2269, 1
        %v2271 = vmax.f32 %v2269, %v2270
        %v2272 = vsel %vm2243, %v2025, -inf
        %v2273 = vsel %vm2245, %v2026, -inf
        %v2274 = vmax.f32 %v2272, %v2273
        %v2275 = vrot.slane %v2274, 4
        %v2276 = vmax.f32 %v2274, %v2275
        %v2277 = vrot.slane %v2276, 2
        %v2278 = vmax.f32 %v2276, %v2277
        %v2279 = vrot.slane %v2278, 1
        %v2280 = vmax.f32 %v2278, %v2279
        %v2285 = vsel %vm832, %v2262, %v2253
        %v2286 = vsel %vm834, %v2271, %v2285
        %v2287 = vsel %vm836, %v2280, %v2286
        %v2288 = vsel %vm841, %v2287, 0
        %2290 = vmatprep.subr.mxu0 0.0
        %2291 = vmatpush1.msra.mxu0 %v2288
        %2292 = vmatprep.subr.mxu0 0.0
        %2293 = vmatpush1.msra.mxu0 0.0
        %2294 = vmatprep.subr.mxu0 0.0
        %2295 = vmatpush1.msra.mxu0 0.0
        %2296 = vmatprep.subr.mxu0 0.0
        %2297 = vmatpush1.msra.mxu0 0.0
        %2298 = vmatprep.subr.mxu0 0.0
        %2299 = vmatpush1.msra.mxu0 0.0
        %2300 = vmatprep.subr.mxu0 0.0
        %2301 = vmatpush1.msra.mxu0 0.0
        %2302 = vmatprep.subr.mxu0 0.0
        %2303 = vmatpush1.msra.mxu0 0.0
        %2304 = vmatprep.subr.mxu0 0.0
        %2305 = vmatpush1.msra.mxu0 0.0
        %2306 = vmatprep.subr.mxu0 0.0
        %2307 = vmatpush1.msra.mxu0 0.0
        %2308 = vmatprep.subr.mxu0 0.0
        %2309 = vmatpush1.msra.mxu0 0.0
        %2310 = vmatprep.subr.mxu0 0.0
        %2311 = vmatpush1.msra.mxu0 0.0
        %2312 = vmatprep.subr.mxu0 0.0
        %2313 = vmatpush1.msra.mxu0 0.0
        %2314 = vmatprep.subr.mxu0 0.0
        %2315 = vmatpush1.msra.mxu0 0.0
        %2316 = vmatprep.subr.mxu0 0.0
        %2317 = vmatpush1.msra.mxu0 0.0
        %2318 = vmatprep.subr.mxu0 0.0
        %2319 = vmatpush1.msra.mxu0 0.0
        %2320 = vmatprep.subr.mxu0 0.0
        %2321 = vmatpush1.msra.mxu0 0.0
        %2322 = vmatprep.subr.mxu0 0.0
        %2323 = vmatpush1.msra.mxu0 0.0
        %2324 = vmatprep.subr.mxu0 0.0
        %2325 = vmatpush1.msra.mxu0 0.0
        %2326 = vmatprep.subr.mxu0 0.0
        %2327 = vmatpush1.msra.mxu0 0.0
        %2328 = vmatprep.subr.mxu0 0.0
        %2329 = vmatpush1.msra.mxu0 0.0
        %2330 = vmatprep.subr.mxu0 0.0
        %2331 = vmatpush1.msra.mxu0 0.0
        %2332 = vmatprep.subr.mxu0 0.0
        %2333 = vmatpush1.msra.mxu0 0.0
        %2334 = vmatprep.subr.mxu0 0.0
        %2335 = vmatpush1.msra.mxu0 0.0
        %2336 = vmatprep.subr.mxu0 0.0
        %2337 = vmatpush1.msra.mxu0 0.0
        %2338 = vmatprep.subr.mxu0 0.0
        %2339 = vmatpush1.msra.mxu0 0.0
        %2340 = vmatprep.subr.mxu0 0.0
        %2341 = vmatpush1.msra.mxu0 0.0
        %2342 = vmatprep.subr.mxu0 0.0
        %2343 = vmatpush1.msra.mxu0 0.0
        %2344 = vmatprep.subr.mxu0 0.0
        %2345 = vmatpush1.msra.mxu0 0.0
        %2346 = vmatprep.subr.mxu0 0.0
        %2347 = vmatpush1.msra.mxu0 0.0
        %2348 = vmatprep.subr.mxu0 0.0
        %2349 = vmatpush1.msra.mxu0 0.0
        %2350 = vmatprep.subr.mxu0 0.0
        %2351 = vmatpush1.msra.mxu0 0.0
        %2352 = vmatprep.subr.mxu0 0.0
        %2353 = vmatpush1.msra.mxu0 0.0
        %2354 = vmatprep.mubr.f32.mxu0 0.0
        %2355 = vmatmul.mubr.f32.gmra.mrb[0].mxu0 %v839
        %v2356 = vpop.f32.mrb[0].mxu0
        %v2357 = vadd.f32 0.0, %v2356
        %v2358 = vpop.f32.mrb[0].mxu0
        %2359 = vdwg.mxu0
        %vm2360 = vcmask 35841
        %v2361 = vsel %vm2360, %v2020, -inf
        %v2362 = vrot.slane %v2361, 4
        %v2363 = vmax.f32 %v2361, %v2362
        %v2364 = vrot.slane %v2363, 2
        %v2365 = vmax.f32 %v2363, %v2364
        %v2366 = vrot.slane %v2365, 1
        %v2367 = vmax.f32 %v2365, %v2366
        %v2368 = vsel %vm2360, %v2022, -inf
        %v2369 = vrot.slane %v2368, 4
        %v2370 = vmax.f32 %v2368, %v2369
        %v2371 = vrot.slane %v2370, 2
        %v2372 = vmax.f32 %v2370, %v2371
        %v2373 = vrot.slane %v2372, 1
        %v2374 = vmax.f32 %v2372, %v2373
        %v2375 = vsel %vm2360, %v2024, -inf
        %v2376 = vrot.slane %v2375, 4
        %v2377 = vmax.f32 %v2375, %v2376
        %v2378 = vrot.slane %v2377, 2
        %v2379 = vmax.f32 %v2377, %v2378
        %v2380 = vrot.slane %v2379, 1
        %v2381 = vmax.f32 %v2379, %v2380
        %v2382 = vsel %vm2360, %v2026, -inf
        %v2383 = vrot.slane %v2382, 4
        %v2384 = vmax.f32 %v2382, %v2383
        %v2385 = vrot.slane %v2384, 2
        %v2386 = vmax.f32 %v2384, %v2385
        %v2387 = vrot.slane %v2386, 1
        %v2388 = vmax.f32 %v2386, %v2387
        %v2393 = vsel %vm832, %v2374, %v2367
        %v2394 = vsel %vm834, %v2381, %v2393
        %v2395 = vsel %vm836, %v2388, %v2394
        %v2396 = vsel %vm841, %v2395, 0
        %2398 = vmatprep.subr.mxu0 0.0
        %2399 = vmatpush1.msra.mxu0 %v2396
        %2400 = vmatprep.subr.mxu0 0.0
        %2401 = vmatpush1.msra.mxu0 0.0
        %2402 = vmatprep.subr.mxu0 0.0
        %2403 = vmatpush1.msra.mxu0 0.0
        %2404 = vmatprep.subr.mxu0 0.0
        %2405 = vmatpush1.msra.mxu0 0.0
        %2406 = vmatprep.subr.mxu0 0.0
        %2407 = vmatpush1.msra.mxu0 0.0
        %2408 = vmatprep.subr.mxu0 0.0
        %2409 = vmatpush1.msra.mxu0 0.0
        %2410 = vmatprep.subr.mxu0 0.0
        %2411 = vmatpush1.msra.mxu0 0.0
        %2412 = vmatprep.subr.mxu0 0.0
        %2413 = vmatpush1.msra.mxu0 0.0
        %2414 = vmatprep.subr.mxu0 0.0
        %2415 = vmatpush1.msra.mxu0 0.0
        %2416 = vmatprep.subr.mxu0 0.0
        %2417 = vmatpush1.msra.mxu0 0.0
        %2418 = vmatprep.subr.mxu0 0.0
        %2419 = vmatpush1.msra.mxu0 0.0
        %2420 = vmatprep.subr.mxu0 0.0
        %2421 = vmatpush1.msra.mxu0 0.0
        %2422 = vmatprep.subr.mxu0 0.0
        %2423 = vmatpush1.msra.mxu0 0.0
        %2424 = vmatprep.subr.mxu0 0.0
        %2425 = vmatpush1.msra.mxu0 0.0
        %2426 = vmatprep.subr.mxu0 0.0
        %2427 = vmatpush1.msra.mxu0 0.0
        %2428 = vmatprep.subr.mxu0 0.0
        %2429 = vmatpush1.msra.mxu0 0.0
        %2430 = vmatprep.subr.mxu0 0.0
        %2431 = vmatpush1.msra.mxu0 0.0
        %2432 = vmatprep.subr.mxu0 0.0
        %2433 = vmatpush1.msra.mxu0 0.0
        %2434 = vmatprep.subr.mxu0 0.0
        %2435 = vmatpush1.msra.mxu0 0.0
        %2436 = vmatprep.subr.mxu0 0.0
        %2437 = vmatpush1.msra.mxu0 0.0
        %2438 = vmatprep.subr.mxu0 0.0
        %2439 = vmatpush1.msra.mxu0 0.0
        %2440 = vmatprep.subr.mxu0 0.0
        %2441 = vmatpush1.msra.mxu0 0.0
        %2442 = vmatprep.subr.mxu0 0.0
        %2443 = vmatpush1.msra.mxu0 0.0
        %2444 = vmatprep.subr.mxu0 0.0
        %2445 = vmatpush1.msra.mxu0 0.0
        %2446 = vmatprep.subr.mxu0 0.0
        %2447 = vmatpush1.msra.mxu0 0.0
        %2448 = vmatprep.subr.mxu0 0.0
        %2449 = vmatpush1.msra.mxu0 0.0
        %2450 = vmatprep.subr.mxu0 0.0
        %2451 = vmatpush1.msra.mxu0 0.0
        %2452 = vmatprep.subr.mxu0 0.0
        %2453 = vmatpush1.msra.mxu0 0.0
        %2454 = vmatprep.subr.mxu0 0.0
        %2455 = vmatpush1.msra.mxu0 0.0
        %2456 = vmatprep.subr.mxu0 0.0
        %2457 = vmatpush1.msra.mxu0 0.0
        %2458 = vmatprep.subr.mxu0 0.0
        %2459 = vmatpush1.msra.mxu0 0.0
        %2460 = vmatprep.subr.mxu0 0.0
        %2461 = vmatpush1.msra.mxu0 0.0
        %2462 = vmatprep.mubr.f32.mxu0 0.0
        %2463 = vmatmul.mubr.f32.gmra.mrb[0].mxu0 %v839
        %v2464 = vpop.f32.mrb[0].mxu0
        %v2465 = vadd.f32 0.0, %v2464
        %v2466 = vpop.f32.mrb[0].mxu0
        %2467 = vdwg.mxu0
        %vm2468 = vcmask 38916
        %v2469 = vsel %vm2468, %v2020, -inf
        %v2470 = vrot.slane %v2469, 4
        %v2471 = vmax.f32 %v2469, %v2470
        %v2472 = vrot.slane %v2471, 2
        %v2473 = vmax.f32 %v2471, %v2472
        %v2474 = vrot.slane %v2473, 1
        %v2475 = vmax.f32 %v2473, %v2474
        %v2476 = vsel %vm2468, %v2022, -inf
        %v2477 = vrot.slane %v2476, 4
        %v2478 = vmax.f32 %v2476, %v2477
        %v2479 = vrot.slane %v2478, 2
        %v2480 = vmax.f32 %v2478, %v2479
        %v2481 = vrot.slane %v2480, 1
        %v2482 = vmax.f32 %v2480, %v2481
        %v2483 = vsel %vm2468, %v2024, -inf
        %v2484 = vrot.slane %v2483, 4
        %v2485 = vmax.f32 %v2483, %v2484
        %v2486 = vrot.slane %v2485, 2
        %v2487 = vmax.f32 %v2485, %v2486
        %v2488 = vrot.slane %v2487, 1
        %v2489 = vmax.f32 %v2487, %v2488
        %v2490 = vsel %vm2468, %v2026, -inf
        %v2491 = vrot.slane %v2490, 4
        %v2492 = vmax.f32 %v2490, %v2491
        %v2493 = vrot.slane %v2492, 2
        %v2494 = vmax.f32 %v2492, %v2493
        %v2495 = vrot.slane %v2494, 1
        %v2496 = vmax.f32 %v2494, %v2495
        %v2501 = vsel %vm832, %v2482, %v2475
        %v2502 = vsel %vm834, %v2489, %v2501
        %v2503 = vsel %vm836, %v2496, %v2502
        %v2504 = vsel %vm841, %v2503, 0
        %2506 = vmatprep.subr.mxu0 0.0
        %2507 = vmatpush1.msra.mxu0 %v2504
        %2508 = vmatprep.subr.mxu0 0.0
        %2509 = vmatpush1.msra.mxu0 0.0
        %2510 = vmatprep.subr.mxu0 0.0
        %2511 = vmatpush1.msra.mxu0 0.0
        %2512 = vmatprep.subr.mxu0 0.0
        %2513 = vmatpush1.msra.mxu0 0.0
        %2514 = vmatprep.subr.mxu0 0.0
        %2515 = vmatpush1.msra.mxu0 0.0
        %2516 = vmatprep.subr.mxu0 0.0
        %2517 = vmatpush1.msra.mxu0 0.0
        %2518 = vmatprep.subr.mxu0 0.0
        %2519 = vmatpush1.msra.mxu0 0.0
        %2520 = vmatprep.subr.mxu0 0.0
        %2521 = vmatpush1.msra.mxu0 0.0
        %2522 = vmatprep.subr.mxu0 0.0
        %2523 = vmatpush1.msra.mxu0 0.0
        %2524 = vmatprep.subr.mxu0 0.0
        %2525 = vmatpush1.msra.mxu0 0.0
        %2526 = vmatprep.subr.mxu0 0.0
        %2527 = vmatpush1.msra.mxu0 0.0
        %2528 = vmatprep.subr.mxu0 0.0
        %2529 = vmatpush1.msra.mxu0 0.0
        %2530 = vmatprep.subr.mxu0 0.0
        %2531 = vmatpush1.msra.mxu0 0.0
        %2532 = vmatprep.subr.mxu0 0.0
        %2533 = vmatpush1.msra.mxu0 0.0
        %2534 = vmatprep.subr.mxu0 0.0
        %2535 = vmatpush1.msra.mxu0 0.0
        %2536 = vmatprep.subr.mxu0 0.0
        %2537 = vmatpush1.msra.mxu0 0.0
        %2538 = vmatprep.subr.mxu0 0.0
        %2539 = vmatpush1.msra.mxu0 0.0
        %2540 = vmatprep.subr.mxu0 0.0
        %2541 = vmatpush1.msra.mxu0 0.0
        %2542 = vmatprep.subr.mxu0 0.0
        %2543 = vmatpush1.msra.mxu0 0.0
        %2544 = vmatprep.subr.mxu0 0.0
        %2545 = vmatpush1.msra.mxu0 0.0
        %2546 = vmatprep.subr.mxu0 0.0
        %2547 = vmatpush1.msra.mxu0 0.0
        %2548 = vmatprep.subr.mxu0 0.0
        %2549 = vmatpush1.msra.mxu0 0.0
        %2550 = vmatprep.subr.mxu0 0.0
        %2551 = vmatpush1.msra.mxu0 0.0
        %2552 = vmatprep.subr.mxu0 0.0
        %2553 = vmatpush1.msra.mxu0 0.0
        %2554 = vmatprep.subr.mxu0 0.0
        %2555 = vmatpush1.msra.mxu0 0.0
        %2556 = vmatprep.subr.mxu0 0.0
        %2557 = vmatpush1.msra.mxu0 0.0
        %2558 = vmatprep.subr.mxu0 0.0
        %2559 = vmatpush1.msra.mxu0 0.0
        %2560 = vmatprep.subr.mxu0 0.0
        %2561 = vmatpush1.msra.mxu0 0.0
        %2562 = vmatprep.subr.mxu0 0.0
        %2563 = vmatpush1.msra.mxu0 0.0
        %2564 = vmatprep.subr.mxu0 0.0
        %2565 = vmatpush1.msra.mxu0 0.0
        %2566 = vmatprep.subr.mxu0 0.0
        %2567 = vmatpush1.msra.mxu0 0.0
        %2568 = vmatprep.subr.mxu0 0.0
        %2569 = vmatpush1.msra.mxu0 0.0
        %2570 = vmatprep.mubr.f32.mxu0 0.0
        %2571 = vmatmul.mubr.f32.gmra.mrb[0].mxu0 %v839
        %v2572 = vpop.f32.mrb[0].mxu0
        %v2573 = vadd.f32 0.0, %v2572
        %v2574 = vpop.f32.mrb[0].mxu0
        %2575 = vdwg.mxu0
        %v2577 = vrot.slane %v2240, 7
        %v2580 = vrot.slane %v2357, 6
        %v2583 = vrot.slane %v2465, 5
        %v2586 = vrot.slane %v2573, 4
        %v2588 = vsel %vm1687, %v2132, %v2577
        %v2589 = vsel %vm1689, %v2588, %v2580
        %v2590 = vsel %vm1691, %v2589, %v2583
        %v2591 = vsel %vm841, %v2590, %v2586
        %v2592 = vadd.f32 %v2591, %v1700
        %v2593 = vld [vmem:[#allocation11] sm:$0xff]
        %v2594 = vld [vmem:[#allocation11 + $0x8] sm:$0xff]
        %v2596 = vsel %vm772, %v2593, 0
        %v2599 = vsel %vm772, %v2594, 0
        %v2602 = vsel %vm1694, %v2592, 0
        %2604 = vmatprep.subr.mxu0 0.0
        %2605 = vmatpush1.msra.mxu0 %v2602
        %2606 = vmatprep.subr.mxu0 0.0
        %2607 = vmatpush1.msra.mxu0 0.0
        %2608 = vmatprep.subr.mxu0 0.0
        %2609 = vmatpush1.msra.mxu0 0.0
        %2610 = vmatprep.subr.mxu0 0.0
        %2611 = vmatpush1.msra.mxu0 0.0
        %2612 = vmatprep.subr.mxu0 0.0
        %2613 = vmatpush1.msra.mxu0 0.0
        %2614 = vmatprep.subr.mxu0 0.0
        %2615 = vmatpush1.msra.mxu0 0.0
        %2616 = vmatprep.subr.mxu0 0.0
        %2617 = vmatpush1.msra.mxu0 0.0
        %2618 = vmatprep.subr.mxu0 0.0
        %2619 = vmatpush1.msra.mxu0 0.0
        %2620 = vmatprep.subr.mxu0 0.0
        %2621 = vmatpush1.msra.mxu0 0.0
        %2622 = vmatprep.subr.mxu0 0.0
        %2623 = vmatpush1.msra.mxu0 0.0
        %2624 = vmatprep.subr.mxu0 0.0
        %2625 = vmatpush1.msra.mxu0 0.0
        %2626 = vmatprep.subr.mxu0 0.0
        %2627 = vmatpush1.msra.mxu0 0.0
        %2628 = vmatprep.subr.mxu0 0.0
        %2629 = vmatpush1.msra.mxu0 0.0
        %2630 = vmatprep.subr.mxu0 0.0
        %2631 = vmatpush1.msra.mxu0 0.0
        %2632 = vmatprep.subr.mxu0 0.0
        %2633 = vmatpush1.msra.mxu0 0.0
        %2634 = vmatprep.subr.mxu0 0.0
        %2635 = vmatpush1.msra.mxu0 0.0
        %2636 = vmatprep.subr.mxu0 0.0
        %2637 = vmatpush1.msra.mxu0 0.0
        %2638 = vmatprep.subr.mxu0 0.0
        %2639 = vmatpush1.msra.mxu0 0.0
        %2640 = vmatprep.subr.mxu0 0.0
        %2641 = vmatpush1.msra.mxu0 0.0
        %2642 = vmatprep.subr.mxu0 0.0
        %2643 = vmatpush1.msra.mxu0 0.0
        %2644 = vmatprep.subr.mxu0 0.0
        %2645 = vmatpush1.msra.mxu0 0.0
        %2646 = vmatprep.subr.mxu0 0.0
        %2647 = vmatpush1.msra.mxu0 0.0
        %2648 = vmatprep.subr.mxu0 0.0
        %2649 = vmatpush1.msra.mxu0 0.0
        %2650 = vmatprep.subr.mxu0 0.0
        %2651 = vmatpush1.msra.mxu0 0.0
        %2652 = vmatprep.subr.mxu0 0.0
        %2653 = vmatpush1.msra.mxu0 0.0
        %2654 = vmatprep.subr.mxu0 0.0
        %2655 = vmatpush1.msra.mxu0 0.0
        %2656 = vmatprep.subr.mxu0 0.0
        %2657 = vmatpush1.msra.mxu0 0.0
        %2658 = vmatprep.subr.mxu0 0.0
        %2659 = vmatpush1.msra.mxu0 0.0
        %2660 = vmatprep.subr.mxu0 0.0
        %2661 = vmatpush1.msra.mxu0 0.0
        %2662 = vmatprep.subr.mxu0 0.0
        %2663 = vmatpush1.msra.mxu0 0.0
        %2664 = vmatprep.subr.mxu0 0.0
        %2665 = vmatpush1.msra.mxu0 0.0
        %2666 = vmatprep.subr.mxu0 0.0
        %2667 = vmatpush1.msra.mxu0 0.0
        %2668 = vmatprep.mubr.f32.mxu0 0.0
        %2669 = vmatmul.mubr.f32.gmra.mrb[0].mxu0 %v2596
        %v2670 = vpop.f32.mrb[0].mxu0
        %v2671 = vadd.f32 0.0, %v2670
        %v2672 = vpop.f32.mrb[0].mxu0
        %2673 = vmatprep.mubr.f32.mxu0 0.0
        %2674 = vmatmul.mubr.f32.gmra.mrb[0].mxu0 %v2599
        %v2675 = vpop.f32.mrb[0].mxu0
        %v2676 = vadd.f32 0.0, %v2675
        %v2677 = vpop.f32.mrb[0].mxu0
        %2678 = vdwg.mxu0
        %v2679 = vld [vmem:[#allocation12] sm:$0x1f]
        %v2681 = vsel %vm772, %v2671, 0
        %v2684 = vsel %vm772, %v2676, 0
        %v2687 = vsel %vm1694, %v2679, 0
        %2689 = vmatprep.subr.mxu0 0.0
        %2690 = vmatpush1.msra.mxu0 %v2687
        %2691 = vmatprep.subr.mxu0 0.0
        %2692 = vmatpush1.msra.mxu0 0.0
        %2693 = vmatprep.subr.mxu0 0.0
        %2694 = vmatpush1.msra.mxu0 0.0
        %2695 = vmatprep.subr.mxu0 0.0
        %2696 = vmatpush1.msra.mxu0 0.0
        %2697 = vmatprep.subr.mxu0 0.0
        %2698 = vmatpush1.msra.mxu0 0.0
        %2699 = vmatprep.subr.mxu0 0.0
        %2700 = vmatpush1.msra.mxu0 0.0
        %2701 = vmatprep.subr.mxu0 0.0
        %2702 = vmatpush1.msra.mxu0 0.0
        %2703 = vmatprep.subr.mxu0 0.0
        %2704 = vmatpush1.msra.mxu0 0.0
        %2705 = vmatprep.subr.mxu0 0.0
        %2706 = vmatpush1.msra.mxu0 0.0
        %2707 = vmatprep.subr.mxu0 0.0
        %2708 = vmatpush1.msra.mxu0 0.0
        %2709 = vmatprep.subr.mxu0 0.0
        %2710 = vmatpush1.msra.mxu0 0.0
        %2711 = vmatprep.subr.mxu0 0.0
        %2712 = vmatpush1.msra.mxu0 0.0
        %2713 = vmatprep.subr.mxu0 0.0
        %2714 = vmatpush1.msra.mxu0 0.0
        %2715 = vmatprep.subr.mxu0 0.0
        %2716 = vmatpush1.msra.mxu0 0.0
        %2717 = vmatprep.subr.mxu0 0.0
        %2718 = vmatpush1.msra.mxu0 0.0
        %2719 = vmatprep.subr.mxu0 0.0
        %2720 = vmatpush1.msra.mxu0 0.0
        %2721 = vmatprep.subr.mxu0 0.0
        %2722 = vmatpush1.msra.mxu0 0.0
        %2723 = vmatprep.subr.mxu0 0.0
        %2724 = vmatpush1.msra.mxu0 0.0
        %2725 = vmatprep.subr.mxu0 0.0
        %2726 = vmatpush1.msra.mxu0 0.0
        %2727 = vmatprep.subr.mxu0 0.0
        %2728 = vmatpush1.msra.mxu0 0.0
        %2729 = vmatprep.subr.mxu0 0.0
        %2730 = vmatpush1.msra.mxu0 0.0
        %2731 = vmatprep.subr.mxu0 0.0
        %2732 = vmatpush1.msra.mxu0 0.0
        %2733 = vmatprep.subr.mxu0 0.0
        %2734 = vmatpush1.msra.mxu0 0.0
        %2735 = vmatprep.subr.mxu0 0.0
        %2736 = vmatpush1.msra.mxu0 0.0
        %2737 = vmatprep.subr.mxu0 0.0
        %2738 = vmatpush1.msra.mxu0 0.0
        %2739 = vmatprep.subr.mxu0 0.0
        %2740 = vmatpush1.msra.mxu0 0.0
        %2741 = vmatprep.subr.mxu0 0.0
        %2742 = vmatpush1.msra.mxu0 0.0
        %2743 = vmatprep.subr.mxu0 0.0
        %2744 = vmatpush1.msra.mxu0 0.0
        %2745 = vmatprep.subr.mxu0 0.0
        %2746 = vmatpush1.msra.mxu0 0.0
        %2747 = vmatprep.subr.mxu0 0.0
        %2748 = vmatpush1.msra.mxu0 0.0
        %2749 = vmatprep.subr.mxu0 0.0
        %2750 = vmatpush1.msra.mxu0 0.0
        %2751 = vmatprep.subr.mxu0 0.0
        %2752 = vmatpush1.msra.mxu0 0.0
        %2753 = vmatprep.mubr.f32.mxu0 0.0
        %2754 = vmatmul.mubr.f32.gmra.mrb[0].mxu0 %v2681
        %v2755 = vpop.f32.mrb[0].mxu0
        %v2756 = vadd.f32 0.0, %v2755
        %v2757 = vpop.f32.mrb[0].mxu0
        %2758 = vmatprep.mubr.f32.mxu0 0.0
        %2759 = vmatmul.mubr.f32.gmra.mrb[0].mxu0 %v2684
        %v2760 = vpop.f32.mrb[0].mxu0
        %v2761 = vadd.f32 0.0, %v2760
        %v2762 = vpop.f32.mrb[0].mxu0
        %2763 = vdwg.mxu0
        %s2764 = scalar_lea.vmem %s526, 16 [#allocation20]
        %2765 = vst.msk [vmem:[%s2764] sm:$0xff] %vm1868, %v2756
        %2766 = vst.msk [vmem:[%s2764 + $0x8] sm:$0xff] %vm1868, %v2761
        %v2767 = vsel %vm772, %v527, -inf
        %2768 = vmax.xlane.f32.xlu0 %v2767
        %v2769 = vpop.xlane.xlu0 %2768
        %v2770 = vsel %vm772, %v528, -inf
        %2771 = vmax.xlane.f32.xlu0 %v2770
        %v2772 = vpop.xlane.xlu0 %2771
        %v2773 = vsel %vm772, %v529, -inf
        %2774 = vmax.xlane.f32.xlu0 %v2773
        %v2775 = vpop.xlane.xlu0 %2774
        %v2776 = vsel %vm772, %v530, -inf
        %2777 = vmax.xlane.f32.xlu0 %v2776
        %v2778 = vpop.xlane.xlu0 %2777
        %v2779 = vsel %vm772, %v531, -inf
        %2780 = vmax.xlane.f32.xlu0 %v2779
        %v2781 = vpop.xlane.xlu0 %2780
        %v2782 = vsel %vm772, %v532, -inf
        %2783 = vmax.xlane.f32.xlu0 %v2782
        %v2784 = vpop.xlane.xlu0 %2783
        %v2785 = vsel %vm772, %v533, -inf
        %2786 = vmax.xlane.f32.xlu0 %v2785
        %v2787 = vpop.xlane.xlu0 %2786
        %v2788 = vsel %vm772, %v534, -inf
        %2789 = vmax.xlane.f32.xlu0 %v2788
        %v2790 = vpop.xlane.xlu0 %2789
        %vm2791 = vcmask 80936
        %v2792 = vsel %vm2791, %v527, -inf
        %2793 = vmax.xlane.f32.xlu0 %v2792
        %v2794 = vpop.xlane.xlu0 %2793
        %v2795 = vsel %vm2791, %v528, -inf
        %2796 = vmax.xlane.f32.xlu0 %v2795
        %v2797 = vpop.xlane.xlu0 %2796
        %v2798 = vsel %vm2791, %v529, -inf
        %2799 = vmax.xlane.f32.xlu0 %v2798
        %v2800 = vpop.xlane.xlu0 %2799
        %v2801 = vsel %vm2791, %v530, -inf
        %2802 = vmax.xlane.f32.xlu0 %v2801
        %v2803 = vpop.xlane.xlu0 %2802
        %v2804 = vsel %vm2791, %v531, -inf
        %2805 = vmax.xlane.f32.xlu0 %v2804
        %v2806 = vpop.xlane.xlu0 %2805
        %v2807 = vsel %vm2791, %v532, -inf
        %2808 = vmax.xlane.f32.xlu0 %v2807
        %v2809 = vpop.xlane.xlu0 %2808
        %v2810 = vsel %vm2791, %v533, -inf
        %2811 = vmax.xlane.f32.xlu0 %v2810
        %v2812 = vpop.xlane.xlu0 %2811
        %v2813 = vsel %vm2791, %v534, -inf
        %2814 = vmax.xlane.f32.xlu0 %v2813
        %v2815 = vpop.xlane.xlu0 %2814
        %vm2816 = vcmask 121936
        %v2817 = vsel %vm2816, %v527, -inf
        %2818 = vmax.xlane.f32.xlu0 %v2817
        %v2819 = vpop.xlane.xlu0 %2818
        %v2820 = vsel %vm2816, %v528, -inf
        %2821 = vmax.xlane.f32.xlu0 %v2820
        %v2822 = vpop.xlane.xlu0 %2821
        %v2823 = vsel %vm2816, %v529, -inf
        %2824 = vmax.xlane.f32.xlu0 %v2823
        %v2825 = vpop.xlane.xlu0 %2824
        %v2826 = vsel %vm2816, %v530, -inf
        %2827 = vmax.xlane.f32.xlu0 %v2826
        %v2828 = vpop.xlane.xlu0 %2827
        %v2829 = vsel %vm2816, %v531, -inf
        %2830 = vmax.xlane.f32.xlu0 %v2829
        %v2831 = vpop.xlane.xlu0 %2830
        %v2832 = vsel %vm2816, %v532, -inf
        %2833 = vmax.xlane.f32.xlu0 %v2832
        %v2834 = vpop.xlane.xlu0 %2833
        %v2835 = vsel %vm2816, %v533, -inf
        %2836 = vmax.xlane.f32.xlu0 %v2835
        %v2837 = vpop.xlane.xlu0 %2836
        %v2838 = vsel %vm2816, %v534, -inf
        %2839 = vmax.xlane.f32.xlu0 %v2838
        %v2840 = vpop.xlane.xlu0 %2839
        %v2841 = vsel %vm737, %v2769, %v2794
        %v2842 = vsel %vm737, %v2772, %v2797
        %v2843 = vsel %vm737, %v2775, %v2800
        %v2844 = vsel %vm737, %v2778, %v2803
        %v2845 = vsel %vm737, %v2781, %v2806
        %v2846 = vsel %vm737, %v2784, %v2809
        %v2847 = vsel %vm737, %v2787, %v2812
        %v2848 = vsel %vm737, %v2790, %v2815
        %v2849 = vsel %vm537, %v2841, %v2819
        %v2850 = vsel %vm537, %v2842, %v2822
        %v2851 = vsel %vm537, %v2843, %v2825
        %v2852 = vsel %vm537, %v2844, %v2828
        %v2853 = vsel %vm537, %v2845, %v2831
        %v2854 = vsel %vm537, %v2846, %v2834
        %v2855 = vsel %vm537, %v2847, %v2837
        %v2856 = vsel %vm537, %v2848, %v2840
        %vm2857 = vcmask 20480
        %v2858 = vsel %vm2857, %v2849, -inf
        %v2859 = vrot.slane %v2858, 4
        %v2860 = vmax.f32 %v2858, %v2859
        %v2861 = vrot.slane %v2860, 2
        %v2862 = vmax.f32 %v2860, %v2861
        %v2863 = vrot.slane %v2862, 1
        %v2864 = vmax.f32 %v2862, %v2863
        %v2865 = vsel %vm2857, %v2851, -inf
        %v2866 = vrot.slane %v2865, 4
        %v2867 = vmax.f32 %v2865, %v2866
        %v2868 = vrot.slane %v2867, 2
        %v2869 = vmax.f32 %v2867, %v2868
        %v2870 = vrot.slane %v2869, 1
        %v2871 = vmax.f32 %v2869, %v2870
        %v2872 = vsel %vm2857, %v2853, -inf
        %v2873 = vrot.slane %v2872, 4
        %v2874 = vmax.f32 %v2872, %v2873
        %v2875 = vrot.slane %v2874, 2
        %v2876 = vmax.f32 %v2874, %v2875
        %v2877 = vrot.slane %v2876, 1
        %v2878 = vmax.f32 %v2876, %v2877
        %v2879 = vsel %vm2857, %v2855, -inf
        %v2880 = vrot.slane %v2879, 4
        %v2881 = vmax.f32 %v2879, %v2880
        %v2882 = vrot.slane %v2881, 2
        %v2883 = vmax.f32 %v2881, %v2882
        %v2884 = vrot.slane %v2883, 1
        %v2885 = vmax.f32 %v2883, %v2884
        %v2890 = vsel %vm832, %v2871, %v2864
        %v2891 = vsel %vm834, %v2878, %v2890
        %v2892 = vsel %vm836, %v2885, %v2891
        %v2893 = vsel %vm841, %v2892, 0
        %2895 = vmatprep.subr.mxu0 0.0
        %2896 = vmatpush1.msra.mxu0 %v2893
        %2897 = vmatprep.subr.mxu0 0.0
        %2898 = vmatpush1.msra.mxu0 0.0
        %2899 = vmatprep.subr.mxu0 0.0
        %2900 = vmatpush1.msra.mxu0 0.0
        %2901 = vmatprep.subr.mxu0 0.0
        %2902 = vmatpush1.msra.mxu0 0.0
        %2903 = vmatprep.subr.mxu0 0.0
        %2904 = vmatpush1.msra.mxu0 0.0
        %2905 = vmatprep.subr.mxu0 0.0
        %2906 = vmatpush1.msra.mxu0 0.0
        %2907 = vmatprep.subr.mxu0 0.0
        %2908 = vmatpush1.msra.mxu0 0.0
        %2909 = vmatprep.subr.mxu0 0.0
        %2910 = vmatpush1.msra.mxu0 0.0
        %2911 = vmatprep.subr.mxu0 0.0
        %2912 = vmatpush1.msra.mxu0 0.0
        %2913 = vmatprep.subr.mxu0 0.0
        %2914 = vmatpush1.msra.mxu0 0.0
        %2915 = vmatprep.subr.mxu0 0.0
        %2916 = vmatpush1.msra.mxu0 0.0
        %2917 = vmatprep.subr.mxu0 0.0
        %2918 = vmatpush1.msra.mxu0 0.0
        %2919 = vmatprep.subr.mxu0 0.0
        %2920 = vmatpush1.msra.mxu0 0.0
        %2921 = vmatprep.subr.mxu0 0.0
        %2922 = vmatpush1.msra.mxu0 0.0
        %2923 = vmatprep.subr.mxu0 0.0
        %2924 = vmatpush1.msra.mxu0 0.0
        %2925 = vmatprep.subr.mxu0 0.0
        %2926 = vmatpush1.msra.mxu0 0.0
        %2927 = vmatprep.subr.mxu0 0.0
        %2928 = vmatpush1.msra.mxu0 0.0
        %2929 = vmatprep.subr.mxu0 0.0
        %2930 = vmatpush1.msra.mxu0 0.0
        %2931 = vmatprep.subr.mxu0 0.0
        %2932 = vmatpush1.msra.mxu0 0.0
        %2933 = vmatprep.subr.mxu0 0.0
        %2934 = vmatpush1.msra.mxu0 0.0
        %2935 = vmatprep.subr.mxu0 0.0
        %2936 = vmatpush1.msra.mxu0 0.0
        %2937 = vmatprep.subr.mxu0 0.0
        %2938 = vmatpush1.msra.mxu0 0.0
        %2939 = vmatprep.subr.mxu0 0.0
        %2940 = vmatpush1.msra.mxu0 0.0
        %2941 = vmatprep.subr.mxu0 0.0
        %2942 = vmatpush1.msra.mxu0 0.0
        %2943 = vmatprep.subr.mxu0 0.0
        %2944 = vmatpush1.msra.mxu0 0.0
        %2945 = vmatprep.subr.mxu0 0.0
        %2946 = vmatpush1.msra.mxu0 0.0
        %2947 = vmatprep.subr.mxu0 0.0
        %2948 = vmatpush1.msra.mxu0 0.0
        %2949 = vmatprep.subr.mxu0 0.0
        %2950 = vmatpush1.msra.mxu0 0.0
        %2951 = vmatprep.subr.mxu0 0.0
        %2952 = vmatpush1.msra.mxu0 0.0
        %2953 = vmatprep.subr.mxu0 0.0
        %2954 = vmatpush1.msra.mxu0 0.0
        %2955 = vmatprep.subr.mxu0 0.0
        %2956 = vmatpush1.msra.mxu0 0.0
        %2957 = vmatprep.subr.mxu0 0.0
        %2958 = vmatpush1.msra.mxu0 0.0
        %2959 = vmatprep.mubr.f32.mxu0 0.0
        %2960 = vmatmul.mubr.f32.gmra.mrb[0].mxu0 %v839
        %v2961 = vpop.f32.mrb[0].mxu0
        %v2962 = vadd.f32 0.0, %v2961
        %v2963 = vpop.f32.mrb[0].mxu0
        %2964 = vdwg.mxu0
        %vm2965 = vcmask 23557
        %v2966 = vsel %vm2965, %v2849, -inf
        %vm2967 = vcmask 17408
        %v2968 = vsel %vm2967, %v2850, -inf
        %v2969 = vmax.f32 %v2966, %v2968
        %v2970 = vrot.slane %v2969, 4
        %v2971 = vmax.f32 %v2969, %v2970
        %v2972 = vrot.slane %v2971, 2
        %v2973 = vmax.f32 %v2971, %v2972
        %v2974 = vrot.slane %v2973, 1
        %v2975 = vmax.f32 %v2973, %v2974
        %v2976 = vsel %vm2965, %v2851, -inf
        %v2977 = vsel %vm2967, %v2852, -inf
        %v2978 = vmax.f32 %v2976, %v2977
        %v2979 = vrot.slane %v2978, 4
        %v2980 = vmax.f32 %v2978, %v2979
        %v2981 = vrot.slane %v2980, 2
        %v2982 = vmax.f32 %v2980, %v2981
        %v2983 = vrot.slane %v2982, 1
        %v2984 = vmax.f32 %v2982, %v2983
        %v2985 = vsel %vm2965, %v2853, -inf
        %v2986 = vsel %vm2967, %v2854, -inf
        %v2987 = vmax.f32 %v2985, %v2986
        %v2988 = vrot.slane %v2987, 4
        %v2989 = vmax.f32 %v2987, %v2988
        %v2990 = vrot.slane %v2989, 2
        %v2991 = vmax.f32 %v2989, %v2990
        %v2992 = vrot.slane %v2991, 1
        %v2993 = vmax.f32 %v2991, %v2992
        %v2994 = vsel %vm2965, %v2855, -inf
        %v2995 = vsel %vm2967, %v2856, -inf
        %v2996 = vmax.f32 %v2994, %v2995
        %v2997 = vrot.slane %v2996, 4
        %v2998 = vmax.f32 %v2996, %v2997
        %v2999 = vrot.slane %v2998, 2
        %v3000 = vmax.f32 %v2998, %v2999
        %v3001 = vrot.slane %v3000, 1
        %v3002 = vmax.f32 %v3000, %v3001
        %v3007 = vsel %vm832, %v2984, %v2975
        %v3008 = vsel %vm834, %v2993, %v3007
        %v3009 = vsel %vm836, %v3002, %v3008
        %v3010 = vsel %vm841, %v3009, 0
        %3012 = vmatprep.subr.mxu0 0.0
        %3013 = vmatpush1.msra.mxu0 %v3010
        %3014 = vmatprep.subr.mxu0 0.0
        %3015 = vmatpush1.msra.mxu0 0.0
        %3016 = vmatprep.subr.mxu0 0.0
        %3017 = vmatpush1.msra.mxu0 0.0
        %3018 = vmatprep.subr.mxu0 0.0
        %3019 = vmatpush1.msra.mxu0 0.0
        %3020 = vmatprep.subr.mxu0 0.0
        %3021 = vmatpush1.msra.mxu0 0.0
        %3022 = vmatprep.subr.mxu0 0.0
        %3023 = vmatpush1.msra.mxu0 0.0
        %3024 = vmatprep.subr.mxu0 0.0
        %3025 = vmatpush1.msra.mxu0 0.0
        %3026 = vmatprep.subr.mxu0 0.0
        %3027 = vmatpush1.msra.mxu0 0.0
        %3028 = vmatprep.subr.mxu0 0.0
        %3029 = vmatpush1.msra.mxu0 0.0
        %3030 = vmatprep.subr.mxu0 0.0
        %3031 = vmatpush1.msra.mxu0 0.0
        %3032 = vmatprep.subr.mxu0 0.0
        %3033 = vmatpush1.msra.mxu0 0.0
        %3034 = vmatprep.subr.mxu0 0.0
        %3035 = vmatpush1.msra.mxu0 0.0
        %3036 = vmatprep.subr.mxu0 0.0
        %3037 = vmatpush1.msra.mxu0 0.0
        %3038 = vmatprep.subr.mxu0 0.0
        %3039 = vmatpush1.msra.mxu0 0.0
        %3040 = vmatprep.subr.mxu0 0.0
        %3041 = vmatpush1.msra.mxu0 0.0
        %3042 = vmatprep.subr.mxu0 0.0
        %3043 = vmatpush1.msra.mxu0 0.0
        %3044 = vmatprep.subr.mxu0 0.0
        %3045 = vmatpush1.msra.mxu0 0.0
        %3046 = vmatprep.subr.mxu0 0.0
        %3047 = vmatpush1.msra.mxu0 0.0
        %3048 = vmatprep.subr.mxu0 0.0
        %3049 = vmatpush1.msra.mxu0 0.0
        %3050 = vmatprep.subr.mxu0 0.0
        %3051 = vmatpush1.msra.mxu0 0.0
        %3052 = vmatprep.subr.mxu0 0.0
        %3053 = vmatpush1.msra.mxu0 0.0
        %3054 = vmatprep.subr.mxu0 0.0
        %3055 = vmatpush1.msra.mxu0 0.0
        %3056 = vmatprep.subr.mxu0 0.0
        %3057 = vmatpush1.msra.mxu0 0.0
        %3058 = vmatprep.subr.mxu0 0.0
        %3059 = vmatpush1.msra.mxu0 0.0
        %3060 = vmatprep.subr.mxu0 0.0
        %3061 = vmatpush1.msra.mxu0 0.0
        %3062 = vmatprep.subr.mxu0 0.0
        %3063 = vmatpush1.msra.mxu0 0.0
        %3064 = vmatprep.subr.mxu0 0.0
        %3065 = vmatpush1.msra.mxu0 0.0
        %3066 = vmatprep.subr.mxu0 0.0
        %3067 = vmatpush1.msra.mxu0 0.0
        %3068 = vmatprep.subr.mxu0 0.0
        %3069 = vmatpush1.msra.mxu0 0.0
        %3070 = vmatprep.subr.mxu0 0.0
        %3071 = vmatpush1.msra.mxu0 0.0
        %3072 = vmatprep.subr.mxu0 0.0
        %3073 = vmatpush1.msra.mxu0 0.0
        %3074 = vmatprep.subr.mxu0 0.0
        %3075 = vmatpush1.msra.mxu0 0.0
        %3076 = vmatprep.mubr.f32.mxu0 0.0
        %3077 = vmatmul.mubr.f32.gmra.mrb[0].mxu0 %v839
        %v3078 = vpop.f32.mrb[0].mxu0
        %v3079 = vadd.f32 0.0, %v3078
        %v3080 = vpop.f32.mrb[0].mxu0
        %3081 = vdwg.mxu0
        %vm3082 = vcmask 22530
        %v3083 = vsel %vm3082, %v2850, -inf
        %v3084 = vrot.slane %v3083, 4
        %v3085 = vmax.f32 %v3083, %v3084
        %v3086 = vrot.slane %v3085, 2
        %v3087 = vmax.f32 %v3085, %v3086
        %v3088 = vrot.slane %v3087, 1
        %v3089 = vmax.f32 %v3087, %v3088
        %v3090 = vsel %vm3082, %v2852, -inf
        %v3091 = vrot.slane %v3090, 4
        %v3092 = vmax.f32 %v3090, %v3091
        %v3093 = vrot.slane %v3092, 2
        %v3094 = vmax.f32 %v3092, %v3093
        %v3095 = vrot.slane %v3094, 1
        %v3096 = vmax.f32 %v3094, %v3095
        %v3097 = vsel %vm3082, %v2854, -inf
        %v3098 = vrot.slane %v3097, 4
        %v3099 = vmax.f32 %v3097, %v3098
        %v3100 = vrot.slane %v3099, 2
        %v3101 = vmax.f32 %v3099, %v3100
        %v3102 = vrot.slane %v3101, 1
        %v3103 = vmax.f32 %v3101, %v3102
        %v3104 = vsel %vm3082, %v2856, -inf
        %v3105 = vrot.slane %v3104, 4
        %v3106 = vmax.f32 %v3104, %v3105
        %v3107 = vrot.slane %v3106, 2
        %v3108 = vmax.f32 %v3106, %v3107
        %v3109 = vrot.slane %v3108, 1
        %v3110 = vmax.f32 %v3108, %v3109
        %v3115 = vsel %vm832, %v3096, %v3089
        %v3116 = vsel %vm834, %v3103, %v3115
        %v3117 = vsel %vm836, %v3110, %v3116
        %v3118 = vsel %vm841, %v3117, 0
        %3120 = vmatprep.subr.mxu0 0.0
        %3121 = vmatpush1.msra.mxu0 %v3118
        %3122 = vmatprep.subr.mxu0 0.0
        %3123 = vmatpush1.msra.mxu0 0.0
        %3124 = vmatprep.subr.mxu0 0.0
        %3125 = vmatpush1.msra.mxu0 0.0
        %3126 = vmatprep.subr.mxu0 0.0
        %3127 = vmatpush1.msra.mxu0 0.0
        %3128 = vmatprep.subr.mxu0 0.0
        %3129 = vmatpush1.msra.mxu0 0.0
        %3130 = vmatprep.subr.mxu0 0.0
        %3131 = vmatpush1.msra.mxu0 0.0
        %3132 = vmatprep.subr.mxu0 0.0
        %3133 = vmatpush1.msra.mxu0 0.0
        %3134 = vmatprep.subr.mxu0 0.0
        %3135 = vmatpush1.msra.mxu0 0.0
        %3136 = vmatprep.subr.mxu0 0.0
        %3137 = vmatpush1.msra.mxu0 0.0
        %3138 = vmatprep.subr.mxu0 0.0
        %3139 = vmatpush1.msra.mxu0 0.0
        %3140 = vmatprep.subr.mxu0 0.0
        %3141 = vmatpush1.msra.mxu0 0.0
        %3142 = vmatprep.subr.mxu0 0.0
        %3143 = vmatpush1.msra.mxu0 0.0
        %3144 = vmatprep.subr.mxu0 0.0
        %3145 = vmatpush1.msra.mxu0 0.0
        %3146 = vmatprep.subr.mxu0 0.0
        %3147 = vmatpush1.msra.mxu0 0.0
        %3148 = vmatprep.subr.mxu0 0.0
        %3149 = vmatpush1.msra.mxu0 0.0
        %3150 = vmatprep.subr.mxu0 0.0
        %3151 = vmatpush1.msra.mxu0 0.0
        %3152 = vmatprep.subr.mxu0 0.0
        %3153 = vmatpush1.msra.mxu0 0.0
        %3154 = vmatprep.subr.mxu0 0.0
        %3155 = vmatpush1.msra.mxu0 0.0
        %3156 = vmatprep.subr.mxu0 0.0
        %3157 = vmatpush1.msra.mxu0 0.0
        %3158 = vmatprep.subr.mxu0 0.0
        %3159 = vmatpush1.msra.mxu0 0.0
        %3160 = vmatprep.subr.mxu0 0.0
        %3161 = vmatpush1.msra.mxu0 0.0
        %3162 = vmatprep.subr.mxu0 0.0
        %3163 = vmatpush1.msra.mxu0 0.0
        %3164 = vmatprep.subr.mxu0 0.0
        %3165 = vmatpush1.msra.mxu0 0.0
        %3166 = vmatprep.subr.mxu0 0.0
        %3167 = vmatpush1.msra.mxu0 0.0
        %3168 = vmatprep.subr.mxu0 0.0
        %3169 = vmatpush1.msra.mxu0 0.0
        %3170 = vmatprep.subr.mxu0 0.0
        %3171 = vmatpush1.msra.mxu0 0.0
        %3172 = vmatprep.subr.mxu0 0.0
        %3173 = vmatpush1.msra.mxu0 0.0
        %3174 = vmatprep.subr.mxu0 0.0
        %3175 = vmatpush1.msra.mxu0 0.0
        %3176 = vmatprep.subr.mxu0 0.0
        %3177 = vmatpush1.msra.mxu0 0.0
        %3178 = vmatprep.subr.mxu0 0.0
        %3179 = vmatpush1.msra.mxu0 0.0
        %3180 = vmatprep.subr.mxu0 0.0
        %3181 = vmatpush1.msra.mxu0 0.0
        %3182 = vmatprep.subr.mxu0 0.0
        %3183 = vmatpush1.msra.mxu0 0.0
        %3184 = vmatprep.mubr.f32.mxu0 0.0
        %3185 = vmatmul.mubr.f32.gmra.mrb[0].mxu0 %v839
        %v3186 = vpop.f32.mrb[0].mxu0
        %v3187 = vadd.f32 0.0, %v3186
        %v3188 = vpop.f32.mrb[0].mxu0
        %3189 = vdwg.mxu0
        %v3191 = vrot.slane %v3079, 7
        %v3194 = vrot.slane %v3187, 6
        %v3196 = vsel %vm1687, %v2962, %v3191
        %v3197 = vsel %vm1689, %v3196, %v3194
        %v3198 = vadd.f32 %v3197, %v1700
        %v3199 = vld [vmem:[#allocation14] sm:$0xff]
        %v3200 = vld [vmem:[#allocation14 + $0x8] sm:$0xff]
        %v3202 = vsel %vm754, %v3199, 0
        %v3205 = vsel %vm754, %v3200, 0
        %v3208 = vsel %vm1691, %v3198, 0
        %3210 = vmatprep.subr.mxu0 0.0
        %3211 = vmatpush1.msra.mxu0 %v3208
        %3212 = vmatprep.subr.mxu0 0.0
        %3213 = vmatpush1.msra.mxu0 0.0
        %3214 = vmatprep.subr.mxu0 0.0
        %3215 = vmatpush1.msra.mxu0 0.0
        %3216 = vmatprep.subr.mxu0 0.0
        %3217 = vmatpush1.msra.mxu0 0.0
        %3218 = vmatprep.subr.mxu0 0.0
        %3219 = vmatpush1.msra.mxu0 0.0
        %3220 = vmatprep.subr.mxu0 0.0
        %3221 = vmatpush1.msra.mxu0 0.0
        %3222 = vmatprep.subr.mxu0 0.0
        %3223 = vmatpush1.msra.mxu0 0.0
        %3224 = vmatprep.subr.mxu0 0.0
        %3225 = vmatpush1.msra.mxu0 0.0
        %3226 = vmatprep.subr.mxu0 0.0
        %3227 = vmatpush1.msra.mxu0 0.0
        %3228 = vmatprep.subr.mxu0 0.0
        %3229 = vmatpush1.msra.mxu0 0.0
        %3230 = vmatprep.subr.mxu0 0.0
        %3231 = vmatpush1.msra.mxu0 0.0
        %3232 = vmatprep.subr.mxu0 0.0
        %3233 = vmatpush1.msra.mxu0 0.0
        %3234 = vmatprep.subr.mxu0 0.0
        %3235 = vmatpush1.msra.mxu0 0.0
        %3236 = vmatprep.subr.mxu0 0.0
        %3237 = vmatpush1.msra.mxu0 0.0
        %3238 = vmatprep.subr.mxu0 0.0
        %3239 = vmatpush1.msra.mxu0 0.0
        %3240 = vmatprep.subr.mxu0 0.0
        %3241 = vmatpush1.msra.mxu0 0.0
        %3242 = vmatprep.subr.mxu0 0.0
        %3243 = vmatpush1.msra.mxu0 0.0
        %3244 = vmatprep.subr.mxu0 0.0
        %3245 = vmatpush1.msra.mxu0 0.0
        %3246 = vmatprep.subr.mxu0 0.0
        %3247 = vmatpush1.msra.mxu0 0.0
        %3248 = vmatprep.subr.mxu0 0.0
        %3249 = vmatpush1.msra.mxu0 0.0
        %3250 = vmatprep.subr.mxu0 0.0
        %3251 = vmatpush1.msra.mxu0 0.0
        %3252 = vmatprep.subr.mxu0 0.0
        %3253 = vmatpush1.msra.mxu0 0.0
        %3254 = vmatprep.subr.mxu0 0.0
        %3255 = vmatpush1.msra.mxu0 0.0
        %3256 = vmatprep.subr.mxu0 0.0
        %3257 = vmatpush1.msra.mxu0 0.0
        %3258 = vmatprep.subr.mxu0 0.0
        %3259 = vmatpush1.msra.mxu0 0.0
        %3260 = vmatprep.subr.mxu0 0.0
        %3261 = vmatpush1.msra.mxu0 0.0
        %3262 = vmatprep.subr.mxu0 0.0
        %3263 = vmatpush1.msra.mxu0 0.0
        %3264 = vmatprep.subr.mxu0 0.0
        %3265 = vmatpush1.msra.mxu0 0.0
        %3266 = vmatprep.subr.mxu0 0.0
        %3267 = vmatpush1.msra.mxu0 0.0
        %3268 = vmatprep.subr.mxu0 0.0
        %3269 = vmatpush1.msra.mxu0 0.0
        %3270 = vmatprep.subr.mxu0 0.0
        %3271 = vmatpush1.msra.mxu0 0.0
        %3272 = vmatprep.subr.mxu0 0.0
        %3273 = vmatpush1.msra.mxu0 0.0
        %3274 = vmatprep.mubr.f32.mxu0 0.0
        %3275 = vmatmul.mubr.f32.gmra.mrb[0].mxu0 %v3202
        %v3276 = vpop.f32.mrb[0].mxu0
        %v3277 = vadd.f32 0.0, %v3276
        %v3278 = vpop.f32.mrb[0].mxu0
        %3279 = vmatprep.mubr.f32.mxu0 0.0
        %3280 = vmatmul.mubr.f32.gmra.mrb[0].mxu0 %v3205
        %v3281 = vpop.f32.mrb[0].mxu0
        %v3282 = vadd.f32 0.0, %v3281
        %v3283 = vpop.f32.mrb[0].mxu0
        %3284 = vdwg.mxu0
        %v3285 = vld [vmem:[#allocation15] sm:$0x7]
        %v3287 = vsel %vm754, %v3277, 0
        %v3290 = vsel %vm754, %v3282, 0
        %v3293 = vsel %vm1691, %v3285, 0
        %3295 = vmatprep.subr.mxu0 0.0
        %3296 = vmatpush1.msra.mxu0 %v3293
        %3297 = vmatprep.subr.mxu0 0.0
        %3298 = vmatpush1.msra.mxu0 0.0
        %3299 = vmatprep.subr.mxu0 0.0
        %3300 = vmatpush1.msra.mxu0 0.0
        %3301 = vmatprep.subr.mxu0 0.0
        %3302 = vmatpush1.msra.mxu0 0.0
        %3303 = vmatprep.subr.mxu0 0.0
        %3304 = vmatpush1.msra.mxu0 0.0
        %3305 = vmatprep.subr.mxu0 0.0
        %3306 = vmatpush1.msra.mxu0 0.0
        %3307 = vmatprep.subr.mxu0 0.0
        %3308 = vmatpush1.msra.mxu0 0.0
        %3309 = vmatprep.subr.mxu0 0.0
        %3310 = vmatpush1.msra.mxu0 0.0
        %3311 = vmatprep.subr.mxu0 0.0
        %3312 = vmatpush1.msra.mxu0 0.0
        %3313 = vmatprep.subr.mxu0 0.0
        %3314 = vmatpush1.msra.mxu0 0.0
        %3315 = vmatprep.subr.mxu0 0.0
        %3316 = vmatpush1.msra.mxu0 0.0
        %3317 = vmatprep.subr.mxu0 0.0
        %3318 = vmatpush1.msra.mxu0 0.0
        %3319 = vmatprep.subr.mxu0 0.0
        %3320 = vmatpush1.msra.mxu0 0.0
        %3321 = vmatprep.subr.mxu0 0.0
        %3322 = vmatpush1.msra.mxu0 0.0
        %3323 = vmatprep.subr.mxu0 0.0
        %3324 = vmatpush1.msra.mxu0 0.0
        %3325 = vmatprep.subr.mxu0 0.0
        %3326 = vmatpush1.msra.mxu0 0.0
        %3327 = vmatprep.subr.mxu0 0.0
        %3328 = vmatpush1.msra.mxu0 0.0
        %3329 = vmatprep.subr.mxu0 0.0
        %3330 = vmatpush1.msra.mxu0 0.0
        %3331 = vmatprep.subr.mxu0 0.0
        %3332 = vmatpush1.msra.mxu0 0.0
        %3333 = vmatprep.subr.mxu0 0.0
        %3334 = vmatpush1.msra.mxu0 0.0
        %3335 = vmatprep.subr.mxu0 0.0
        %3336 = vmatpush1.msra.mxu0 0.0
        %3337 = vmatprep.subr.mxu0 0.0
        %3338 = vmatpush1.msra.mxu0 0.0
        %3339 = vmatprep.subr.mxu0 0.0
        %3340 = vmatpush1.msra.mxu0 0.0
        %3341 = vmatprep.subr.mxu0 0.0
        %3342 = vmatpush1.msra.mxu0 0.0
        %3343 = vmatprep.subr.mxu0 0.0
        %3344 = vmatpush1.msra.mxu0 0.0
        %3345 = vmatprep.subr.mxu0 0.0
        %3346 = vmatpush1.msra.mxu0 0.0
        %3347 = vmatprep.subr.mxu0 0.0
        %3348 = vmatpush1.msra.mxu0 0.0
        %3349 = vmatprep.subr.mxu0 0.0
        %3350 = vmatpush1.msra.mxu0 0.0
        %3351 = vmatprep.subr.mxu0 0.0
        %3352 = vmatpush1.msra.mxu0 0.0
        %3353 = vmatprep.subr.mxu0 0.0
        %3354 = vmatpush1.msra.mxu0 0.0
        %3355 = vmatprep.subr.mxu0 0.0
        %3356 = vmatpush1.msra.mxu0 0.0
        %3357 = vmatprep.subr.mxu0 0.0
        %3358 = vmatpush1.msra.mxu0 0.0
        %3359 = vmatprep.mubr.f32.mxu0 0.0
        %3360 = vmatmul.mubr.f32.gmra.mrb[0].mxu0 %v3287
        %v3361 = vpop.f32.mrb[0].mxu0
        %v3362 = vadd.f32 0.0, %v3361
        %v3363 = vpop.f32.mrb[0].mxu0
        %3364 = vmatprep.mubr.f32.mxu0 0.0
        %3365 = vmatmul.mubr.f32.gmra.mrb[0].mxu0 %v3290
        %v3366 = vpop.f32.mrb[0].mxu0
        %v3367 = vadd.f32 0.0, %v3366
        %v3368 = vpop.f32.mrb[0].mxu0
        %3369 = vdwg.mxu0
        %s3370 = scalar_lea.vmem %s526, 32 [#allocation20]
        %3371 = vst.msk [vmem:[%s3370] sm:$0xff] %vm1868, %v3362
        %3372 = vst.msk [vmem:[%s3370 + $0x8] sm:$0xff] %vm1868, %v3367
        %v3373 = vsel %vm781, %v527, -inf
        %3374 = vmax.xlane.f32.xlu0 %v3373
        %v3375 = vpop.xlane.xlu0 %3374
        %v3376 = vsel %vm781, %v528, -inf
        %3377 = vmax.xlane.f32.xlu0 %v3376
        %v3378 = vpop.xlane.xlu0 %3377
        %v3379 = vsel %vm781, %v529, -inf
        %3380 = vmax.xlane.f32.xlu0 %v3379
        %v3381 = vpop.xlane.xlu0 %3380
        %v3382 = vsel %vm781, %v530, -inf
        %3383 = vmax.xlane.f32.xlu0 %v3382
        %v3384 = vpop.xlane.xlu0 %3383
        %v3385 = vsel %vm781, %v531, -inf
        %3386 = vmax.xlane.f32.xlu0 %v3385
        %v3387 = vpop.xlane.xlu0 %3386
        %v3388 = vsel %vm781, %v532, -inf
        %3389 = vmax.xlane.f32.xlu0 %v3388
        %v3390 = vpop.xlane.xlu0 %3389
        %v3391 = vsel %vm781, %v533, -inf
        %3392 = vmax.xlane.f32.xlu0 %v3391
        %v3393 = vpop.xlane.xlu0 %3392
        %v3394 = vsel %vm781, %v534, -inf
        %3395 = vmax.xlane.f32.xlu0 %v3394
        %v3396 = vpop.xlane.xlu0 %3395
        %vm3397 = vcmask 97328
        %v3398 = vsel %vm3397, %v527, -inf
        %3399 = vmax.xlane.f32.xlu0 %v3398
        %v3400 = vpop.xlane.xlu0 %3399
        %v3401 = vsel %vm3397, %v528, -inf
        %3402 = vmax.xlane.f32.xlu0 %v3401
        %v3403 = vpop.xlane.xlu0 %3402
        %v3404 = vsel %vm3397, %v529, -inf
        %3405 = vmax.xlane.f32.xlu0 %v3404
        %v3406 = vpop.xlane.xlu0 %3405
        %v3407 = vsel %vm3397, %v530, -inf
        %3408 = vmax.xlane.f32.xlu0 %v3407
        %v3409 = vpop.xlane.xlu0 %3408
        %v3410 = vsel %vm3397, %v531, -inf
        %3411 = vmax.xlane.f32.xlu0 %v3410
        %v3412 = vpop.xlane.xlu0 %3411
        %v3413 = vsel %vm3397, %v532, -inf
        %3414 = vmax.xlane.f32.xlu0 %v3413
        %v3415 = vpop.xlane.xlu0 %3414
        %v3416 = vsel %vm3397, %v533, -inf
        %3417 = vmax.xlane.f32.xlu0 %v3416
        %v3418 = vpop.xlane.xlu0 %3417
        %v3419 = vsel %vm3397, %v534, -inf
        %3420 = vmax.xlane.f32.xlu0 %v3419
        %v3421 = vpop.xlane.xlu0 %3420
        %v3422 = vsel %vm737, %v3375, %v3400
        %v3423 = vsel %vm737, %v3378, %v3403
        %v3424 = vsel %vm737, %v3381, %v3406
        %v3425 = vsel %vm737, %v3384, %v3409
        %v3426 = vsel %vm737, %v3387, %v3412
        %v3427 = vsel %vm737, %v3390, %v3415
        %v3428 = vsel %vm737, %v3393, %v3418
        %v3429 = vsel %vm737, %v3396, %v3421
        %vm3430 = vcmask 13312
        %v3431 = vsel %vm3430, %v3422, -inf
        %v3432 = vrot.slane %v3431, 4
        %v3433 = vmax.f32 %v3431, %v3432
        %v3434 = vrot.slane %v3433, 2
        %v3435 = vmax.f32 %v3433, %v3434
        %v3436 = vrot.slane %v3435, 1
        %v3437 = vmax.f32 %v3435, %v3436
        %v3438 = vsel %vm3430, %v3424, -inf
        %v3439 = vrot.slane %v3438, 4
        %v3440 = vmax.f32 %v3438, %v3439
        %v3441 = vrot.slane %v3440, 2
        %v3442 = vmax.f32 %v3440, %v3441
        %v3443 = vrot.slane %v3442, 1
        %v3444 = vmax.f32 %v3442, %v3443
        %v3445 = vsel %vm3430, %v3426, -inf
        %v3446 = vrot.slane %v3445, 4
        %v3447 = vmax.f32 %v3445, %v3446
        %v3448 = vrot.slane %v3447, 2
        %v3449 = vmax.f32 %v3447, %v3448
        %v3450 = vrot.slane %v3449, 1
        %v3451 = vmax.f32 %v3449, %v3450
        %v3452 = vsel %vm3430, %v3428, -inf
        %v3453 = vrot.slane %v3452, 4
        %v3454 = vmax.f32 %v3452, %v3453
        %v3455 = vrot.slane %v3454, 2
        %v3456 = vmax.f32 %v3454, %v3455
        %v3457 = vrot.slane %v3456, 1
        %v3458 = vmax.f32 %v3456, %v3457
        %v3463 = vsel %vm832, %v3444, %v3437
        %v3464 = vsel %vm834, %v3451, %v3463
        %v3465 = vsel %vm836, %v3458, %v3464
        %v3466 = vsel %vm841, %v3465, 0
        %3468 = vmatprep.subr.mxu0 0.0
        %3469 = vmatpush1.msra.mxu0 %v3466
        %3470 = vmatprep.subr.mxu0 0.0
        %3471 = vmatpush1.msra.mxu0 0.0
        %3472 = vmatprep.subr.mxu0 0.0
        %3473 = vmatpush1.msra.mxu0 0.0
        %3474 = vmatprep.subr.mxu0 0.0
        %3475 = vmatpush1.msra.mxu0 0.0
        %3476 = vmatprep.subr.mxu0 0.0
        %3477 = vmatpush1.msra.mxu0 0.0
        %3478 = vmatprep.subr.mxu0 0.0
        %3479 = vmatpush1.msra.mxu0 0.0
        %3480 = vmatprep.subr.mxu0 0.0
        %3481 = vmatpush1.msra.mxu0 0.0
        %3482 = vmatprep.subr.mxu0 0.0
        %3483 = vmatpush1.msra.mxu0 0.0
        %3484 = vmatprep.subr.mxu0 0.0
        %3485 = vmatpush1.msra.mxu0 0.0
        %3486 = vmatprep.subr.mxu0 0.0
        %3487 = vmatpush1.msra.mxu0 0.0
        %3488 = vmatprep.subr.mxu0 0.0
        %3489 = vmatpush1.msra.mxu0 0.0
        %3490 = vmatprep.subr.mxu0 0.0
        %3491 = vmatpush1.msra.mxu0 0.0
        %3492 = vmatprep.subr.mxu0 0.0
        %3493 = vmatpush1.msra.mxu0 0.0
        %3494 = vmatprep.subr.mxu0 0.0
        %3495 = vmatpush1.msra.mxu0 0.0
        %3496 = vmatprep.subr.mxu0 0.0
        %3497 = vmatpush1.msra.mxu0 0.0
        %3498 = vmatprep.subr.mxu0 0.0
        %3499 = vmatpush1.msra.mxu0 0.0
        %3500 = vmatprep.subr.mxu0 0.0
        %3501 = vmatpush1.msra.mxu0 0.0
        %3502 = vmatprep.subr.mxu0 0.0
        %3503 = vmatpush1.msra.mxu0 0.0
        %3504 = vmatprep.subr.mxu0 0.0
        %3505 = vmatpush1.msra.mxu0 0.0
        %3506 = vmatprep.subr.mxu0 0.0
        %3507 = vmatpush1.msra.mxu0 0.0
        %3508 = vmatprep.subr.mxu0 0.0
        %3509 = vmatpush1.msra.mxu0 0.0
        %3510 = vmatprep.subr.mxu0 0.0
        %3511 = vmatpush1.msra.mxu0 0.0
        %3512 = vmatprep.subr.mxu0 0.0
        %3513 = vmatpush1.msra.mxu0 0.0
        %3514 = vmatprep.subr.mxu0 0.0
        %3515 = vmatpush1.msra.mxu0 0.0
        %3516 = vmatprep.subr.mxu0 0.0
        %3517 = vmatpush1.msra.mxu0 0.0
        %3518 = vmatprep.subr.mxu0 0.0
        %3519 = vmatpush1.msra.mxu0 0.0
        %3520 = vmatprep.subr.mxu0 0.0
        %3521 = vmatpush1.msra.mxu0 0.0
        %3522 = vmatprep.subr.mxu0 0.0
        %3523 = vmatpush1.msra.mxu0 0.0
        %3524 = vmatprep.subr.mxu0 0.0
        %3525 = vmatpush1.msra.mxu0 0.0
        %3526 = vmatprep.subr.mxu0 0.0
        %3527 = vmatpush1.msra.mxu0 0.0
        %3528 = vmatprep.subr.mxu0 0.0
        %3529 = vmatpush1.msra.mxu0 0.0
        %3530 = vmatprep.subr.mxu0 0.0
        %3531 = vmatpush1.msra.mxu0 0.0
        %3532 = vmatprep.mubr.f32.mxu0 0.0
        %3533 = vmatmul.mubr.f32.gmra.mrb[0].mxu0 %v839
        %v3534 = vpop.f32.mrb[0].mxu0
        %v3535 = vadd.f32 0.0, %v3534
        %v3536 = vpop.f32.mrb[0].mxu0
        %3537 = vdwg.mxu0
        %vm3538 = vcmask 15366
        %v3539 = vsel %vm3538, %v3422, -inf
        %vm3540 = vcmask 11264
        %v3541 = vsel %vm3540, %v3423, -inf
        %v3542 = vmax.f32 %v3539, %v3541
        %v3543 = vrot.slane %v3542, 4
        %v3544 = vmax.f32 %v3542, %v3543
        %v3545 = vrot.slane %v3544, 2
        %v3546 = vmax.f32 %v3544, %v3545
        %v3547 = vrot.slane %v3546, 1
        %v3548 = vmax.f32 %v3546, %v3547
        %v3549 = vsel %vm3538, %v3424, -inf
        %v3550 = vsel %vm3540, %v3425, -inf
        %v3551 = vmax.f32 %v3549, %v3550
        %v3552 = vrot.slane %v3551, 4
        %v3553 = vmax.f32 %v3551, %v3552
        %v3554 = vrot.slane %v3553, 2
        %v3555 = vmax.f32 %v3553, %v3554
        %v3556 = vrot.slane %v3555, 1
        %v3557 = vmax.f32 %v3555, %v3556
        %v3558 = vsel %vm3538, %v3426, -inf
        %v3559 = vsel %vm3540, %v3427, -inf
        %v3560 = vmax.f32 %v3558, %v3559
        %v3561 = vrot.slane %v3560, 4
        %v3562 = vmax.f32 %v3560, %v3561
        %v3563 = vrot.slane %v3562, 2
        %v3564 = vmax.f32 %v3562, %v3563
        %v3565 = vrot.slane %v3564, 1
        %v3566 = vmax.f32 %v3564, %v3565
        %v3567 = vsel %vm3538, %v3428, -inf
        %v3568 = vsel %vm3540, %v3429, -inf
        %v3569 = vmax.f32 %v3567, %v3568
        %v3570 = vrot.slane %v3569, 4
        %v3571 = vmax.f32 %v3569, %v3570
        %v3572 = vrot.slane %v3571, 2
        %v3573 = vmax.f32 %v3571, %v3572
        %v3574 = vrot.slane %v3573, 1
        %v3575 = vmax.f32 %v3573, %v3574
        %v3580 = vsel %vm832, %v3557, %v3548
        %v3581 = vsel %vm834, %v3566, %v3580
        %v3582 = vsel %vm836, %v3575, %v3581
        %v3583 = vsel %vm841, %v3582, 0
        %3585 = vmatprep.subr.mxu0 0.0
        %3586 = vmatpush1.msra.mxu0 %v3583
        %3587 = vmatprep.subr.mxu0 0.0
        %3588 = vmatpush1.msra.mxu0 0.0
        %3589 = vmatprep.subr.mxu0 0.0
        %3590 = vmatpush1.msra.mxu0 0.0
        %3591 = vmatprep.subr.mxu0 0.0
        %3592 = vmatpush1.msra.mxu0 0.0
        %3593 = vmatprep.subr.mxu0 0.0
        %3594 = vmatpush1.msra.mxu0 0.0
        %3595 = vmatprep.subr.mxu0 0.0
        %3596 = vmatpush1.msra.mxu0 0.0
        %3597 = vmatprep.subr.mxu0 0.0
        %3598 = vmatpush1.msra.mxu0 0.0
        %3599 = vmatprep.subr.mxu0 0.0
        %3600 = vmatpush1.msra.mxu0 0.0
        %3601 = vmatprep.subr.mxu0 0.0
        %3602 = vmatpush1.msra.mxu0 0.0
        %3603 = vmatprep.subr.mxu0 0.0
        %3604 = vmatpush1.msra.mxu0 0.0
        %3605 = vmatprep.subr.mxu0 0.0
        %3606 = vmatpush1.msra.mxu0 0.0
        %3607 = vmatprep.subr.mxu0 0.0
        %3608 = vmatpush1.msra.mxu0 0.0
        %3609 = vmatprep.subr.mxu0 0.0
        %3610 = vmatpush1.msra.mxu0 0.0
        %3611 = vmatprep.subr.mxu0 0.0
        %3612 = vmatpush1.msra.mxu0 0.0
        %3613 = vmatprep.subr.mxu0 0.0
        %3614 = vmatpush1.msra.mxu0 0.0
        %3615 = vmatprep.subr.mxu0 0.0
        %3616 = vmatpush1.msra.mxu0 0.0
        %3617 = vmatprep.subr.mxu0 0.0
        %3618 = vmatpush1.msra.mxu0 0.0
        %3619 = vmatprep.subr.mxu0 0.0
        %3620 = vmatpush1.msra.mxu0 0.0
        %3621 = vmatprep.subr.mxu0 0.0
        %3622 = vmatpush1.msra.mxu0 0.0
        %3623 = vmatprep.subr.mxu0 0.0
        %3624 = vmatpush1.msra.mxu0 0.0
        %3625 = vmatprep.subr.mxu0 0.0
        %3626 = vmatpush1.msra.mxu0 0.0
        %3627 = vmatprep.subr.mxu0 0.0
        %3628 = vmatpush1.msra.mxu0 0.0
        %3629 = vmatprep.subr.mxu0 0.0
        %3630 = vmatpush1.msra.mxu0 0.0
        %3631 = vmatprep.subr.mxu0 0.0
        %3632 = vmatpush1.msra.mxu0 0.0
        %3633 = vmatprep.subr.mxu0 0.0
        %3634 = vmatpush1.msra.mxu0 0.0
        %3635 = vmatprep.subr.mxu0 0.0
        %3636 = vmatpush1.msra.mxu0 0.0
        %3637 = vmatprep.subr.mxu0 0.0
        %3638 = vmatpush1.msra.mxu0 0.0
        %3639 = vmatprep.subr.mxu0 0.0
        %3640 = vmatpush1.msra.mxu0 0.0
        %3641 = vmatprep.subr.mxu0 0.0
        %3642 = vmatpush1.msra.mxu0 0.0
        %3643 = vmatprep.subr.mxu0 0.0
        %3644 = vmatpush1.msra.mxu0 0.0
        %3645 = vmatprep.subr.mxu0 0.0
        %3646 = vmatpush1.msra.mxu0 0.0
        %3647 = vmatprep.subr.mxu0 0.0
        %3648 = vmatpush1.msra.mxu0 0.0
        %3649 = vmatprep.mubr.f32.mxu0 0.0
        %3650 = vmatmul.mubr.f32.gmra.mrb[0].mxu0 %v839
        %v3651 = vpop.f32.mrb[0].mxu0
        %v3652 = vadd.f32 0.0, %v3651
        %v3653 = vpop.f32.mrb[0].mxu0
        %3654 = vdwg.mxu0
        %v3656 = vrot.slane %v3652, 7
        %v3658 = vsel %vm1687, %v3535, %v3656
        %v3659 = vadd.f32 %v3658, %v1700
        %v3660 = vld [vmem:[#allocation17] sm:$0xff]
        %v3661 = vld [vmem:[#allocation17 + $0x8] sm:$0xff]
        %v3663 = vsel %vm537, %v3660, 0
        %v3666 = vsel %vm537, %v3661, 0
        %v3669 = vsel %vm1689, %v3659, 0
        %3671 = vmatprep.subr.mxu0 0.0
        %3672 = vmatpush1.msra.mxu0 %v3669
        %3673 = vmatprep.subr.mxu0 0.0
        %3674 = vmatpush1.msra.mxu0 0.0
        %3675 = vmatprep.subr.mxu0 0.0
        %3676 = vmatpush1.msra.mxu0 0.0
        %3677 = vmatprep.subr.mxu0 0.0
        %3678 = vmatpush1.msra.mxu0 0.0
        %3679 = vmatprep.subr.mxu0 0.0
        %3680 = vmatpush1.msra.mxu0 0.0
        %3681 = vmatprep.subr.mxu0 0.0
        %3682 = vmatpush1.msra.mxu0 0.0
        %3683 = vmatprep.subr.mxu0 0.0
        %3684 = vmatpush1.msra.mxu0 0.0
        %3685 = vmatprep.subr.mxu0 0.0
        %3686 = vmatpush1.msra.mxu0 0.0
        %3687 = vmatprep.subr.mxu0 0.0
        %3688 = vmatpush1.msra.mxu0 0.0
        %3689 = vmatprep.subr.mxu0 0.0
        %3690 = vmatpush1.msra.mxu0 0.0
        %3691 = vmatprep.subr.mxu0 0.0
        %3692 = vmatpush1.msra.mxu0 0.0
        %3693 = vmatprep.subr.mxu0 0.0
        %3694 = vmatpush1.msra.mxu0 0.0
        %3695 = vmatprep.subr.mxu0 0.0
        %3696 = vmatpush1.msra.mxu0 0.0
        %3697 = vmatprep.subr.mxu0 0.0
        %3698 = vmatpush1.msra.mxu0 0.0
        %3699 = vmatprep.subr.mxu0 0.0
        %3700 = vmatpush1.msra.mxu0 0.0
        %3701 = vmatprep.subr.mxu0 0.0
        %3702 = vmatpush1.msra.mxu0 0.0
        %3703 = vmatprep.subr.mxu0 0.0
        %3704 = vmatpush1.msra.mxu0 0.0
        %3705 = vmatprep.subr.mxu0 0.0
        %3706 = vmatpush1.msra.mxu0 0.0
        %3707 = vmatprep.subr.mxu0 0.0
        %3708 = vmatpush1.msra.mxu0 0.0
        %3709 = vmatprep.subr.mxu0 0.0
        %3710 = vmatpush1.msra.mxu0 0.0
        %3711 = vmatprep.subr.mxu0 0.0
        %3712 = vmatpush1.msra.mxu0 0.0
        %3713 = vmatprep.subr.mxu0 0.0
        %3714 = vmatpush1.msra.mxu0 0.0
        %3715 = vmatprep.subr.mxu0 0.0
        %3716 = vmatpush1.msra.mxu0 0.0
        %3717 = vmatprep.subr.mxu0 0.0
        %3718 = vmatpush1.msra.mxu0 0.0
        %3719 = vmatprep.subr.mxu0 0.0
        %3720 = vmatpush1.msra.mxu0 0.0
        %3721 = vmatprep.subr.mxu0 0.0
        %3722 = vmatpush1.msra.mxu0 0.0
        %3723 = vmatprep.subr.mxu0 0.0
        %3724 = vmatpush1.msra.mxu0 0.0
        %3725 = vmatprep.subr.mxu0 0.0
        %3726 = vmatpush1.msra.mxu0 0.0
        %3727 = vmatprep.subr.mxu0 0.0
        %3728 = vmatpush1.msra.mxu0 0.0
        %3729 = vmatprep.subr.mxu0 0.0
        %3730 = vmatpush1.msra.mxu0 0.0
        %3731 = vmatprep.subr.mxu0 0.0
        %3732 = vmatpush1.msra.mxu0 0.0
        %3733 = vmatprep.subr.mxu0 0.0
        %3734 = vmatpush1.msra.mxu0 0.0
        %3735 = vmatprep.mubr.f32.mxu0 0.0
        %3736 = vmatmul.mubr.f32.gmra.mrb[0].mxu0 %v3663
        %v3737 = vpop.f32.mrb[0].mxu0
        %v3738 = vadd.f32 0.0, %v3737
        %v3739 = vpop.f32.mrb[0].mxu0
        %3740 = vmatprep.mubr.f32.mxu0 0.0
        %3741 = vmatmul.mubr.f32.gmra.mrb[0].mxu0 %v3666
        %v3742 = vpop.f32.mrb[0].mxu0
        %v3743 = vadd.f32 0.0, %v3742
        %v3744 = vpop.f32.mrb[0].mxu0
        %3745 = vdwg.mxu0
        %v3746 = vld [vmem:[#allocation18] sm:$0x3]
        %v3748 = vsel %vm537, %v3738, 0
        %v3751 = vsel %vm537, %v3743, 0
        %v3754 = vsel %vm1689, %v3746, 0
        %3756 = vmatprep.subr.mxu0 0.0
        %3757 = vmatpush1.msra.mxu0 %v3754
        %3758 = vmatprep.subr.mxu0 0.0
        %3759 = vmatpush1.msra.mxu0 0.0
        %3760 = vmatprep.subr.mxu0 0.0
        %3761 = vmatpush1.msra.mxu0 0.0
        %3762 = vmatprep.subr.mxu0 0.0
        %3763 = vmatpush1.msra.mxu0 0.0
        %3764 = vmatprep.subr.mxu0 0.0
        %3765 = vmatpush1.msra.mxu0 0.0
        %3766 = vmatprep.subr.mxu0 0.0
        %3767 = vmatpush1.msra.mxu0 0.0
        %3768 = vmatprep.subr.mxu0 0.0
        %3769 = vmatpush1.msra.mxu0 0.0
        %3770 = vmatprep.subr.mxu0 0.0
        %3771 = vmatpush1.msra.mxu0 0.0
        %3772 = vmatprep.subr.mxu0 0.0
        %3773 = vmatpush1.msra.mxu0 0.0
        %3774 = vmatprep.subr.mxu0 0.0
        %3775 = vmatpush1.msra.mxu0 0.0
        %3776 = vmatprep.subr.mxu0 0.0
        %3777 = vmatpush1.msra.mxu0 0.0
        %3778 = vmatprep.subr.mxu0 0.0
        %3779 = vmatpush1.msra.mxu0 0.0
        %3780 = vmatprep.subr.mxu0 0.0
        %3781 = vmatpush1.msra.mxu0 0.0
        %3782 = vmatprep.subr.mxu0 0.0
        %3783 = vmatpush1.msra.mxu0 0.0
        %3784 = vmatprep.subr.mxu0 0.0
        %3785 = vmatpush1.msra.mxu0 0.0
        %3786 = vmatprep.subr.mxu0 0.0
        %3787 = vmatpush1.msra.mxu0 0.0
        %3788 = vmatprep.subr.mxu0 0.0
        %3789 = vmatpush1.msra.mxu0 0.0
        %3790 = vmatprep.subr.mxu0 0.0
        %3791 = vmatpush1.msra.mxu0 0.0
        %3792 = vmatprep.subr.mxu0 0.0
        %3793 = vmatpush1.msra.mxu0 0.0
        %3794 = vmatprep.subr.mxu0 0.0
        %3795 = vmatpush1.msra.mxu0 0.0
        %3796 = vmatprep.subr.mxu0 0.0
        %3797 = vmatpush1.msra.mxu0 0.0
        %3798 = vmatprep.subr.mxu0 0.0
        %3799 = vmatpush1.msra.mxu0 0.0
        %3800 = vmatprep.subr.mxu0 0.0
        %3801 = vmatpush1.msra.mxu0 0.0
        %3802 = vmatprep.subr.mxu0 0.0
        %3803 = vmatpush1.msra.mxu0 0.0
        %3804 = vmatprep.subr.mxu0 0.0
        %3805 = vmatpush1.msra.mxu0 0.0
        %3806 = vmatprep.subr.mxu0 0.0
        %3807 = vmatpush1.msra.mxu0 0.0
        %3808 = vmatprep.subr.mxu0 0.0
        %3809 = vmatpush1.msra.mxu0 0.0
        %3810 = vmatprep.subr.mxu0 0.0
        %3811 = vmatpush1.msra.mxu0 0.0
        %3812 = vmatprep.subr.mxu0 0.0
        %3813 = vmatpush1.msra.mxu0 0.0
        %3814 = vmatprep.subr.mxu0 0.0
        %3815 = vmatpush1.msra.mxu0 0.0
        %3816 = vmatprep.subr.mxu0 0.0
        %3817 = vmatpush1.msra.mxu0 0.0
        %3818 = vmatprep.subr.mxu0 0.0
        %3819 = vmatpush1.msra.mxu0 0.0
        %3820 = vmatprep.mubr.f32.mxu0 0.0
        %3821 = vmatmul.mubr.f32.gmra.mrb[0].mxu0 %v3748
        %v3822 = vpop.f32.mrb[0].mxu0
        %v3823 = vadd.f32 0.0, %v3822
        %v3824 = vpop.f32.mrb[0].mxu0
        %3825 = vmatprep.mubr.f32.mxu0 0.0
        %3826 = vmatmul.mubr.f32.gmra.mrb[0].mxu0 %v3751
        %v3827 = vpop.f32.mrb[0].mxu0
        %v3828 = vadd.f32 0.0, %v3827
        %v3829 = vpop.f32.mrb[0].mxu0
        %3830 = vdwg.mxu0
        %s3831 = scalar_lea.vmem %s526, 48 [#allocation20]
        %3832 = vst.msk [vmem:[%s3831] sm:$0xff] %vm1868, %v3823
        %3833 = vst.msk [vmem:[%s3831 + $0x8] sm:$0xff] %vm1868, %v3828
        %s3834 = scalar_lea.vmem %s526, 64 [#allocation20]
        %3835 = vst.msk [vmem:[%s3834] sm:$0xff] %vm1868, %v527
        %3836 = vst.msk [vmem:[%s3834 + $0x8] sm:$0xff] %vm1868, %v528
        %3837 = vst.msk [vmem:[%s3834 + $0x10] sm:$0xff] %vm1868, %v529
        %3838 = vst.msk [vmem:[%s3834 + $0x18] sm:$0xff] %vm1868, %v530
        %3839 = vst.msk [vmem:[%s3834 + $0x20] sm:$0xff] %vm1868, %v531
        %3840 = vst.msk [vmem:[%s3834 + $0x28] sm:$0xff] %vm1868, %v532
        %3841 = vst.msk [vmem:[%s3834 + $0x30] sm:$0xff] %vm1868, %v533
        %3842 = vst.msk [vmem:[%s3834 + $0x38] sm:$0xff] %vm1868, %v534
        %s3843 = sand.u32 %s278, 1
        %s3844 = scalar_lea.sflag [#allocation5], %s3843
        %s3845 = sand.u32 %s278, 1
        %s3846 = smul.addr %s3845, 128
        %s3847 = scalar_lea.vmem [#allocation20], %s3846
        // Predicated region
        $region105: #{spp_block_forward.1} parent=63 // pred_check
          %p3848 = pneg %p288
        $region106: #{spp_block_forward.1} parent=63 // pred_check_branch
          %3850 = sbr.rel (%p3848) target = $region108
        $region107: #{spp_block_forward.1} parent=63 // pred_region
          %s3852 = ssub.s32 2048, 2048
          %3853 = vsyncadd %s3844, %s3852
          %s3854 = smul.addr %s34, 16
          %s3855 = smul.addr %s3854, 128
          %s3856 = scalar_lea.hbm %s11, %s3855
          %s3857 = sshll.u32 %s3847, 4
          %s3858 = int_to_ptr.vmem [resolvable:$true] %s3857
          %3863 = dma.vmem_to_hbm [thread:$0]  %s3858, 2048, %s3856, %s3844, 128, 128, 8
        $region108: #{spp_block_forward.1} parent=63 // pred_fallthru
          _
      $region64: #{spp_block_forward.1} parent=5 // pred_fallthru
        _
      %p3864 = scmp.le.s32.totalorder 2, %s29
      // Predicated region
      $region109: #{spp_block_forward.1} parent=5 // pred_check
        %p3865 = pneg %p3864
      $region110: #{spp_block_forward.1} parent=5 // pred_check_branch
        %3867 = sbr.rel (%p3865) target = $region112
      $region111: #{spp_block_forward.1} parent=5 // pred_region
        %s3868 = ssub.s32 %s29, 2
        // Predicated region
        $region113: #{spp_block_forward.1} parent=111 // pred_check
          %p3869 = pneg %p294
        $region114: #{spp_block_forward.1} parent=111 // pred_check_branch
          %3871 = sbr.rel (%p3869) target = $region116
        $region115: #{spp_block_forward.1} parent=111 // pred_region
          %s3872 = sand.u32 %s279, 1
          %s3873 = scalar_lea.sflag [#allocation5], %s3872
          %s3874 = sand.u32 %s279, 1
          %s3875 = smul.addr %s3874, 128
          %s3876 = scalar_lea.vmem [#allocation20], %s3875
          %3877 = dma.done %s3873, 2048
        $region116: #{spp_block_forward.1} parent=111 // pred_fallthru
          _
      $region112: #{spp_block_forward.1} parent=5 // pred_fallthru
        _
    $region6: #{spp_block_forward.1} parent=1 // loop_footer
      %s33 = sadd.s32 1, %s29
    $region7: #{spp_block_forward.1} parent=1 // loop_footer_branch
      %28 = sbr.rel target = $region3
    $region8: #{spp_block_forward.1} parent=1 // loop_exit
      _
    %3878 = vsyncpa [#allocation4], 1
    %s3879 = scalar_lea.sflag [#allocation4], 1
    %3880 = vsyncpa %s3879, 1
    %3881 = vsyncpa [#allocation7], 1
    %3882 = vsyncpa [#allocation10], 1
    %3883 = vsyncpa [#allocation13], 1
    %3884 = vsyncpa [#allocation16], 1
    %3885 = vsyncpa [#allocation19], 1
    %3886 = vsyncpa [#allocation5], 1
    %s3887 = scalar_lea.sflag [#allocation5], 1
    %3888 = vsyncpa %s3887, 1

</llo_original>
